<compile_context>
chip_gen: v7x
topology: tpu7x:2x2x1
jax: 0.10.0
libtpu: 0.0.40
codegen_flags: <defaults>
</compile_context>

<pallas_src>
import jax
import jax.numpy as jnp
from jax import lax
from jax.experimental import pallas as pl
from jax.experimental.pallas import tpu as pltpu

MAX_ITER = 30          # fixed iteration count for the solver
EPS = 1e-5             # matches the usual DEQ relative-residual epsilon
# TODO(synk): tolerance-based early exit of the solver has no clean static
#             Pallas equivalent; we run a fixed MAX_ITER instead.
# TODO(synk): the backward hook (implicit-function-theorem gradient via
#             autograd.grad + solver) only affects gradients, not the forward
#             output, and is not implemented here.


def deq_kernel(x_ref, w_ref, b_ref, z_ref, res_ref):
    """One pixel-tile of the DEQ fixed-point solve, in (C, M)-transposed layout.

    x_ref:   (C, TM) VMEM  injected input tile (channels on sublanes, pixels on lanes)
    w_ref:   (C, C)  SMEM  channel-mixing weight (1x1 conv), read as scalars
    b_ref:   (1, C)  SMEM  bias, read as scalars
    z_ref:   (C, TM) VMEM  output tile  z = f(z*, x)
    res_ref: (1, 2, 128) VMEM per-tile partial sums [sum((z_K - z_{K-1})^2), sum(z_K^2)]
    """
    C = x_ref.shape[0]

    # Hoisted loop invariants: weight/bias scalars from SMEM, and xb = x + b.
    w_sc = [[w_ref[k, c] for c in range(C)] for k in range(C)]
    b_sc = [b_ref[0, c] for c in range(C)]
    xb = [x_ref[c:c + 1, :].astype(jnp.float32) + b_sc[c] for c in range(C)]

    def f(z_rows):
        # out[c, :] = tanh(sum_k W[k, c] * z[k, :] + x[c, :] + b[c])
        out = []
        for c in range(C):
            acc = xb[c]
            for k in range(C):
                acc = acc + w_sc[k][c] * z_rows[k]
            out.append(jnp.tanh(acc))
        return out

    # First solver step done algebraically: f(0) = tanh(0 @ W + x + b) = tanh(x + b).
    z_prev = [jnp.zeros_like(r) for r in xb]
    z = [jnp.tanh(r) for r in xb]

    # Remaining MAX_ITER - 1 Picard steps, fully unrolled (tiny fixed body).
    for _ in range(MAX_ITER - 1):
        z_prev, z = z, f(z)

    # Solver diagnostic residual, computed once after the loop (last iterate only).
    diff_sq = jnp.zeros((), jnp.float32)
    norm_sq = jnp.zeros((), jnp.float32)
    for c in range(C):
        d = z[c] - z_prev[c]
        diff_sq = diff_sq + jnp.sum(d * d)
        norm_sq = norm_sq + jnp.sum(z[c] * z[c])

    # `z = self.f(z, x)` after the no-grad solver.
    z_out = f(z)
    for c in range(C):
        z_ref[c:c + 1, :] = z_out[c].astype(z_ref.dtype)

    # Stash the two partial sums (row 0 = diff_sq, row 1 = norm_sq).
    row = lax.broadcasted_iota(jnp.int32, (1, 2, 128), 1)
    res_ref[...] = jnp.where(row == 0, diff_sq, norm_sq).astype(jnp.float32)


def _default_num_tiles():
    """1 grid step on single-TensorCore chips (v5e/v6e), 2 parallel steps on v7x."""
    try:
        kind = jax.devices()[0].device_kind.lower()
    except Exception:
        return 1
    if "v7" in kind or "7x" in kind:
        return 2
    return 1


def deq_fixed_point(x_nchw, w, b, *, num_tiles=None):
    """Returns (z, forward_res) with z in NCHW, matching the PyTorch module."""
    B, C, H, Wd = x_nchw.shape
    M = B * H * Wd

    if num_tiles is None:
        num_tiles = _default_num_tiles()
    # Lane tiles must stay multiples of 128 (or full extent); fall back to 1 step.
    if num_tiles > 1 and (M % (num_tiles * 128) != 0):
        num_tiles = 1
    nt = num_tiles
    tm = M // nt

    # Lane-dense layout: channels on sublanes, pixels on lanes. NCHW gives this
    # nearly for free: (B,C,H,W) -> (C, B*H*W).
    x_flat = jnp.transpose(x_nchw, (1, 0, 2, 3)).reshape(C, M)
    w32 = w.astype(jnp.float32)
    b2 = b.reshape(1, C).astype(jnp.float32)

    z_flat, res = pl.pallas_call(
        deq_kernel,
        out_shape=(
            jax.ShapeDtypeStruct((C, M), x_flat.dtype),
            jax.ShapeDtypeStruct((nt, 2, 128), jnp.float32),
        ),
        grid=(nt,),
        in_specs=[
            pl.BlockSpec((C, tm), lambda i: (0, i)),
            pl.BlockSpec(memory_space=pltpu.MemorySpace.SMEM),
            pl.BlockSpec(memory_space=pltpu.MemorySpace.SMEM),
        ],
        out_specs=[
            pl.BlockSpec((C, tm), lambda i: (0, i)),
            pl.BlockSpec((1, 2, 128), lambda i: (i, 0, 0)),
        ],
        compiler_params=pltpu.CompilerParams(dimension_semantics=("parallel",)),
    )(x_flat, w32, b2)

    z = jnp.transpose(z_flat.reshape(C, B, H, Wd), (1, 0, 2, 3))
    diff_sq = res[:, 0, 0].sum()
    norm_sq = res[:, 1, 0].sum()
    forward_res = jnp.sqrt(diff_sq) / (EPS + jnp.sqrt(norm_sq))
    return z, forward_res


def deq_fixed_point_reference(x_nchw, w, b):
    """Pure-JAX reference with identical semantics (for correctness check)."""
    B, C, H, Wd = x_nchw.shape
    x_flat = jnp.transpose(x_nchw, (1, 0, 2, 3)).reshape(C, B * H * Wd).astype(jnp.float32)
    w32 = w.astype(jnp.float32)
    b32 = b.reshape(C, 1).astype(jnp.float32)

    def f(z):
        # (C, M) layout: out = W^T @ z + x + b  ==  (z^T @ W)^T + ...
        return jnp.tanh(w32.T @ z + x_flat + b32)

    z = jnp.zeros_like(x_flat)
    for _ in range(MAX_ITER):
        z_new = f(z)
        diff_sq = jnp.sum((z_new - z) ** 2)
        norm_sq = jnp.sum(z_new ** 2)
        z = z_new
    z = f(z)
    forward_res = jnp.sqrt(diff_sq) / (EPS + jnp.sqrt(norm_sq))
    z = jnp.transpose(z.reshape(C, B, H, Wd), (1, 0, 2, 3)).astype(x_nchw.dtype)
    return z, forward_res


if __name__ == "__main__":
    key = jax.random.PRNGKey(0)
    kx, kw, kb = jax.random.split(key, 3)

    B, C, H, W = 2, 4, 16, 16            # x: NCHW, matches PyTorch conv convention
    x = jax.random.normal(kx, (B, C, H, W), dtype=jnp.float32)
    # Contractive channel-mixing weight (spectral norm < 1) so the fixed point exists.
    w = 0.3 * jax.random.normal(kw, (C, C), dtype=jnp.float32) / jnp.sqrt(C)
    b = 0.01 * jax.random.normal(kb, (C,), dtype=jnp.float32)

    z, forward_res = deq_fixed_point(x, w, b)
    jax.block_until_ready((z, forward_res))

    z_ref, res_ref = deq_fixed_point_reference(x, w, b)
    assert z.shape == x.shape and z.dtype == x.dtype
    assert jnp.allclose(z, z_ref, atol=1e-4, rtol=1e-4)
    assert jnp.allclose(forward_res, res_ref, atol=1e-4, rtol=1e-4)

    print("KERNEL_OK")
</pallas_src>

<mosaic_0001>
module attributes {stable_mosaic.version = 11 : i64} {
  func.func @deq_kernel(%arg0: i32, %arg1: memref<4x512xf32, #tpu.memory_space<vmem>>, %arg2: memref<4x4xf32, #tpu.memory_space<smem>>, %arg3: memref<1x4xf32, #tpu.memory_space<smem>>, %arg4: memref<4x512xf32, #tpu.memory_space<vmem>>, %arg5: memref<1x2x128xf32, #tpu.memory_space<vmem>>) attributes {dimension_semantics = [#tpu.dimension_semantics<parallel>], iteration_bounds = array<i64: 1>, scalar_prefetch = 0 : i64, scratch_operands = 0 : i64, tpu.core_type = #tpu.core_type<tc>, window_params = [{transform_indices = @transform_0, window_bounds = array<i64: 4, 512>}, {transform_indices = @transform_1, window_bounds = array<i64: 4, 4>}, {transform_indices = @transform_2, window_bounds = array<i64: 1, 4>}, {transform_indices = @transform_3, window_bounds = array<i64: 4, 512>}, {transform_indices = @transform_4, window_bounds = array<i64: 1, 2, 128>}]} {
    %c0 = arith.constant 0 : index
    %c0_0 = arith.constant 0 : index
    %0 = memref.load %arg2[%c0, %c0_0] : memref<4x4xf32, #tpu.memory_space<smem>>
    %c0_1 = arith.constant 0 : index
    %c1 = arith.constant 1 : index
    %1 = memref.load %arg2[%c0_1, %c1] : memref<4x4xf32, #tpu.memory_space<smem>>
    %c0_2 = arith.constant 0 : index
    %c2 = arith.constant 2 : index
    %2 = memref.load %arg2[%c0_2, %c2] : memref<4x4xf32, #tpu.memory_space<smem>>
    %c0_3 = arith.constant 0 : index
    %c3 = arith.constant 3 : index
    %3 = memref.load %arg2[%c0_3, %c3] : memref<4x4xf32, #tpu.memory_space<smem>>
    %c1_4 = arith.constant 1 : index
    %c0_5 = arith.constant 0 : index
    %4 = memref.load %arg2[%c1_4, %c0_5] : memref<4x4xf32, #tpu.memory_space<smem>>
    %c1_6 = arith.constant 1 : index
    %c1_7 = arith.constant 1 : index
    %5 = memref.load %arg2[%c1_6, %c1_7] : memref<4x4xf32, #tpu.memory_space<smem>>
    %c1_8 = arith.constant 1 : index
    %c2_9 = arith.constant 2 : index
    %6 = memref.load %arg2[%c1_8, %c2_9] : memref<4x4xf32, #tpu.memory_space<smem>>
    %c1_10 = arith.constant 1 : index
    %c3_11 = arith.constant 3 : index
    %7 = memref.load %arg2[%c1_10, %c3_11] : memref<4x4xf32, #tpu.memory_space<smem>>
    %c2_12 = arith.constant 2 : index
    %c0_13 = arith.constant 0 : index
    %8 = memref.load %arg2[%c2_12, %c0_13] : memref<4x4xf32, #tpu.memory_space<smem>>
    %c2_14 = arith.constant 2 : index
    %c1_15 = arith.constant 1 : index
    %9 = memref.load %arg2[%c2_14, %c1_15] : memref<4x4xf32, #tpu.memory_space<smem>>
    %c2_16 = arith.constant 2 : index
    %c2_17 = arith.constant 2 : index
    %10 = memref.load %arg2[%c2_16, %c2_17] : memref<4x4xf32, #tpu.memory_space<smem>>
    %c2_18 = arith.constant 2 : index
    %c3_19 = arith.constant 3 : index
    %11 = memref.load %arg2[%c2_18, %c3_19] : memref<4x4xf32, #tpu.memory_space<smem>>
    %c3_20 = arith.constant 3 : index
    %c0_21 = arith.constant 0 : index
    %12 = memref.load %arg2[%c3_20, %c0_21] : memref<4x4xf32, #tpu.memory_space<smem>>
    %c3_22 = arith.constant 3 : index
    %c1_23 = arith.constant 1 : index
    %13 = memref.load %arg2[%c3_22, %c1_23] : memref<4x4xf32, #tpu.memory_space<smem>>
    %c3_24 = arith.constant 3 : index
    %c2_25 = arith.constant 2 : index
    %14 = memref.load %arg2[%c3_24, %c2_25] : memref<4x4xf32, #tpu.memory_space<smem>>
    %c3_26 = arith.constant 3 : index
    %c3_27 = arith.constant 3 : index
    %15 = memref.load %arg2[%c3_26, %c3_27] : memref<4x4xf32, #tpu.memory_space<smem>>
    %c0_28 = arith.constant 0 : index
    %c0_29 = arith.constant 0 : index
    %16 = memref.load %arg3[%c0_28, %c0_29] : memref<1x4xf32, #tpu.memory_space<smem>>
    %c0_30 = arith.constant 0 : index
    %c1_31 = arith.constant 1 : index
    %17 = memref.load %arg3[%c0_30, %c1_31] : memref<1x4xf32, #tpu.memory_space<smem>>
    %c0_32 = arith.constant 0 : index
    %c2_33 = arith.constant 2 : index
    %18 = memref.load %arg3[%c0_32, %c2_33] : memref<1x4xf32, #tpu.memory_space<smem>>
    %c0_34 = arith.constant 0 : index
    %c3_35 = arith.constant 3 : index
    %19 = memref.load %arg3[%c0_34, %c3_35] : memref<1x4xf32, #tpu.memory_space<smem>>
    %c0_36 = arith.constant 0 : index
    %c0_37 = arith.constant 0 : index
    %20 = vector.load %arg1[%c0_36, %c0_37] : memref<4x512xf32, #tpu.memory_space<vmem>>, vector<1x512xf32>
    %21 = vector.broadcast %16 : f32 to vector<1x512xf32>
    %22 = arith.addf %20, %21 : vector<1x512xf32>
    %c1_38 = arith.constant 1 : index
    %c0_39 = arith.constant 0 : index
    %23 = vector.load %arg1[%c1_38, %c0_39] : memref<4x512xf32, #tpu.memory_space<vmem>>, vector<1x512xf32>
    %24 = vector.broadcast %17 : f32 to vector<1x512xf32>
    %25 = arith.addf %23, %24 : vector<1x512xf32>
    %c2_40 = arith.constant 2 : index
    %c0_41 = arith.constant 0 : index
    %26 = vector.load %arg1[%c2_40, %c0_41] : memref<4x512xf32, #tpu.memory_space<vmem>>, vector<1x512xf32>
    %27 = vector.broadcast %18 : f32 to vector<1x512xf32>
    %28 = arith.addf %26, %27 : vector<1x512xf32>
    %c3_42 = arith.constant 3 : index
    %c0_43 = arith.constant 0 : index
    %29 = vector.load %arg1[%c3_42, %c0_43] : memref<4x512xf32, #tpu.memory_space<vmem>>, vector<1x512xf32>
    %30 = vector.broadcast %19 : f32 to vector<1x512xf32>
    %31 = arith.addf %29, %30 : vector<1x512xf32>
    %32 = math.tanh %22 : vector<1x512xf32>
    %33 = math.tanh %25 : vector<1x512xf32>
    %34 = math.tanh %28 : vector<1x512xf32>
    %35 = math.tanh %31 : vector<1x512xf32>
    %36 = vector.broadcast %0 : f32 to vector<1x512xf32>
    %37 = arith.mulf %36, %32 : vector<1x512xf32>
    %38 = arith.addf %22, %37 : vector<1x512xf32>
    %39 = vector.broadcast %4 : f32 to vector<1x512xf32>
    %40 = arith.mulf %39, %33 : vector<1x512xf32>
    %41 = arith.addf %38, %40 : vector<1x512xf32>
    %42 = vector.broadcast %8 : f32 to vector<1x512xf32>
    %43 = arith.mulf %42, %34 : vector<1x512xf32>
    %44 = arith.addf %41, %43 : vector<1x512xf32>
    %45 = vector.broadcast %12 : f32 to vector<1x512xf32>
    %46 = arith.mulf %45, %35 : vector<1x512xf32>
    %47 = arith.addf %44, %46 : vector<1x512xf32>
    %48 = math.tanh %47 : vector<1x512xf32>
    %49 = vector.broadcast %1 : f32 to vector<1x512xf32>
    %50 = arith.mulf %49, %32 : vector<1x512xf32>
    %51 = arith.addf %25, %50 : vector<1x512xf32>
    %52 = vector.broadcast %5 : f32 to vector<1x512xf32>
    %53 = arith.mulf %52, %33 : vector<1x512xf32>
    %54 = arith.addf %51, %53 : vector<1x512xf32>
    %55 = vector.broadcast %9 : f32 to vector<1x512xf32>
    %56 = arith.mulf %55, %34 : vector<1x512xf32>
    %57 = arith.addf %54, %56 : vector<1x512xf32>
    %58 = vector.broadcast %13 : f32 to vector<1x512xf32>
    %59 = arith.mulf %58, %35 : vector<1x512xf32>
    %60 = arith.addf %57, %59 : vector<1x512xf32>
    %61 = math.tanh %60 : vector<1x512xf32>
    %62 = vector.broadcast %2 : f32 to vector<1x512xf32>
    %63 = arith.mulf %62, %32 : vector<1x512xf32>
    %64 = arith.addf %28, %63 : vector<1x512xf32>
    %65 = vector.broadcast %6 : f32 to vector<1x512xf32>
    %66 = arith.mulf %65, %33 : vector<1x512xf32>
    %67 = arith.addf %64, %66 : vector<1x512xf32>
    %68 = vector.broadcast %10 : f32 to vector<1x512xf32>
    %69 = arith.mulf %68, %34 : vector<1x512xf32>
    %70 = arith.addf %67, %69 : vector<1x512xf32>
    %71 = vector.broadcast %14 : f32 to vector<1x512xf32>
    %72 = arith.mulf %71, %35 : vector<1x512xf32>
    %73 = arith.addf %70, %72 : vector<1x512xf32>
    %74 = math.tanh %73 : vector<1x512xf32>
    %75 = vector.broadcast %3 : f32 to vector<1x512xf32>
    %76 = arith.mulf %75, %32 : vector<1x512xf32>
    %77 = arith.addf %31, %76 : vector<1x512xf32>
    %78 = vector.broadcast %7 : f32 to vector<1x512xf32>
    %79 = arith.mulf %78, %33 : vector<1x512xf32>
    %80 = arith.addf %77, %79 : vector<1x512xf32>
    %81 = vector.broadcast %11 : f32 to vector<1x512xf32>
    %82 = arith.mulf %81, %34 : vector<1x512xf32>
    %83 = arith.addf %80, %82 : vector<1x512xf32>
    %84 = vector.broadcast %15 : f32 to vector<1x512xf32>
    %85 = arith.mulf %84, %35 : vector<1x512xf32>
    %86 = arith.addf %83, %85 : vector<1x512xf32>
    %87 = math.tanh %86 : vector<1x512xf32>
    %88 = vector.broadcast %0 : f32 to vector<1x512xf32>
    %89 = arith.mulf %88, %48 : vector<1x512xf32>
    %90 = arith.addf %22, %89 : vector<1x512xf32>
    %91 = vector.broadcast %4 : f32 to vector<1x512xf32>
    %92 = arith.mulf %91, %61 : vector<1x512xf32>
    %93 = arith.addf %90, %92 : vector<1x512xf32>
    %94 = vector.broadcast %8 : f32 to vector<1x512xf32>
    %95 = arith.mulf %94, %74 : vector<1x512xf32>
    %96 = arith.addf %93, %95 : vector<1x512xf32>
    %97 = vector.broadcast %12 : f32 to vector<1x512xf32>
    %98 = arith.mulf %97, %87 : vector<1x512xf32>
    %99 = arith.addf %96, %98 : vector<1x512xf32>
    %100 = math.tanh %99 : vector<1x512xf32>
    %101 = vector.broadcast %1 : f32 to vector<1x512xf32>
    %102 = arith.mulf %101, %48 : vector<1x512xf32>
    %103 = arith.addf %25, %102 : vector<1x512xf32>
    %104 = vector.broadcast %5 : f32 to vector<1x512xf32>
    %105 = arith.mulf %104, %61 : vector<1x512xf32>
    %106 = arith.addf %103, %105 : vector<1x512xf32>
    %107 = vector.broadcast %9 : f32 to vector<1x512xf32>
    %108 = arith.mulf %107, %74 : vector<1x512xf32>
    %109 = arith.addf %106, %108 : vector<1x512xf32>
    %110 = vector.broadcast %13 : f32 to vector<1x512xf32>
    %111 = arith.mulf %110, %87 : vector<1x512xf32>
    %112 = arith.addf %109, %111 : vector<1x512xf32>
    %113 = math.tanh %112 : vector<1x512xf32>
    %114 = vector.broadcast %2 : f32 to vector<1x512xf32>
    %115 = arith.mulf %114, %48 : vector<1x512xf32>
    %116 = arith.addf %28, %115 : vector<1x512xf32>
    %117 = vector.broadcast %6 : f32 to vector<1x512xf32>
    %118 = arith.mulf %117, %61 : vector<1x512xf32>
    %119 = arith.addf %116, %118 : vector<1x512xf32>
    %120 = vector.broadcast %10 : f32 to vector<1x512xf32>
    %121 = arith.mulf %120, %74 : vector<1x512xf32>
    %122 = arith.addf %119, %121 : vector<1x512xf32>
    %123 = vector.broadcast %14 : f32 to vector<1x512xf32>
    %124 = arith.mulf %123, %87 : vector<1x512xf32>
    %125 = arith.addf %122, %124 : vector<1x512xf32>
    %126 = math.tanh %125 : vector<1x512xf32>
    %127 = vector.broadcast %3 : f32 to vector<1x512xf32>
    %128 = arith.mulf %127, %48 : vector<1x512xf32>
    %129 = arith.addf %31, %128 : vector<1x512xf32>
    %130 = vector.broadcast %7 : f32 to vector<1x512xf32>
    %131 = arith.mulf %130, %61 : vector<1x512xf32>
    %132 = arith.addf %129, %131 : vector<1x512xf32>
    %133 = vector.broadcast %11 : f32 to vector<1x512xf32>
    %134 = arith.mulf %133, %74 : vector<1x512xf32>
    %135 = arith.addf %132, %134 : vector<1x512xf32>
    %136 = vector.broadcast %15 : f32 to vector<1x512xf32>
    %137 = arith.mulf %136, %87 : vector<1x512xf32>
    %138 = arith.addf %135, %137 : vector<1x512xf32>
    %139 = math.tanh %138 : vector<1x512xf32>
    %140 = vector.broadcast %0 : f32 to vector<1x512xf32>
    %141 = arith.mulf %140, %100 : vector<1x512xf32>
    %142 = arith.addf %22, %141 : vector<1x512xf32>
    %143 = vector.broadcast %4 : f32 to vector<1x512xf32>
    %144 = arith.mulf %143, %113 : vector<1x512xf32>
    %145 = arith.addf %142, %144 : vector<1x512xf32>
    %146 = vector.broadcast %8 : f32 to vector<1x512xf32>
    %147 = arith.mulf %146, %126 : vector<1x512xf32>
    %148 = arith.addf %145, %147 : vector<1x512xf32>
    %149 = vector.broadcast %12 : f32 to vector<1x512xf32>
    %150 = arith.mulf %149, %139 : vector<1x512xf32>
    %151 = arith.addf %148, %150 : vector<1x512xf32>
    %152 = math.tanh %151 : vector<1x512xf32>
    %153 = vector.broadcast %1 : f32 to vector<1x512xf32>
    %154 = arith.mulf %153, %100 : vector<1x512xf32>
    %155 = arith.addf %25, %154 : vector<1x512xf32>
    %156 = vector.broadcast %5 : f32 to vector<1x512xf32>
    %157 = arith.mulf %156, %113 : vector<1x512xf32>
    %158 = arith.addf %155, %157 : vector<1x512xf32>
    %159 = vector.broadcast %9 : f32 to vector<1x512xf32>
    %160 = arith.mulf %159, %126 : vector<1x512xf32>
    %161 = arith.addf %158, %160 : vector<1x512xf32>
    %162 = vector.broadcast %13 : f32 to vector<1x512xf32>
    %163 = arith.mulf %162, %139 : vector<1x512xf32>
    %164 = arith.addf %161, %163 : vector<1x512xf32>
    %165 = math.tanh %164 : vector<1x512xf32>
    %166 = vector.broadcast %2 : f32 to vector<1x512xf32>
    %167 = arith.mulf %166, %100 : vector<1x512xf32>
    %168 = arith.addf %28, %167 : vector<1x512xf32>
    %169 = vector.broadcast %6 : f32 to vector<1x512xf32>
    %170 = arith.mulf %169, %113 : vector<1x512xf32>
    %171 = arith.addf %168, %170 : vector<1x512xf32>
    %172 = vector.broadcast %10 : f32 to vector<1x512xf32>
    %173 = arith.mulf %172, %126 : vector<1x512xf32>
    %174 = arith.addf %171, %173 : vector<1x512xf32>
    %175 = vector.broadcast %14 : f32 to vector<1x512xf32>
    %176 = arith.mulf %175, %139 : vector<1x512xf32>
    %177 = arith.addf %174, %176 : vector<1x512xf32>
    %178 = math.tanh %177 : vector<1x512xf32>
    %179 = vector.broadcast %3 : f32 to vector<1x512xf32>
    %180 = arith.mulf %179, %100 : vector<1x512xf32>
    %181 = arith.addf %31, %180 : vector<1x512xf32>
    %182 = vector.broadcast %7 : f32 to vector<1x512xf32>
    %183 = arith.mulf %182, %113 : vector<1x512xf32>
    %184 = arith.addf %181, %183 : vector<1x512xf32>
    %185 = vector.broadcast %11 : f32 to vector<1x512xf32>
    %186 = arith.mulf %185, %126 : vector<1x512xf32>
    %187 = arith.addf %184, %186 : vector<1x512xf32>
    %188 = vector.broadcast %15 : f32 to vector<1x512xf32>
    %189 = arith.mulf %188, %139 : vector<1x512xf32>
    %190 = arith.addf %187, %189 : vector<1x512xf32>
    %191 = math.tanh %190 : vector<1x512xf32>
    %192 = vector.broadcast %0 : f32 to vector<1x512xf32>
    %193 = arith.mulf %192, %152 : vector<1x512xf32>
    %194 = arith.addf %22, %193 : vector<1x512xf32>
    %195 = vector.broadcast %4 : f32 to vector<1x512xf32>
    %196 = arith.mulf %195, %165 : vector<1x512xf32>
    %197 = arith.addf %194, %196 : vector<1x512xf32>
    %198 = vector.broadcast %8 : f32 to vector<1x512xf32>
    %199 = arith.mulf %198, %178 : vector<1x512xf32>
    %200 = arith.addf %197, %199 : vector<1x512xf32>
    %201 = vector.broadcast %12 : f32 to vector<1x512xf32>
    %202 = arith.mulf %201, %191 : vector<1x512xf32>
    %203 = arith.addf %200, %202 : vector<1x512xf32>
    %204 = math.tanh %203 : vector<1x512xf32>
    %205 = vector.broadcast %1 : f32 to vector<1x512xf32>
    %206 = arith.mulf %205, %152 : vector<1x512xf32>
    %207 = arith.addf %25, %206 : vector<1x512xf32>
    %208 = vector.broadcast %5 : f32 to vector<1x512xf32>
    %209 = arith.mulf %208, %165 : vector<1x512xf32>
    %210 = arith.addf %207, %209 : vector<1x512xf32>
    %211 = vector.broadcast %9 : f32 to vector<1x512xf32>
    %212 = arith.mulf %211, %178 : vector<1x512xf32>
    %213 = arith.addf %210, %212 : vector<1x512xf32>
    %214 = vector.broadcast %13 : f32 to vector<1x512xf32>
    %215 = arith.mulf %214, %191 : vector<1x512xf32>
    %216 = arith.addf %213, %215 : vector<1x512xf32>
    %217 = math.tanh %216 : vector<1x512xf32>
    %218 = vector.broadcast %2 : f32 to vector<1x512xf32>
    %219 = arith.mulf %218, %152 : vector<1x512xf32>
    %220 = arith.addf %28, %219 : vector<1x512xf32>
    %221 = vector.broadcast %6 : f32 to vector<1x512xf32>
    %222 = arith.mulf %221, %165 : vector<1x512xf32>
    %223 = arith.addf %220, %222 : vector<1x512xf32>
    %224 = vector.broadcast %10 : f32 to vector<1x512xf32>
    %225 = arith.mulf %224, %178 : vector<1x512xf32>
    %226 = arith.addf %223, %225 : vector<1x512xf32>
    %227 = vector.broadcast %14 : f32 to vector<1x512xf32>
    %228 = arith.mulf %227, %191 : vector<1x512xf32>
    %229 = arith.addf %226, %228 : vector<1x512xf32>
    %230 = math.tanh %229 : vector<1x512xf32>
    %231 = vector.broadcast %3 : f32 to vector<1x512xf32>
    %232 = arith.mulf %231, %152 : vector<1x512xf32>
    %233 = arith.addf %31, %232 : vector<1x512xf32>
    %234 = vector.broadcast %7 : f32 to vector<1x512xf32>
    %235 = arith.mulf %234, %165 : vector<1x512xf32>
    %236 = arith.addf %233, %235 : vector<1x512xf32>
    %237 = vector.broadcast %11 : f32 to vector<1x512xf32>
    %238 = arith.mulf %237, %178 : vector<1x512xf32>
    %239 = arith.addf %236, %238 : vector<1x512xf32>
    %240 = vector.broadcast %15 : f32 to vector<1x512xf32>
    %241 = arith.mulf %240, %191 : vector<1x512xf32>
    %242 = arith.addf %239, %241 : vector<1x512xf32>
    %243 = math.tanh %242 : vector<1x512xf32>
    %244 = vector.broadcast %0 : f32 to vector<1x512xf32>
    %245 = arith.mulf %244, %204 : vector<1x512xf32>
    %246 = arith.addf %22, %245 : vector<1x512xf32>
    %247 = vector.broadcast %4 : f32 to vector<1x512xf32>
    %248 = arith.mulf %247, %217 : vector<1x512xf32>
    %249 = arith.addf %246, %248 : vector<1x512xf32>
    %250 = vector.broadcast %8 : f32 to vector<1x512xf32>
    %251 = arith.mulf %250, %230 : vector<1x512xf32>
    %252 = arith.addf %249, %251 : vector<1x512xf32>
    %253 = vector.broadcast %12 : f32 to vector<1x512xf32>
    %254 = arith.mulf %253, %243 : vector<1x512xf32>
    %255 = arith.addf %252, %254 : vector<1x512xf32>
    %256 = math.tanh %255 : vector<1x512xf32>
    %257 = vector.broadcast %1 : f32 to vector<1x512xf32>
    %258 = arith.mulf %257, %204 : vector<1x512xf32>
    %259 = arith.addf %25, %258 : vector<1x512xf32>
    %260 = vector.broadcast %5 : f32 to vector<1x512xf32>
    %261 = arith.mulf %260, %217 : vector<1x512xf32>
    %262 = arith.addf %259, %261 : vector<1x512xf32>
    %263 = vector.broadcast %9 : f32 to vector<1x512xf32>
    %264 = arith.mulf %263, %230 : vector<1x512xf32>
    %265 = arith.addf %262, %264 : vector<1x512xf32>
    %266 = vector.broadcast %13 : f32 to vector<1x512xf32>
    %267 = arith.mulf %266, %243 : vector<1x512xf32>
    %268 = arith.addf %265, %267 : vector<1x512xf32>
    %269 = math.tanh %268 : vector<1x512xf32>
    %270 = vector.broadcast %2 : f32 to vector<1x512xf32>
    %271 = arith.mulf %270, %204 : vector<1x512xf32>
    %272 = arith.addf %28, %271 : vector<1x512xf32>
    %273 = vector.broadcast %6 : f32 to vector<1x512xf32>
    %274 = arith.mulf %273, %217 : vector<1x512xf32>
    %275 = arith.addf %272, %274 : vector<1x512xf32>
    %276 = vector.broadcast %10 : f32 to vector<1x512xf32>
    %277 = arith.mulf %276, %230 : vector<1x512xf32>
    %278 = arith.addf %275, %277 : vector<1x512xf32>
    %279 = vector.broadcast %14 : f32 to vector<1x512xf32>
    %280 = arith.mulf %279, %243 : vector<1x512xf32>
    %281 = arith.addf %278, %280 : vector<1x512xf32>
    %282 = math.tanh %281 : vector<1x512xf32>
    %283 = vector.broadcast %3 : f32 to vector<1x512xf32>
    %284 = arith.mulf %283, %204 : vector<1x512xf32>
    %285 = arith.addf %31, %284 : vector<1x512xf32>
    %286 = vector.broadcast %7 : f32 to vector<1x512xf32>
    %287 = arith.mulf %286, %217 : vector<1x512xf32>
    %288 = arith.addf %285, %287 : vector<1x512xf32>
    %289 = vector.broadcast %11 : f32 to vector<1x512xf32>
    %290 = arith.mulf %289, %230 : vector<1x512xf32>
    %291 = arith.addf %288, %290 : vector<1x512xf32>
    %292 = vector.broadcast %15 : f32 to vector<1x512xf32>
    %293 = arith.mulf %292, %243 : vector<1x512xf32>
    %294 = arith.addf %291, %293 : vector<1x512xf32>
    %295 = math.tanh %294 : vector<1x512xf32>
    %296 = vector.broadcast %0 : f32 to vector<1x512xf32>
    %297 = arith.mulf %296, %256 : vector<1x512xf32>
    %298 = arith.addf %22, %297 : vector<1x512xf32>
    %299 = vector.broadcast %4 : f32 to vector<1x512xf32>
    %300 = arith.mulf %299, %269 : vector<1x512xf32>
    %301 = arith.addf %298, %300 : vector<1x512xf32>
    %302 = vector.broadcast %8 : f32 to vector<1x512xf32>
    %303 = arith.mulf %302, %282 : vector<1x512xf32>
    %304 = arith.addf %301, %303 : vector<1x512xf32>
    %305 = vector.broadcast %12 : f32 to vector<1x512xf32>
    %306 = arith.mulf %305, %295 : vector<1x512xf32>
    %307 = arith.addf %304, %306 : vector<1x512xf32>
    %308 = math.tanh %307 : vector<1x512xf32>
    %309 = vector.broadcast %1 : f32 to vector<1x512xf32>
    %310 = arith.mulf %309, %256 : vector<1x512xf32>
    %311 = arith.addf %25, %310 : vector<1x512xf32>
    %312 = vector.broadcast %5 : f32 to vector<1x512xf32>
    %313 = arith.mulf %312, %269 : vector<1x512xf32>
    %314 = arith.addf %311, %313 : vector<1x512xf32>
    %315 = vector.broadcast %9 : f32 to vector<1x512xf32>
    %316 = arith.mulf %315, %282 : vector<1x512xf32>
    %317 = arith.addf %314, %316 : vector<1x512xf32>
    %318 = vector.broadcast %13 : f32 to vector<1x512xf32>
    %319 = arith.mulf %318, %295 : vector<1x512xf32>
    %320 = arith.addf %317, %319 : vector<1x512xf32>
    %321 = math.tanh %320 : vector<1x512xf32>
    %322 = vector.broadcast %2 : f32 to vector<1x512xf32>
    %323 = arith.mulf %322, %256 : vector<1x512xf32>
    %324 = arith.addf %28, %323 : vector<1x512xf32>
    %325 = vector.broadcast %6 : f32 to vector<1x512xf32>
    %326 = arith.mulf %325, %269 : vector<1x512xf32>
    %327 = arith.addf %324, %326 : vector<1x512xf32>
    %328 = vector.broadcast %10 : f32 to vector<1x512xf32>
    %329 = arith.mulf %328, %282 : vector<1x512xf32>
    %330 = arith.addf %327, %329 : vector<1x512xf32>
    %331 = vector.broadcast %14 : f32 to vector<1x512xf32>
    %332 = arith.mulf %331, %295 : vector<1x512xf32>
    %333 = arith.addf %330, %332 : vector<1x512xf32>
    %334 = math.tanh %333 : vector<1x512xf32>
    %335 = vector.broadcast %3 : f32 to vector<1x512xf32>
    %336 = arith.mulf %335, %256 : vector<1x512xf32>
    %337 = arith.addf %31, %336 : vector<1x512xf32>
    %338 = vector.broadcast %7 : f32 to vector<1x512xf32>
    %339 = arith.mulf %338, %269 : vector<1x512xf32>
    %340 = arith.addf %337, %339 : vector<1x512xf32>
    %341 = vector.broadcast %11 : f32 to vector<1x512xf32>
    %342 = arith.mulf %341, %282 : vector<1x512xf32>
    %343 = arith.addf %340, %342 : vector<1x512xf32>
    %344 = vector.broadcast %15 : f32 to vector<1x512xf32>
    %345 = arith.mulf %344, %295 : vector<1x512xf32>
    %346 = arith.addf %343, %345 : vector<1x512xf32>
    %347 = math.tanh %346 : vector<1x512xf32>
    %348 = vector.broadcast %0 : f32 to vector<1x512xf32>
    %349 = arith.mulf %348, %308 : vector<1x512xf32>
    %350 = arith.addf %22, %349 : vector<1x512xf32>
    %351 = vector.broadcast %4 : f32 to vector<1x512xf32>
    %352 = arith.mulf %351, %321 : vector<1x512xf32>
    %353 = arith.addf %350, %352 : vector<1x512xf32>
    %354 = vector.broadcast %8 : f32 to vector<1x512xf32>
    %355 = arith.mulf %354, %334 : vector<1x512xf32>
    %356 = arith.addf %353, %355 : vector<1x512xf32>
    %357 = vector.broadcast %12 : f32 to vector<1x512xf32>
    %358 = arith.mulf %357, %347 : vector<1x512xf32>
    %359 = arith.addf %356, %358 : vector<1x512xf32>
    %360 = math.tanh %359 : vector<1x512xf32>
    %361 = vector.broadcast %1 : f32 to vector<1x512xf32>
    %362 = arith.mulf %361, %308 : vector<1x512xf32>
    %363 = arith.addf %25, %362 : vector<1x512xf32>
    %364 = vector.broadcast %5 : f32 to vector<1x512xf32>
    %365 = arith.mulf %364, %321 : vector<1x512xf32>
    %366 = arith.addf %363, %365 : vector<1x512xf32>
    %367 = vector.broadcast %9 : f32 to vector<1x512xf32>
    %368 = arith.mulf %367, %334 : vector<1x512xf32>
    %369 = arith.addf %366, %368 : vector<1x512xf32>
    %370 = vector.broadcast %13 : f32 to vector<1x512xf32>
    %371 = arith.mulf %370, %347 : vector<1x512xf32>
    %372 = arith.addf %369, %371 : vector<1x512xf32>
    %373 = math.tanh %372 : vector<1x512xf32>
    %374 = vector.broadcast %2 : f32 to vector<1x512xf32>
    %375 = arith.mulf %374, %308 : vector<1x512xf32>
    %376 = arith.addf %28, %375 : vector<1x512xf32>
    %377 = vector.broadcast %6 : f32 to vector<1x512xf32>
    %378 = arith.mulf %377, %321 : vector<1x512xf32>
    %379 = arith.addf %376, %378 : vector<1x512xf32>
    %380 = vector.broadcast %10 : f32 to vector<1x512xf32>
    %381 = arith.mulf %380, %334 : vector<1x512xf32>
    %382 = arith.addf %379, %381 : vector<1x512xf32>
    %383 = vector.broadcast %14 : f32 to vector<1x512xf32>
    %384 = arith.mulf %383, %347 : vector<1x512xf32>
    %385 = arith.addf %382, %384 : vector<1x512xf32>
    %386 = math.tanh %385 : vector<1x512xf32>
    %387 = vector.broadcast %3 : f32 to vector<1x512xf32>
    %388 = arith.mulf %387, %308 : vector<1x512xf32>
    %389 = arith.addf %31, %388 : vector<1x512xf32>
    %390 = vector.broadcast %7 : f32 to vector<1x512xf32>
    %391 = arith.mulf %390, %321 : vector<1x512xf32>
    %392 = arith.addf %389, %391 : vector<1x512xf32>
    %393 = vector.broadcast %11 : f32 to vector<1x512xf32>
    %394 = arith.mulf %393, %334 : vector<1x512xf32>
    %395 = arith.addf %392, %394 : vector<1x512xf32>
    %396 = vector.broadcast %15 : f32 to vector<1x512xf32>
    %397 = arith.mulf %396, %347 : vector<1x512xf32>
    %398 = arith.addf %395, %397 : vector<1x512xf32>
    %399 = math.tanh %398 : vector<1x512xf32>
    %400 = vector.broadcast %0 : f32 to vector<1x512xf32>
    %401 = arith.mulf %400, %360 : vector<1x512xf32>
    %402 = arith.addf %22, %401 : vector<1x512xf32>
    %403 = vector.broadcast %4 : f32 to vector<1x512xf32>
    %404 = arith.mulf %403, %373 : vector<1x512xf32>
    %405 = arith.addf %402, %404 : vector<1x512xf32>
    %406 = vector.broadcast %8 : f32 to vector<1x512xf32>
    %407 = arith.mulf %406, %386 : vector<1x512xf32>
    %408 = arith.addf %405, %407 : vector<1x512xf32>
    %409 = vector.broadcast %12 : f32 to vector<1x512xf32>
    %410 = arith.mulf %409, %399 : vector<1x512xf32>
    %411 = arith.addf %408, %410 : vector<1x512xf32>
    %412 = math.tanh %411 : vector<1x512xf32>
    %413 = vector.broadcast %1 : f32 to vector<1x512xf32>
    %414 = arith.mulf %413, %360 : vector<1x512xf32>
    %415 = arith.addf %25, %414 : vector<1x512xf32>
    %416 = vector.broadcast %5 : f32 to vector<1x512xf32>
    %417 = arith.mulf %416, %373 : vector<1x512xf32>
    %418 = arith.addf %415, %417 : vector<1x512xf32>
    %419 = vector.broadcast %9 : f32 to vector<1x512xf32>
    %420 = arith.mulf %419, %386 : vector<1x512xf32>
    %421 = arith.addf %418, %420 : vector<1x512xf32>
    %422 = vector.broadcast %13 : f32 to vector<1x512xf32>
    %423 = arith.mulf %422, %399 : vector<1x512xf32>
    %424 = arith.addf %421, %423 : vector<1x512xf32>
    %425 = math.tanh %424 : vector<1x512xf32>
    %426 = vector.broadcast %2 : f32 to vector<1x512xf32>
    %427 = arith.mulf %426, %360 : vector<1x512xf32>
    %428 = arith.addf %28, %427 : vector<1x512xf32>
    %429 = vector.broadcast %6 : f32 to vector<1x512xf32>
    %430 = arith.mulf %429, %373 : vector<1x512xf32>
    %431 = arith.addf %428, %430 : vector<1x512xf32>
    %432 = vector.broadcast %10 : f32 to vector<1x512xf32>
    %433 = arith.mulf %432, %386 : vector<1x512xf32>
    %434 = arith.addf %431, %433 : vector<1x512xf32>
    %435 = vector.broadcast %14 : f32 to vector<1x512xf32>
    %436 = arith.mulf %435, %399 : vector<1x512xf32>
    %437 = arith.addf %434, %436 : vector<1x512xf32>
    %438 = math.tanh %437 : vector<1x512xf32>
    %439 = vector.broadcast %3 : f32 to vector<1x512xf32>
    %440 = arith.mulf %439, %360 : vector<1x512xf32>
    %441 = arith.addf %31, %440 : vector<1x512xf32>
    %442 = vector.broadcast %7 : f32 to vector<1x512xf32>
    %443 = arith.mulf %442, %373 : vector<1x512xf32>
    %444 = arith.addf %441, %443 : vector<1x512xf32>
    %445 = vector.broadcast %11 : f32 to vector<1x512xf32>
    %446 = arith.mulf %445, %386 : vector<1x512xf32>
    %447 = arith.addf %444, %446 : vector<1x512xf32>
    %448 = vector.broadcast %15 : f32 to vector<1x512xf32>
    %449 = arith.mulf %448, %399 : vector<1x512xf32>
    %450 = arith.addf %447, %449 : vector<1x512xf32>
    %451 = math.tanh %450 : vector<1x512xf32>
    %452 = vector.broadcast %0 : f32 to vector<1x512xf32>
    %453 = arith.mulf %452, %412 : vector<1x512xf32>
    %454 = arith.addf %22, %453 : vector<1x512xf32>
    %455 = vector.broadcast %4 : f32 to vector<1x512xf32>
    %456 = arith.mulf %455, %425 : vector<1x512xf32>
    %457 = arith.addf %454, %456 : vector<1x512xf32>
    %458 = vector.broadcast %8 : f32 to vector<1x512xf32>
    %459 = arith.mulf %458, %438 : vector<1x512xf32>
    %460 = arith.addf %457, %459 : vector<1x512xf32>
    %461 = vector.broadcast %12 : f32 to vector<1x512xf32>
    %462 = arith.mulf %461, %451 : vector<1x512xf32>
    %463 = arith.addf %460, %462 : vector<1x512xf32>
    %464 = math.tanh %463 : vector<1x512xf32>
    %465 = vector.broadcast %1 : f32 to vector<1x512xf32>
    %466 = arith.mulf %465, %412 : vector<1x512xf32>
    %467 = arith.addf %25, %466 : vector<1x512xf32>
    %468 = vector.broadcast %5 : f32 to vector<1x512xf32>
    %469 = arith.mulf %468, %425 : vector<1x512xf32>
    %470 = arith.addf %467, %469 : vector<1x512xf32>
    %471 = vector.broadcast %9 : f32 to vector<1x512xf32>
    %472 = arith.mulf %471, %438 : vector<1x512xf32>
    %473 = arith.addf %470, %472 : vector<1x512xf32>
    %474 = vector.broadcast %13 : f32 to vector<1x512xf32>
    %475 = arith.mulf %474, %451 : vector<1x512xf32>
    %476 = arith.addf %473, %475 : vector<1x512xf32>
    %477 = math.tanh %476 : vector<1x512xf32>
    %478 = vector.broadcast %2 : f32 to vector<1x512xf32>
    %479 = arith.mulf %478, %412 : vector<1x512xf32>
    %480 = arith.addf %28, %479 : vector<1x512xf32>
    %481 = vector.broadcast %6 : f32 to vector<1x512xf32>
    %482 = arith.mulf %481, %425 : vector<1x512xf32>
    %483 = arith.addf %480, %482 : vector<1x512xf32>
    %484 = vector.broadcast %10 : f32 to vector<1x512xf32>
    %485 = arith.mulf %484, %438 : vector<1x512xf32>
    %486 = arith.addf %483, %485 : vector<1x512xf32>
    %487 = vector.broadcast %14 : f32 to vector<1x512xf32>
    %488 = arith.mulf %487, %451 : vector<1x512xf32>
    %489 = arith.addf %486, %488 : vector<1x512xf32>
    %490 = math.tanh %489 : vector<1x512xf32>
    %491 = vector.broadcast %3 : f32 to vector<1x512xf32>
    %492 = arith.mulf %491, %412 : vector<1x512xf32>
    %493 = arith.addf %31, %492 : vector<1x512xf32>
    %494 = vector.broadcast %7 : f32 to vector<1x512xf32>
    %495 = arith.mulf %494, %425 : vector<1x512xf32>
    %496 = arith.addf %493, %495 : vector<1x512xf32>
    %497 = vector.broadcast %11 : f32 to vector<1x512xf32>
    %498 = arith.mulf %497, %438 : vector<1x512xf32>
    %499 = arith.addf %496, %498 : vector<1x512xf32>
    %500 = vector.broadcast %15 : f32 to vector<1x512xf32>
    %501 = arith.mulf %500, %451 : vector<1x512xf32>
    %502 = arith.addf %499, %501 : vector<1x512xf32>
    %503 = math.tanh %502 : vector<1x512xf32>
    %504 = vector.broadcast %0 : f32 to vector<1x512xf32>
    %505 = arith.mulf %504, %464 : vector<1x512xf32>
    %506 = arith.addf %22, %505 : vector<1x512xf32>
    %507 = vector.broadcast %4 : f32 to vector<1x512xf32>
    %508 = arith.mulf %507, %477 : vector<1x512xf32>
    %509 = arith.addf %506, %508 : vector<1x512xf32>
    %510 = vector.broadcast %8 : f32 to vector<1x512xf32>
    %511 = arith.mulf %510, %490 : vector<1x512xf32>
    %512 = arith.addf %509, %511 : vector<1x512xf32>
    %513 = vector.broadcast %12 : f32 to vector<1x512xf32>
    %514 = arith.mulf %513, %503 : vector<1x512xf32>
    %515 = arith.addf %512, %514 : vector<1x512xf32>
    %516 = math.tanh %515 : vector<1x512xf32>
    %517 = vector.broadcast %1 : f32 to vector<1x512xf32>
    %518 = arith.mulf %517, %464 : vector<1x512xf32>
    %519 = arith.addf %25, %518 : vector<1x512xf32>
    %520 = vector.broadcast %5 : f32 to vector<1x512xf32>
    %521 = arith.mulf %520, %477 : vector<1x512xf32>
    %522 = arith.addf %519, %521 : vector<1x512xf32>
    %523 = vector.broadcast %9 : f32 to vector<1x512xf32>
    %524 = arith.mulf %523, %490 : vector<1x512xf32>
    %525 = arith.addf %522, %524 : vector<1x512xf32>
    %526 = vector.broadcast %13 : f32 to vector<1x512xf32>
    %527 = arith.mulf %526, %503 : vector<1x512xf32>
    %528 = arith.addf %525, %527 : vector<1x512xf32>
    %529 = math.tanh %528 : vector<1x512xf32>
    %530 = vector.broadcast %2 : f32 to vector<1x512xf32>
    %531 = arith.mulf %530, %464 : vector<1x512xf32>
    %532 = arith.addf %28, %531 : vector<1x512xf32>
    %533 = vector.broadcast %6 : f32 to vector<1x512xf32>
    %534 = arith.mulf %533, %477 : vector<1x512xf32>
    %535 = arith.addf %532, %534 : vector<1x512xf32>
    %536 = vector.broadcast %10 : f32 to vector<1x512xf32>
    %537 = arith.mulf %536, %490 : vector<1x512xf32>
    %538 = arith.addf %535, %537 : vector<1x512xf32>
    %539 = vector.broadcast %14 : f32 to vector<1x512xf32>
    %540 = arith.mulf %539, %503 : vector<1x512xf32>
    %541 = arith.addf %538, %540 : vector<1x512xf32>
    %542 = math.tanh %541 : vector<1x512xf32>
    %543 = vector.broadcast %3 : f32 to vector<1x512xf32>
    %544 = arith.mulf %543, %464 : vector<1x512xf32>
    %545 = arith.addf %31, %544 : vector<1x512xf32>
    %546 = vector.broadcast %7 : f32 to vector<1x512xf32>
    %547 = arith.mulf %546, %477 : vector<1x512xf32>
    %548 = arith.addf %545, %547 : vector<1x512xf32>
    %549 = vector.broadcast %11 : f32 to vector<1x512xf32>
    %550 = arith.mulf %549, %490 : vector<1x512xf32>
    %551 = arith.addf %548, %550 : vector<1x512xf32>
    %552 = vector.broadcast %15 : f32 to vector<1x512xf32>
    %553 = arith.mulf %552, %503 : vector<1x512xf32>
    %554 = arith.addf %551, %553 : vector<1x512xf32>
    %555 = math.tanh %554 : vector<1x512xf32>
    %556 = vector.broadcast %0 : f32 to vector<1x512xf32>
    %557 = arith.mulf %556, %516 : vector<1x512xf32>
    %558 = arith.addf %22, %557 : vector<1x512xf32>
    %559 = vector.broadcast %4 : f32 to vector<1x512xf32>
    %560 = arith.mulf %559, %529 : vector<1x512xf32>
    %561 = arith.addf %558, %560 : vector<1x512xf32>
    %562 = vector.broadcast %8 : f32 to vector<1x512xf32>
    %563 = arith.mulf %562, %542 : vector<1x512xf32>
    %564 = arith.addf %561, %563 : vector<1x512xf32>
    %565 = vector.broadcast %12 : f32 to vector<1x512xf32>
    %566 = arith.mulf %565, %555 : vector<1x512xf32>
    %567 = arith.addf %564, %566 : vector<1x512xf32>
    %568 = math.tanh %567 : vector<1x512xf32>
    %569 = vector.broadcast %1 : f32 to vector<1x512xf32>
    %570 = arith.mulf %569, %516 : vector<1x512xf32>
    %571 = arith.addf %25, %570 : vector<1x512xf32>
    %572 = vector.broadcast %5 : f32 to vector<1x512xf32>
    %573 = arith.mulf %572, %529 : vector<1x512xf32>
    %574 = arith.addf %571, %573 : vector<1x512xf32>
    %575 = vector.broadcast %9 : f32 to vector<1x512xf32>
    %576 = arith.mulf %575, %542 : vector<1x512xf32>
    %577 = arith.addf %574, %576 : vector<1x512xf32>
    %578 = vector.broadcast %13 : f32 to vector<1x512xf32>
    %579 = arith.mulf %578, %555 : vector<1x512xf32>
    %580 = arith.addf %577, %579 : vector<1x512xf32>
    %581 = math.tanh %580 : vector<1x512xf32>
    %582 = vector.broadcast %2 : f32 to vector<1x512xf32>
    %583 = arith.mulf %582, %516 : vector<1x512xf32>
    %584 = arith.addf %28, %583 : vector<1x512xf32>
    %585 = vector.broadcast %6 : f32 to vector<1x512xf32>
    %586 = arith.mulf %585, %529 : vector<1x512xf32>
    %587 = arith.addf %584, %586 : vector<1x512xf32>
    %588 = vector.broadcast %10 : f32 to vector<1x512xf32>
    %589 = arith.mulf %588, %542 : vector<1x512xf32>
    %590 = arith.addf %587, %589 : vector<1x512xf32>
    %591 = vector.broadcast %14 : f32 to vector<1x512xf32>
    %592 = arith.mulf %591, %555 : vector<1x512xf32>
    %593 = arith.addf %590, %592 : vector<1x512xf32>
    %594 = math.tanh %593 : vector<1x512xf32>
    %595 = vector.broadcast %3 : f32 to vector<1x512xf32>
    %596 = arith.mulf %595, %516 : vector<1x512xf32>
    %597 = arith.addf %31, %596 : vector<1x512xf32>
    %598 = vector.broadcast %7 : f32 to vector<1x512xf32>
    %599 = arith.mulf %598, %529 : vector<1x512xf32>
    %600 = arith.addf %597, %599 : vector<1x512xf32>
    %601 = vector.broadcast %11 : f32 to vector<1x512xf32>
    %602 = arith.mulf %601, %542 : vector<1x512xf32>
    %603 = arith.addf %600, %602 : vector<1x512xf32>
    %604 = vector.broadcast %15 : f32 to vector<1x512xf32>
    %605 = arith.mulf %604, %555 : vector<1x512xf32>
    %606 = arith.addf %603, %605 : vector<1x512xf32>
    %607 = math.tanh %606 : vector<1x512xf32>
    %608 = vector.broadcast %0 : f32 to vector<1x512xf32>
    %609 = arith.mulf %608, %568 : vector<1x512xf32>
    %610 = arith.addf %22, %609 : vector<1x512xf32>
    %611 = vector.broadcast %4 : f32 to vector<1x512xf32>
    %612 = arith.mulf %611, %581 : vector<1x512xf32>
    %613 = arith.addf %610, %612 : vector<1x512xf32>
    %614 = vector.broadcast %8 : f32 to vector<1x512xf32>
    %615 = arith.mulf %614, %594 : vector<1x512xf32>
    %616 = arith.addf %613, %615 : vector<1x512xf32>
    %617 = vector.broadcast %12 : f32 to vector<1x512xf32>
    %618 = arith.mulf %617, %607 : vector<1x512xf32>
    %619 = arith.addf %616, %618 : vector<1x512xf32>
    %620 = math.tanh %619 : vector<1x512xf32>
    %621 = vector.broadcast %1 : f32 to vector<1x512xf32>
    %622 = arith.mulf %621, %568 : vector<1x512xf32>
    %623 = arith.addf %25, %622 : vector<1x512xf32>
    %624 = vector.broadcast %5 : f32 to vector<1x512xf32>
    %625 = arith.mulf %624, %581 : vector<1x512xf32>
    %626 = arith.addf %623, %625 : vector<1x512xf32>
    %627 = vector.broadcast %9 : f32 to vector<1x512xf32>
    %628 = arith.mulf %627, %594 : vector<1x512xf32>
    %629 = arith.addf %626, %628 : vector<1x512xf32>
    %630 = vector.broadcast %13 : f32 to vector<1x512xf32>
    %631 = arith.mulf %630, %607 : vector<1x512xf32>
    %632 = arith.addf %629, %631 : vector<1x512xf32>
    %633 = math.tanh %632 : vector<1x512xf32>
    %634 = vector.broadcast %2 : f32 to vector<1x512xf32>
    %635 = arith.mulf %634, %568 : vector<1x512xf32>
    %636 = arith.addf %28, %635 : vector<1x512xf32>
    %637 = vector.broadcast %6 : f32 to vector<1x512xf32>
    %638 = arith.mulf %637, %581 : vector<1x512xf32>
    %639 = arith.addf %636, %638 : vector<1x512xf32>
    %640 = vector.broadcast %10 : f32 to vector<1x512xf32>
    %641 = arith.mulf %640, %594 : vector<1x512xf32>
    %642 = arith.addf %639, %641 : vector<1x512xf32>
    %643 = vector.broadcast %14 : f32 to vector<1x512xf32>
    %644 = arith.mulf %643, %607 : vector<1x512xf32>
    %645 = arith.addf %642, %644 : vector<1x512xf32>
    %646 = math.tanh %645 : vector<1x512xf32>
    %647 = vector.broadcast %3 : f32 to vector<1x512xf32>
    %648 = arith.mulf %647, %568 : vector<1x512xf32>
    %649 = arith.addf %31, %648 : vector<1x512xf32>
    %650 = vector.broadcast %7 : f32 to vector<1x512xf32>
    %651 = arith.mulf %650, %581 : vector<1x512xf32>
    %652 = arith.addf %649, %651 : vector<1x512xf32>
    %653 = vector.broadcast %11 : f32 to vector<1x512xf32>
    %654 = arith.mulf %653, %594 : vector<1x512xf32>
    %655 = arith.addf %652, %654 : vector<1x512xf32>
    %656 = vector.broadcast %15 : f32 to vector<1x512xf32>
    %657 = arith.mulf %656, %607 : vector<1x512xf32>
    %658 = arith.addf %655, %657 : vector<1x512xf32>
    %659 = math.tanh %658 : vector<1x512xf32>
    %660 = vector.broadcast %0 : f32 to vector<1x512xf32>
    %661 = arith.mulf %660, %620 : vector<1x512xf32>
    %662 = arith.addf %22, %661 : vector<1x512xf32>
    %663 = vector.broadcast %4 : f32 to vector<1x512xf32>
    %664 = arith.mulf %663, %633 : vector<1x512xf32>
    %665 = arith.addf %662, %664 : vector<1x512xf32>
    %666 = vector.broadcast %8 : f32 to vector<1x512xf32>
    %667 = arith.mulf %666, %646 : vector<1x512xf32>
    %668 = arith.addf %665, %667 : vector<1x512xf32>
    %669 = vector.broadcast %12 : f32 to vector<1x512xf32>
    %670 = arith.mulf %669, %659 : vector<1x512xf32>
    %671 = arith.addf %668, %670 : vector<1x512xf32>
    %672 = math.tanh %671 : vector<1x512xf32>
    %673 = vector.broadcast %1 : f32 to vector<1x512xf32>
    %674 = arith.mulf %673, %620 : vector<1x512xf32>
    %675 = arith.addf %25, %674 : vector<1x512xf32>
    %676 = vector.broadcast %5 : f32 to vector<1x512xf32>
    %677 = arith.mulf %676, %633 : vector<1x512xf32>
    %678 = arith.addf %675, %677 : vector<1x512xf32>
    %679 = vector.broadcast %9 : f32 to vector<1x512xf32>
    %680 = arith.mulf %679, %646 : vector<1x512xf32>
    %681 = arith.addf %678, %680 : vector<1x512xf32>
    %682 = vector.broadcast %13 : f32 to vector<1x512xf32>
    %683 = arith.mulf %682, %659 : vector<1x512xf32>
    %684 = arith.addf %681, %683 : vector<1x512xf32>
    %685 = math.tanh %684 : vector<1x512xf32>
    %686 = vector.broadcast %2 : f32 to vector<1x512xf32>
    %687 = arith.mulf %686, %620 : vector<1x512xf32>
    %688 = arith.addf %28, %687 : vector<1x512xf32>
    %689 = vector.broadcast %6 : f32 to vector<1x512xf32>
    %690 = arith.mulf %689, %633 : vector<1x512xf32>
    %691 = arith.addf %688, %690 : vector<1x512xf32>
    %692 = vector.broadcast %10 : f32 to vector<1x512xf32>
    %693 = arith.mulf %692, %646 : vector<1x512xf32>
    %694 = arith.addf %691, %693 : vector<1x512xf32>
    %695 = vector.broadcast %14 : f32 to vector<1x512xf32>
    %696 = arith.mulf %695, %659 : vector<1x512xf32>
    %697 = arith.addf %694, %696 : vector<1x512xf32>
    %698 = math.tanh %697 : vector<1x512xf32>
    %699 = vector.broadcast %3 : f32 to vector<1x512xf32>
    %700 = arith.mulf %699, %620 : vector<1x512xf32>
    %701 = arith.addf %31, %700 : vector<1x512xf32>
    %702 = vector.broadcast %7 : f32 to vector<1x512xf32>
    %703 = arith.mulf %702, %633 : vector<1x512xf32>
    %704 = arith.addf %701, %703 : vector<1x512xf32>
    %705 = vector.broadcast %11 : f32 to vector<1x512xf32>
    %706 = arith.mulf %705, %646 : vector<1x512xf32>
    %707 = arith.addf %704, %706 : vector<1x512xf32>
    %708 = vector.broadcast %15 : f32 to vector<1x512xf32>
    %709 = arith.mulf %708, %659 : vector<1x512xf32>
    %710 = arith.addf %707, %709 : vector<1x512xf32>
    %711 = math.tanh %710 : vector<1x512xf32>
    %712 = vector.broadcast %0 : f32 to vector<1x512xf32>
    %713 = arith.mulf %712, %672 : vector<1x512xf32>
    %714 = arith.addf %22, %713 : vector<1x512xf32>
    %715 = vector.broadcast %4 : f32 to vector<1x512xf32>
    %716 = arith.mulf %715, %685 : vector<1x512xf32>
    %717 = arith.addf %714, %716 : vector<1x512xf32>
    %718 = vector.broadcast %8 : f32 to vector<1x512xf32>
    %719 = arith.mulf %718, %698 : vector<1x512xf32>
    %720 = arith.addf %717, %719 : vector<1x512xf32>
    %721 = vector.broadcast %12 : f32 to vector<1x512xf32>
    %722 = arith.mulf %721, %711 : vector<1x512xf32>
    %723 = arith.addf %720, %722 : vector<1x512xf32>
    %724 = math.tanh %723 : vector<1x512xf32>
    %725 = vector.broadcast %1 : f32 to vector<1x512xf32>
    %726 = arith.mulf %725, %672 : vector<1x512xf32>
    %727 = arith.addf %25, %726 : vector<1x512xf32>
    %728 = vector.broadcast %5 : f32 to vector<1x512xf32>
    %729 = arith.mulf %728, %685 : vector<1x512xf32>
    %730 = arith.addf %727, %729 : vector<1x512xf32>
    %731 = vector.broadcast %9 : f32 to vector<1x512xf32>
    %732 = arith.mulf %731, %698 : vector<1x512xf32>
    %733 = arith.addf %730, %732 : vector<1x512xf32>
    %734 = vector.broadcast %13 : f32 to vector<1x512xf32>
    %735 = arith.mulf %734, %711 : vector<1x512xf32>
    %736 = arith.addf %733, %735 : vector<1x512xf32>
    %737 = math.tanh %736 : vector<1x512xf32>
    %738 = vector.broadcast %2 : f32 to vector<1x512xf32>
    %739 = arith.mulf %738, %672 : vector<1x512xf32>
    %740 = arith.addf %28, %739 : vector<1x512xf32>
    %741 = vector.broadcast %6 : f32 to vector<1x512xf32>
    %742 = arith.mulf %741, %685 : vector<1x512xf32>
    %743 = arith.addf %740, %742 : vector<1x512xf32>
    %744 = vector.broadcast %10 : f32 to vector<1x512xf32>
    %745 = arith.mulf %744, %698 : vector<1x512xf32>
    %746 = arith.addf %743, %745 : vector<1x512xf32>
    %747 = vector.broadcast %14 : f32 to vector<1x512xf32>
    %748 = arith.mulf %747, %711 : vector<1x512xf32>
    %749 = arith.addf %746, %748 : vector<1x512xf32>
    %750 = math.tanh %749 : vector<1x512xf32>
    %751 = vector.broadcast %3 : f32 to vector<1x512xf32>
    %752 = arith.mulf %751, %672 : vector<1x512xf32>
    %753 = arith.addf %31, %752 : vector<1x512xf32>
    %754 = vector.broadcast %7 : f32 to vector<1x512xf32>
    %755 = arith.mulf %754, %685 : vector<1x512xf32>
    %756 = arith.addf %753, %755 : vector<1x512xf32>
    %757 = vector.broadcast %11 : f32 to vector<1x512xf32>
    %758 = arith.mulf %757, %698 : vector<1x512xf32>
    %759 = arith.addf %756, %758 : vector<1x512xf32>
    %760 = vector.broadcast %15 : f32 to vector<1x512xf32>
    %761 = arith.mulf %760, %711 : vector<1x512xf32>
    %762 = arith.addf %759, %761 : vector<1x512xf32>
    %763 = math.tanh %762 : vector<1x512xf32>
    %764 = vector.broadcast %0 : f32 to vector<1x512xf32>
    %765 = arith.mulf %764, %724 : vector<1x512xf32>
    %766 = arith.addf %22, %765 : vector<1x512xf32>
    %767 = vector.broadcast %4 : f32 to vector<1x512xf32>
    %768 = arith.mulf %767, %737 : vector<1x512xf32>
    %769 = arith.addf %766, %768 : vector<1x512xf32>
    %770 = vector.broadcast %8 : f32 to vector<1x512xf32>
    %771 = arith.mulf %770, %750 : vector<1x512xf32>
    %772 = arith.addf %769, %771 : vector<1x512xf32>
    %773 = vector.broadcast %12 : f32 to vector<1x512xf32>
    %774 = arith.mulf %773, %763 : vector<1x512xf32>
    %775 = arith.addf %772, %774 : vector<1x512xf32>
    %776 = math.tanh %775 : vector<1x512xf32>
    %777 = vector.broadcast %1 : f32 to vector<1x512xf32>
    %778 = arith.mulf %777, %724 : vector<1x512xf32>
    %779 = arith.addf %25, %778 : vector<1x512xf32>
    %780 = vector.broadcast %5 : f32 to vector<1x512xf32>
    %781 = arith.mulf %780, %737 : vector<1x512xf32>
    %782 = arith.addf %779, %781 : vector<1x512xf32>
    %783 = vector.broadcast %9 : f32 to vector<1x512xf32>
    %784 = arith.mulf %783, %750 : vector<1x512xf32>
    %785 = arith.addf %782, %784 : vector<1x512xf32>
    %786 = vector.broadcast %13 : f32 to vector<1x512xf32>
    %787 = arith.mulf %786, %763 : vector<1x512xf32>
    %788 = arith.addf %785, %787 : vector<1x512xf32>
    %789 = math.tanh %788 : vector<1x512xf32>
    %790 = vector.broadcast %2 : f32 to vector<1x512xf32>
    %791 = arith.mulf %790, %724 : vector<1x512xf32>
    %792 = arith.addf %28, %791 : vector<1x512xf32>
    %793 = vector.broadcast %6 : f32 to vector<1x512xf32>
    %794 = arith.mulf %793, %737 : vector<1x512xf32>
    %795 = arith.addf %792, %794 : vector<1x512xf32>
    %796 = vector.broadcast %10 : f32 to vector<1x512xf32>
    %797 = arith.mulf %796, %750 : vector<1x512xf32>
    %798 = arith.addf %795, %797 : vector<1x512xf32>
    %799 = vector.broadcast %14 : f32 to vector<1x512xf32>
    %800 = arith.mulf %799, %763 : vector<1x512xf32>
    %801 = arith.addf %798, %800 : vector<1x512xf32>
    %802 = math.tanh %801 : vector<1x512xf32>
    %803 = vector.broadcast %3 : f32 to vector<1x512xf32>
    %804 = arith.mulf %803, %724 : vector<1x512xf32>
    %805 = arith.addf %31, %804 : vector<1x512xf32>
    %806 = vector.broadcast %7 : f32 to vector<1x512xf32>
    %807 = arith.mulf %806, %737 : vector<1x512xf32>
    %808 = arith.addf %805, %807 : vector<1x512xf32>
    %809 = vector.broadcast %11 : f32 to vector<1x512xf32>
    %810 = arith.mulf %809, %750 : vector<1x512xf32>
    %811 = arith.addf %808, %810 : vector<1x512xf32>
    %812 = vector.broadcast %15 : f32 to vector<1x512xf32>
    %813 = arith.mulf %812, %763 : vector<1x512xf32>
    %814 = arith.addf %811, %813 : vector<1x512xf32>
    %815 = math.tanh %814 : vector<1x512xf32>
    %816 = vector.broadcast %0 : f32 to vector<1x512xf32>
    %817 = arith.mulf %816, %776 : vector<1x512xf32>
    %818 = arith.addf %22, %817 : vector<1x512xf32>
    %819 = vector.broadcast %4 : f32 to vector<1x512xf32>
    %820 = arith.mulf %819, %789 : vector<1x512xf32>
    %821 = arith.addf %818, %820 : vector<1x512xf32>
    %822 = vector.broadcast %8 : f32 to vector<1x512xf32>
    %823 = arith.mulf %822, %802 : vector<1x512xf32>
    %824 = arith.addf %821, %823 : vector<1x512xf32>
    %825 = vector.broadcast %12 : f32 to vector<1x512xf32>
    %826 = arith.mulf %825, %815 : vector<1x512xf32>
    %827 = arith.addf %824, %826 : vector<1x512xf32>
    %828 = math.tanh %827 : vector<1x512xf32>
    %829 = vector.broadcast %1 : f32 to vector<1x512xf32>
    %830 = arith.mulf %829, %776 : vector<1x512xf32>
    %831 = arith.addf %25, %830 : vector<1x512xf32>
    %832 = vector.broadcast %5 : f32 to vector<1x512xf32>
    %833 = arith.mulf %832, %789 : vector<1x512xf32>
    %834 = arith.addf %831, %833 : vector<1x512xf32>
    %835 = vector.broadcast %9 : f32 to vector<1x512xf32>
    %836 = arith.mulf %835, %802 : vector<1x512xf32>
    %837 = arith.addf %834, %836 : vector<1x512xf32>
    %838 = vector.broadcast %13 : f32 to vector<1x512xf32>
    %839 = arith.mulf %838, %815 : vector<1x512xf32>
    %840 = arith.addf %837, %839 : vector<1x512xf32>
    %841 = math.tanh %840 : vector<1x512xf32>
    %842 = vector.broadcast %2 : f32 to vector<1x512xf32>
    %843 = arith.mulf %842, %776 : vector<1x512xf32>
    %844 = arith.addf %28, %843 : vector<1x512xf32>
    %845 = vector.broadcast %6 : f32 to vector<1x512xf32>
    %846 = arith.mulf %845, %789 : vector<1x512xf32>
    %847 = arith.addf %844, %846 : vector<1x512xf32>
    %848 = vector.broadcast %10 : f32 to vector<1x512xf32>
    %849 = arith.mulf %848, %802 : vector<1x512xf32>
    %850 = arith.addf %847, %849 : vector<1x512xf32>
    %851 = vector.broadcast %14 : f32 to vector<1x512xf32>
    %852 = arith.mulf %851, %815 : vector<1x512xf32>
    %853 = arith.addf %850, %852 : vector<1x512xf32>
    %854 = math.tanh %853 : vector<1x512xf32>
    %855 = vector.broadcast %3 : f32 to vector<1x512xf32>
    %856 = arith.mulf %855, %776 : vector<1x512xf32>
    %857 = arith.addf %31, %856 : vector<1x512xf32>
    %858 = vector.broadcast %7 : f32 to vector<1x512xf32>
    %859 = arith.mulf %858, %789 : vector<1x512xf32>
    %860 = arith.addf %857, %859 : vector<1x512xf32>
    %861 = vector.broadcast %11 : f32 to vector<1x512xf32>
    %862 = arith.mulf %861, %802 : vector<1x512xf32>
    %863 = arith.addf %860, %862 : vector<1x512xf32>
    %864 = vector.broadcast %15 : f32 to vector<1x512xf32>
    %865 = arith.mulf %864, %815 : vector<1x512xf32>
    %866 = arith.addf %863, %865 : vector<1x512xf32>
    %867 = math.tanh %866 : vector<1x512xf32>
    %868 = vector.broadcast %0 : f32 to vector<1x512xf32>
    %869 = arith.mulf %868, %828 : vector<1x512xf32>
    %870 = arith.addf %22, %869 : vector<1x512xf32>
    %871 = vector.broadcast %4 : f32 to vector<1x512xf32>
    %872 = arith.mulf %871, %841 : vector<1x512xf32>
    %873 = arith.addf %870, %872 : vector<1x512xf32>
    %874 = vector.broadcast %8 : f32 to vector<1x512xf32>
    %875 = arith.mulf %874, %854 : vector<1x512xf32>
    %876 = arith.addf %873, %875 : vector<1x512xf32>
    %877 = vector.broadcast %12 : f32 to vector<1x512xf32>
    %878 = arith.mulf %877, %867 : vector<1x512xf32>
    %879 = arith.addf %876, %878 : vector<1x512xf32>
    %880 = math.tanh %879 : vector<1x512xf32>
    %881 = vector.broadcast %1 : f32 to vector<1x512xf32>
    %882 = arith.mulf %881, %828 : vector<1x512xf32>
    %883 = arith.addf %25, %882 : vector<1x512xf32>
    %884 = vector.broadcast %5 : f32 to vector<1x512xf32>
    %885 = arith.mulf %884, %841 : vector<1x512xf32>
    %886 = arith.addf %883, %885 : vector<1x512xf32>
    %887 = vector.broadcast %9 : f32 to vector<1x512xf32>
    %888 = arith.mulf %887, %854 : vector<1x512xf32>
    %889 = arith.addf %886, %888 : vector<1x512xf32>
    %890 = vector.broadcast %13 : f32 to vector<1x512xf32>
    %891 = arith.mulf %890, %867 : vector<1x512xf32>
    %892 = arith.addf %889, %891 : vector<1x512xf32>
    %893 = math.tanh %892 : vector<1x512xf32>
    %894 = vector.broadcast %2 : f32 to vector<1x512xf32>
    %895 = arith.mulf %894, %828 : vector<1x512xf32>
    %896 = arith.addf %28, %895 : vector<1x512xf32>
    %897 = vector.broadcast %6 : f32 to vector<1x512xf32>
    %898 = arith.mulf %897, %841 : vector<1x512xf32>
    %899 = arith.addf %896, %898 : vector<1x512xf32>
    %900 = vector.broadcast %10 : f32 to vector<1x512xf32>
    %901 = arith.mulf %900, %854 : vector<1x512xf32>
    %902 = arith.addf %899, %901 : vector<1x512xf32>
    %903 = vector.broadcast %14 : f32 to vector<1x512xf32>
    %904 = arith.mulf %903, %867 : vector<1x512xf32>
    %905 = arith.addf %902, %904 : vector<1x512xf32>
    %906 = math.tanh %905 : vector<1x512xf32>
    %907 = vector.broadcast %3 : f32 to vector<1x512xf32>
    %908 = arith.mulf %907, %828 : vector<1x512xf32>
    %909 = arith.addf %31, %908 : vector<1x512xf32>
    %910 = vector.broadcast %7 : f32 to vector<1x512xf32>
    %911 = arith.mulf %910, %841 : vector<1x512xf32>
    %912 = arith.addf %909, %911 : vector<1x512xf32>
    %913 = vector.broadcast %11 : f32 to vector<1x512xf32>
    %914 = arith.mulf %913, %854 : vector<1x512xf32>
    %915 = arith.addf %912, %914 : vector<1x512xf32>
    %916 = vector.broadcast %15 : f32 to vector<1x512xf32>
    %917 = arith.mulf %916, %867 : vector<1x512xf32>
    %918 = arith.addf %915, %917 : vector<1x512xf32>
    %919 = math.tanh %918 : vector<1x512xf32>
    %920 = vector.broadcast %0 : f32 to vector<1x512xf32>
    %921 = arith.mulf %920, %880 : vector<1x512xf32>
    %922 = arith.addf %22, %921 : vector<1x512xf32>
    %923 = vector.broadcast %4 : f32 to vector<1x512xf32>
    %924 = arith.mulf %923, %893 : vector<1x512xf32>
    %925 = arith.addf %922, %924 : vector<1x512xf32>
    %926 = vector.broadcast %8 : f32 to vector<1x512xf32>
    %927 = arith.mulf %926, %906 : vector<1x512xf32>
    %928 = arith.addf %925, %927 : vector<1x512xf32>
    %929 = vector.broadcast %12 : f32 to vector<1x512xf32>
    %930 = arith.mulf %929, %919 : vector<1x512xf32>
    %931 = arith.addf %928, %930 : vector<1x512xf32>
    %932 = math.tanh %931 : vector<1x512xf32>
    %933 = vector.broadcast %1 : f32 to vector<1x512xf32>
    %934 = arith.mulf %933, %880 : vector<1x512xf32>
    %935 = arith.addf %25, %934 : vector<1x512xf32>
    %936 = vector.broadcast %5 : f32 to vector<1x512xf32>
    %937 = arith.mulf %936, %893 : vector<1x512xf32>
    %938 = arith.addf %935, %937 : vector<1x512xf32>
    %939 = vector.broadcast %9 : f32 to vector<1x512xf32>
    %940 = arith.mulf %939, %906 : vector<1x512xf32>
    %941 = arith.addf %938, %940 : vector<1x512xf32>
    %942 = vector.broadcast %13 : f32 to vector<1x512xf32>
    %943 = arith.mulf %942, %919 : vector<1x512xf32>
    %944 = arith.addf %941, %943 : vector<1x512xf32>
    %945 = math.tanh %944 : vector<1x512xf32>
    %946 = vector.broadcast %2 : f32 to vector<1x512xf32>
    %947 = arith.mulf %946, %880 : vector<1x512xf32>
    %948 = arith.addf %28, %947 : vector<1x512xf32>
    %949 = vector.broadcast %6 : f32 to vector<1x512xf32>
    %950 = arith.mulf %949, %893 : vector<1x512xf32>
    %951 = arith.addf %948, %950 : vector<1x512xf32>
    %952 = vector.broadcast %10 : f32 to vector<1x512xf32>
    %953 = arith.mulf %952, %906 : vector<1x512xf32>
    %954 = arith.addf %951, %953 : vector<1x512xf32>
    %955 = vector.broadcast %14 : f32 to vector<1x512xf32>
    %956 = arith.mulf %955, %919 : vector<1x512xf32>
    %957 = arith.addf %954, %956 : vector<1x512xf32>
    %958 = math.tanh %957 : vector<1x512xf32>
    %959 = vector.broadcast %3 : f32 to vector<1x512xf32>
    %960 = arith.mulf %959, %880 : vector<1x512xf32>
    %961 = arith.addf %31, %960 : vector<1x512xf32>
    %962 = vector.broadcast %7 : f32 to vector<1x512xf32>
    %963 = arith.mulf %962, %893 : vector<1x512xf32>
    %964 = arith.addf %961, %963 : vector<1x512xf32>
    %965 = vector.broadcast %11 : f32 to vector<1x512xf32>
    %966 = arith.mulf %965, %906 : vector<1x512xf32>
    %967 = arith.addf %964, %966 : vector<1x512xf32>
    %968 = vector.broadcast %15 : f32 to vector<1x512xf32>
    %969 = arith.mulf %968, %919 : vector<1x512xf32>
    %970 = arith.addf %967, %969 : vector<1x512xf32>
    %971 = math.tanh %970 : vector<1x512xf32>
    %972 = vector.broadcast %0 : f32 to vector<1x512xf32>
    %973 = arith.mulf %972, %932 : vector<1x512xf32>
    %974 = arith.addf %22, %973 : vector<1x512xf32>
    %975 = vector.broadcast %4 : f32 to vector<1x512xf32>
    %976 = arith.mulf %975, %945 : vector<1x512xf32>
    %977 = arith.addf %974, %976 : vector<1x512xf32>
    %978 = vector.broadcast %8 : f32 to vector<1x512xf32>
    %979 = arith.mulf %978, %958 : vector<1x512xf32>
    %980 = arith.addf %977, %979 : vector<1x512xf32>
    %981 = vector.broadcast %12 : f32 to vector<1x512xf32>
    %982 = arith.mulf %981, %971 : vector<1x512xf32>
    %983 = arith.addf %980, %982 : vector<1x512xf32>
    %984 = math.tanh %983 : vector<1x512xf32>
    %985 = vector.broadcast %1 : f32 to vector<1x512xf32>
    %986 = arith.mulf %985, %932 : vector<1x512xf32>
    %987 = arith.addf %25, %986 : vector<1x512xf32>
    %988 = vector.broadcast %5 : f32 to vector<1x512xf32>
    %989 = arith.mulf %988, %945 : vector<1x512xf32>
    %990 = arith.addf %987, %989 : vector<1x512xf32>
    %991 = vector.broadcast %9 : f32 to vector<1x512xf32>
    %992 = arith.mulf %991, %958 : vector<1x512xf32>
    %993 = arith.addf %990, %992 : vector<1x512xf32>
    %994 = vector.broadcast %13 : f32 to vector<1x512xf32>
    %995 = arith.mulf %994, %971 : vector<1x512xf32>
    %996 = arith.addf %993, %995 : vector<1x512xf32>
    %997 = math.tanh %996 : vector<1x512xf32>
    %998 = vector.broadcast %2 : f32 to vector<1x512xf32>
    %999 = arith.mulf %998, %932 : vector<1x512xf32>
    %1000 = arith.addf %28, %999 : vector<1x512xf32>
    %1001 = vector.broadcast %6 : f32 to vector<1x512xf32>
    %1002 = arith.mulf %1001, %945 : vector<1x512xf32>
    %1003 = arith.addf %1000, %1002 : vector<1x512xf32>
    %1004 = vector.broadcast %10 : f32 to vector<1x512xf32>
    %1005 = arith.mulf %1004, %958 : vector<1x512xf32>
    %1006 = arith.addf %1003, %1005 : vector<1x512xf32>
    %1007 = vector.broadcast %14 : f32 to vector<1x512xf32>
    %1008 = arith.mulf %1007, %971 : vector<1x512xf32>
    %1009 = arith.addf %1006, %1008 : vector<1x512xf32>
    %1010 = math.tanh %1009 : vector<1x512xf32>
    %1011 = vector.broadcast %3 : f32 to vector<1x512xf32>
    %1012 = arith.mulf %1011, %932 : vector<1x512xf32>
    %1013 = arith.addf %31, %1012 : vector<1x512xf32>
    %1014 = vector.broadcast %7 : f32 to vector<1x512xf32>
    %1015 = arith.mulf %1014, %945 : vector<1x512xf32>
    %1016 = arith.addf %1013, %1015 : vector<1x512xf32>
    %1017 = vector.broadcast %11 : f32 to vector<1x512xf32>
    %1018 = arith.mulf %1017, %958 : vector<1x512xf32>
    %1019 = arith.addf %1016, %1018 : vector<1x512xf32>
    %1020 = vector.broadcast %15 : f32 to vector<1x512xf32>
    %1021 = arith.mulf %1020, %971 : vector<1x512xf32>
    %1022 = arith.addf %1019, %1021 : vector<1x512xf32>
    %1023 = math.tanh %1022 : vector<1x512xf32>
    %1024 = vector.broadcast %0 : f32 to vector<1x512xf32>
    %1025 = arith.mulf %1024, %984 : vector<1x512xf32>
    %1026 = arith.addf %22, %1025 : vector<1x512xf32>
    %1027 = vector.broadcast %4 : f32 to vector<1x512xf32>
    %1028 = arith.mulf %1027, %997 : vector<1x512xf32>
    %1029 = arith.addf %1026, %1028 : vector<1x512xf32>
    %1030 = vector.broadcast %8 : f32 to vector<1x512xf32>
    %1031 = arith.mulf %1030, %1010 : vector<1x512xf32>
    %1032 = arith.addf %1029, %1031 : vector<1x512xf32>
    %1033 = vector.broadcast %12 : f32 to vector<1x512xf32>
    %1034 = arith.mulf %1033, %1023 : vector<1x512xf32>
    %1035 = arith.addf %1032, %1034 : vector<1x512xf32>
    %1036 = math.tanh %1035 : vector<1x512xf32>
    %1037 = vector.broadcast %1 : f32 to vector<1x512xf32>
    %1038 = arith.mulf %1037, %984 : vector<1x512xf32>
    %1039 = arith.addf %25, %1038 : vector<1x512xf32>
    %1040 = vector.broadcast %5 : f32 to vector<1x512xf32>
    %1041 = arith.mulf %1040, %997 : vector<1x512xf32>
    %1042 = arith.addf %1039, %1041 : vector<1x512xf32>
    %1043 = vector.broadcast %9 : f32 to vector<1x512xf32>
    %1044 = arith.mulf %1043, %1010 : vector<1x512xf32>
    %1045 = arith.addf %1042, %1044 : vector<1x512xf32>
    %1046 = vector.broadcast %13 : f32 to vector<1x512xf32>
    %1047 = arith.mulf %1046, %1023 : vector<1x512xf32>
    %1048 = arith.addf %1045, %1047 : vector<1x512xf32>
    %1049 = math.tanh %1048 : vector<1x512xf32>
    %1050 = vector.broadcast %2 : f32 to vector<1x512xf32>
    %1051 = arith.mulf %1050, %984 : vector<1x512xf32>
    %1052 = arith.addf %28, %1051 : vector<1x512xf32>
    %1053 = vector.broadcast %6 : f32 to vector<1x512xf32>
    %1054 = arith.mulf %1053, %997 : vector<1x512xf32>
    %1055 = arith.addf %1052, %1054 : vector<1x512xf32>
    %1056 = vector.broadcast %10 : f32 to vector<1x512xf32>
    %1057 = arith.mulf %1056, %1010 : vector<1x512xf32>
    %1058 = arith.addf %1055, %1057 : vector<1x512xf32>
    %1059 = vector.broadcast %14 : f32 to vector<1x512xf32>
    %1060 = arith.mulf %1059, %1023 : vector<1x512xf32>
    %1061 = arith.addf %1058, %1060 : vector<1x512xf32>
    %1062 = math.tanh %1061 : vector<1x512xf32>
    %1063 = vector.broadcast %3 : f32 to vector<1x512xf32>
    %1064 = arith.mulf %1063, %984 : vector<1x512xf32>
    %1065 = arith.addf %31, %1064 : vector<1x512xf32>
    %1066 = vector.broadcast %7 : f32 to vector<1x512xf32>
    %1067 = arith.mulf %1066, %997 : vector<1x512xf32>
    %1068 = arith.addf %1065, %1067 : vector<1x512xf32>
    %1069 = vector.broadcast %11 : f32 to vector<1x512xf32>
    %1070 = arith.mulf %1069, %1010 : vector<1x512xf32>
    %1071 = arith.addf %1068, %1070 : vector<1x512xf32>
    %1072 = vector.broadcast %15 : f32 to vector<1x512xf32>
    %1073 = arith.mulf %1072, %1023 : vector<1x512xf32>
    %1074 = arith.addf %1071, %1073 : vector<1x512xf32>
    %1075 = math.tanh %1074 : vector<1x512xf32>
    %1076 = vector.broadcast %0 : f32 to vector<1x512xf32>
    %1077 = arith.mulf %1076, %1036 : vector<1x512xf32>
    %1078 = arith.addf %22, %1077 : vector<1x512xf32>
    %1079 = vector.broadcast %4 : f32 to vector<1x512xf32>
    %1080 = arith.mulf %1079, %1049 : vector<1x512xf32>
    %1081 = arith.addf %1078, %1080 : vector<1x512xf32>
    %1082 = vector.broadcast %8 : f32 to vector<1x512xf32>
    %1083 = arith.mulf %1082, %1062 : vector<1x512xf32>
    %1084 = arith.addf %1081, %1083 : vector<1x512xf32>
    %1085 = vector.broadcast %12 : f32 to vector<1x512xf32>
    %1086 = arith.mulf %1085, %1075 : vector<1x512xf32>
    %1087 = arith.addf %1084, %1086 : vector<1x512xf32>
    %1088 = math.tanh %1087 : vector<1x512xf32>
    %1089 = vector.broadcast %1 : f32 to vector<1x512xf32>
    %1090 = arith.mulf %1089, %1036 : vector<1x512xf32>
    %1091 = arith.addf %25, %1090 : vector<1x512xf32>
    %1092 = vector.broadcast %5 : f32 to vector<1x512xf32>
    %1093 = arith.mulf %1092, %1049 : vector<1x512xf32>
    %1094 = arith.addf %1091, %1093 : vector<1x512xf32>
    %1095 = vector.broadcast %9 : f32 to vector<1x512xf32>
    %1096 = arith.mulf %1095, %1062 : vector<1x512xf32>
    %1097 = arith.addf %1094, %1096 : vector<1x512xf32>
    %1098 = vector.broadcast %13 : f32 to vector<1x512xf32>
    %1099 = arith.mulf %1098, %1075 : vector<1x512xf32>
    %1100 = arith.addf %1097, %1099 : vector<1x512xf32>
    %1101 = math.tanh %1100 : vector<1x512xf32>
    %1102 = vector.broadcast %2 : f32 to vector<1x512xf32>
    %1103 = arith.mulf %1102, %1036 : vector<1x512xf32>
    %1104 = arith.addf %28, %1103 : vector<1x512xf32>
    %1105 = vector.broadcast %6 : f32 to vector<1x512xf32>
    %1106 = arith.mulf %1105, %1049 : vector<1x512xf32>
    %1107 = arith.addf %1104, %1106 : vector<1x512xf32>
    %1108 = vector.broadcast %10 : f32 to vector<1x512xf32>
    %1109 = arith.mulf %1108, %1062 : vector<1x512xf32>
    %1110 = arith.addf %1107, %1109 : vector<1x512xf32>
    %1111 = vector.broadcast %14 : f32 to vector<1x512xf32>
    %1112 = arith.mulf %1111, %1075 : vector<1x512xf32>
    %1113 = arith.addf %1110, %1112 : vector<1x512xf32>
    %1114 = math.tanh %1113 : vector<1x512xf32>
    %1115 = vector.broadcast %3 : f32 to vector<1x512xf32>
    %1116 = arith.mulf %1115, %1036 : vector<1x512xf32>
    %1117 = arith.addf %31, %1116 : vector<1x512xf32>
    %1118 = vector.broadcast %7 : f32 to vector<1x512xf32>
    %1119 = arith.mulf %1118, %1049 : vector<1x512xf32>
    %1120 = arith.addf %1117, %1119 : vector<1x512xf32>
    %1121 = vector.broadcast %11 : f32 to vector<1x512xf32>
    %1122 = arith.mulf %1121, %1062 : vector<1x512xf32>
    %1123 = arith.addf %1120, %1122 : vector<1x512xf32>
    %1124 = vector.broadcast %15 : f32 to vector<1x512xf32>
    %1125 = arith.mulf %1124, %1075 : vector<1x512xf32>
    %1126 = arith.addf %1123, %1125 : vector<1x512xf32>
    %1127 = math.tanh %1126 : vector<1x512xf32>
    %1128 = vector.broadcast %0 : f32 to vector<1x512xf32>
    %1129 = arith.mulf %1128, %1088 : vector<1x512xf32>
    %1130 = arith.addf %22, %1129 : vector<1x512xf32>
    %1131 = vector.broadcast %4 : f32 to vector<1x512xf32>
    %1132 = arith.mulf %1131, %1101 : vector<1x512xf32>
    %1133 = arith.addf %1130, %1132 : vector<1x512xf32>
    %1134 = vector.broadcast %8 : f32 to vector<1x512xf32>
    %1135 = arith.mulf %1134, %1114 : vector<1x512xf32>
    %1136 = arith.addf %1133, %1135 : vector<1x512xf32>
    %1137 = vector.broadcast %12 : f32 to vector<1x512xf32>
    %1138 = arith.mulf %1137, %1127 : vector<1x512xf32>
    %1139 = arith.addf %1136, %1138 : vector<1x512xf32>
    %1140 = math.tanh %1139 : vector<1x512xf32>
    %1141 = vector.broadcast %1 : f32 to vector<1x512xf32>
    %1142 = arith.mulf %1141, %1088 : vector<1x512xf32>
    %1143 = arith.addf %25, %1142 : vector<1x512xf32>
    %1144 = vector.broadcast %5 : f32 to vector<1x512xf32>
    %1145 = arith.mulf %1144, %1101 : vector<1x512xf32>
    %1146 = arith.addf %1143, %1145 : vector<1x512xf32>
    %1147 = vector.broadcast %9 : f32 to vector<1x512xf32>
    %1148 = arith.mulf %1147, %1114 : vector<1x512xf32>
    %1149 = arith.addf %1146, %1148 : vector<1x512xf32>
    %1150 = vector.broadcast %13 : f32 to vector<1x512xf32>
    %1151 = arith.mulf %1150, %1127 : vector<1x512xf32>
    %1152 = arith.addf %1149, %1151 : vector<1x512xf32>
    %1153 = math.tanh %1152 : vector<1x512xf32>
    %1154 = vector.broadcast %2 : f32 to vector<1x512xf32>
    %1155 = arith.mulf %1154, %1088 : vector<1x512xf32>
    %1156 = arith.addf %28, %1155 : vector<1x512xf32>
    %1157 = vector.broadcast %6 : f32 to vector<1x512xf32>
    %1158 = arith.mulf %1157, %1101 : vector<1x512xf32>
    %1159 = arith.addf %1156, %1158 : vector<1x512xf32>
    %1160 = vector.broadcast %10 : f32 to vector<1x512xf32>
    %1161 = arith.mulf %1160, %1114 : vector<1x512xf32>
    %1162 = arith.addf %1159, %1161 : vector<1x512xf32>
    %1163 = vector.broadcast %14 : f32 to vector<1x512xf32>
    %1164 = arith.mulf %1163, %1127 : vector<1x512xf32>
    %1165 = arith.addf %1162, %1164 : vector<1x512xf32>
    %1166 = math.tanh %1165 : vector<1x512xf32>
    %1167 = vector.broadcast %3 : f32 to vector<1x512xf32>
    %1168 = arith.mulf %1167, %1088 : vector<1x512xf32>
    %1169 = arith.addf %31, %1168 : vector<1x512xf32>
    %1170 = vector.broadcast %7 : f32 to vector<1x512xf32>
    %1171 = arith.mulf %1170, %1101 : vector<1x512xf32>
    %1172 = arith.addf %1169, %1171 : vector<1x512xf32>
    %1173 = vector.broadcast %11 : f32 to vector<1x512xf32>
    %1174 = arith.mulf %1173, %1114 : vector<1x512xf32>
    %1175 = arith.addf %1172, %1174 : vector<1x512xf32>
    %1176 = vector.broadcast %15 : f32 to vector<1x512xf32>
    %1177 = arith.mulf %1176, %1127 : vector<1x512xf32>
    %1178 = arith.addf %1175, %1177 : vector<1x512xf32>
    %1179 = math.tanh %1178 : vector<1x512xf32>
    %1180 = vector.broadcast %0 : f32 to vector<1x512xf32>
    %1181 = arith.mulf %1180, %1140 : vector<1x512xf32>
    %1182 = arith.addf %22, %1181 : vector<1x512xf32>
    %1183 = vector.broadcast %4 : f32 to vector<1x512xf32>
    %1184 = arith.mulf %1183, %1153 : vector<1x512xf32>
    %1185 = arith.addf %1182, %1184 : vector<1x512xf32>
    %1186 = vector.broadcast %8 : f32 to vector<1x512xf32>
    %1187 = arith.mulf %1186, %1166 : vector<1x512xf32>
    %1188 = arith.addf %1185, %1187 : vector<1x512xf32>
    %1189 = vector.broadcast %12 : f32 to vector<1x512xf32>
    %1190 = arith.mulf %1189, %1179 : vector<1x512xf32>
    %1191 = arith.addf %1188, %1190 : vector<1x512xf32>
    %1192 = math.tanh %1191 : vector<1x512xf32>
    %1193 = vector.broadcast %1 : f32 to vector<1x512xf32>
    %1194 = arith.mulf %1193, %1140 : vector<1x512xf32>
    %1195 = arith.addf %25, %1194 : vector<1x512xf32>
    %1196 = vector.broadcast %5 : f32 to vector<1x512xf32>
    %1197 = arith.mulf %1196, %1153 : vector<1x512xf32>
    %1198 = arith.addf %1195, %1197 : vector<1x512xf32>
    %1199 = vector.broadcast %9 : f32 to vector<1x512xf32>
    %1200 = arith.mulf %1199, %1166 : vector<1x512xf32>
    %1201 = arith.addf %1198, %1200 : vector<1x512xf32>
    %1202 = vector.broadcast %13 : f32 to vector<1x512xf32>
    %1203 = arith.mulf %1202, %1179 : vector<1x512xf32>
    %1204 = arith.addf %1201, %1203 : vector<1x512xf32>
    %1205 = math.tanh %1204 : vector<1x512xf32>
    %1206 = vector.broadcast %2 : f32 to vector<1x512xf32>
    %1207 = arith.mulf %1206, %1140 : vector<1x512xf32>
    %1208 = arith.addf %28, %1207 : vector<1x512xf32>
    %1209 = vector.broadcast %6 : f32 to vector<1x512xf32>
    %1210 = arith.mulf %1209, %1153 : vector<1x512xf32>
    %1211 = arith.addf %1208, %1210 : vector<1x512xf32>
    %1212 = vector.broadcast %10 : f32 to vector<1x512xf32>
    %1213 = arith.mulf %1212, %1166 : vector<1x512xf32>
    %1214 = arith.addf %1211, %1213 : vector<1x512xf32>
    %1215 = vector.broadcast %14 : f32 to vector<1x512xf32>
    %1216 = arith.mulf %1215, %1179 : vector<1x512xf32>
    %1217 = arith.addf %1214, %1216 : vector<1x512xf32>
    %1218 = math.tanh %1217 : vector<1x512xf32>
    %1219 = vector.broadcast %3 : f32 to vector<1x512xf32>
    %1220 = arith.mulf %1219, %1140 : vector<1x512xf32>
    %1221 = arith.addf %31, %1220 : vector<1x512xf32>
    %1222 = vector.broadcast %7 : f32 to vector<1x512xf32>
    %1223 = arith.mulf %1222, %1153 : vector<1x512xf32>
    %1224 = arith.addf %1221, %1223 : vector<1x512xf32>
    %1225 = vector.broadcast %11 : f32 to vector<1x512xf32>
    %1226 = arith.mulf %1225, %1166 : vector<1x512xf32>
    %1227 = arith.addf %1224, %1226 : vector<1x512xf32>
    %1228 = vector.broadcast %15 : f32 to vector<1x512xf32>
    %1229 = arith.mulf %1228, %1179 : vector<1x512xf32>
    %1230 = arith.addf %1227, %1229 : vector<1x512xf32>
    %1231 = math.tanh %1230 : vector<1x512xf32>
    %1232 = vector.broadcast %0 : f32 to vector<1x512xf32>
    %1233 = arith.mulf %1232, %1192 : vector<1x512xf32>
    %1234 = arith.addf %22, %1233 : vector<1x512xf32>
    %1235 = vector.broadcast %4 : f32 to vector<1x512xf32>
    %1236 = arith.mulf %1235, %1205 : vector<1x512xf32>
    %1237 = arith.addf %1234, %1236 : vector<1x512xf32>
    %1238 = vector.broadcast %8 : f32 to vector<1x512xf32>
    %1239 = arith.mulf %1238, %1218 : vector<1x512xf32>
    %1240 = arith.addf %1237, %1239 : vector<1x512xf32>
    %1241 = vector.broadcast %12 : f32 to vector<1x512xf32>
    %1242 = arith.mulf %1241, %1231 : vector<1x512xf32>
    %1243 = arith.addf %1240, %1242 : vector<1x512xf32>
    %1244 = math.tanh %1243 : vector<1x512xf32>
    %1245 = vector.broadcast %1 : f32 to vector<1x512xf32>
    %1246 = arith.mulf %1245, %1192 : vector<1x512xf32>
    %1247 = arith.addf %25, %1246 : vector<1x512xf32>
    %1248 = vector.broadcast %5 : f32 to vector<1x512xf32>
    %1249 = arith.mulf %1248, %1205 : vector<1x512xf32>
    %1250 = arith.addf %1247, %1249 : vector<1x512xf32>
    %1251 = vector.broadcast %9 : f32 to vector<1x512xf32>
    %1252 = arith.mulf %1251, %1218 : vector<1x512xf32>
    %1253 = arith.addf %1250, %1252 : vector<1x512xf32>
    %1254 = vector.broadcast %13 : f32 to vector<1x512xf32>
    %1255 = arith.mulf %1254, %1231 : vector<1x512xf32>
    %1256 = arith.addf %1253, %1255 : vector<1x512xf32>
    %1257 = math.tanh %1256 : vector<1x512xf32>
    %1258 = vector.broadcast %2 : f32 to vector<1x512xf32>
    %1259 = arith.mulf %1258, %1192 : vector<1x512xf32>
    %1260 = arith.addf %28, %1259 : vector<1x512xf32>
    %1261 = vector.broadcast %6 : f32 to vector<1x512xf32>
    %1262 = arith.mulf %1261, %1205 : vector<1x512xf32>
    %1263 = arith.addf %1260, %1262 : vector<1x512xf32>
    %1264 = vector.broadcast %10 : f32 to vector<1x512xf32>
    %1265 = arith.mulf %1264, %1218 : vector<1x512xf32>
    %1266 = arith.addf %1263, %1265 : vector<1x512xf32>
    %1267 = vector.broadcast %14 : f32 to vector<1x512xf32>
    %1268 = arith.mulf %1267, %1231 : vector<1x512xf32>
    %1269 = arith.addf %1266, %1268 : vector<1x512xf32>
    %1270 = math.tanh %1269 : vector<1x512xf32>
    %1271 = vector.broadcast %3 : f32 to vector<1x512xf32>
    %1272 = arith.mulf %1271, %1192 : vector<1x512xf32>
    %1273 = arith.addf %31, %1272 : vector<1x512xf32>
    %1274 = vector.broadcast %7 : f32 to vector<1x512xf32>
    %1275 = arith.mulf %1274, %1205 : vector<1x512xf32>
    %1276 = arith.addf %1273, %1275 : vector<1x512xf32>
    %1277 = vector.broadcast %11 : f32 to vector<1x512xf32>
    %1278 = arith.mulf %1277, %1218 : vector<1x512xf32>
    %1279 = arith.addf %1276, %1278 : vector<1x512xf32>
    %1280 = vector.broadcast %15 : f32 to vector<1x512xf32>
    %1281 = arith.mulf %1280, %1231 : vector<1x512xf32>
    %1282 = arith.addf %1279, %1281 : vector<1x512xf32>
    %1283 = math.tanh %1282 : vector<1x512xf32>
    %1284 = vector.broadcast %0 : f32 to vector<1x512xf32>
    %1285 = arith.mulf %1284, %1244 : vector<1x512xf32>
    %1286 = arith.addf %22, %1285 : vector<1x512xf32>
    %1287 = vector.broadcast %4 : f32 to vector<1x512xf32>
    %1288 = arith.mulf %1287, %1257 : vector<1x512xf32>
    %1289 = arith.addf %1286, %1288 : vector<1x512xf32>
    %1290 = vector.broadcast %8 : f32 to vector<1x512xf32>
    %1291 = arith.mulf %1290, %1270 : vector<1x512xf32>
    %1292 = arith.addf %1289, %1291 : vector<1x512xf32>
    %1293 = vector.broadcast %12 : f32 to vector<1x512xf32>
    %1294 = arith.mulf %1293, %1283 : vector<1x512xf32>
    %1295 = arith.addf %1292, %1294 : vector<1x512xf32>
    %1296 = math.tanh %1295 : vector<1x512xf32>
    %1297 = vector.broadcast %1 : f32 to vector<1x512xf32>
    %1298 = arith.mulf %1297, %1244 : vector<1x512xf32>
    %1299 = arith.addf %25, %1298 : vector<1x512xf32>
    %1300 = vector.broadcast %5 : f32 to vector<1x512xf32>
    %1301 = arith.mulf %1300, %1257 : vector<1x512xf32>
    %1302 = arith.addf %1299, %1301 : vector<1x512xf32>
    %1303 = vector.broadcast %9 : f32 to vector<1x512xf32>
    %1304 = arith.mulf %1303, %1270 : vector<1x512xf32>
    %1305 = arith.addf %1302, %1304 : vector<1x512xf32>
    %1306 = vector.broadcast %13 : f32 to vector<1x512xf32>
    %1307 = arith.mulf %1306, %1283 : vector<1x512xf32>
    %1308 = arith.addf %1305, %1307 : vector<1x512xf32>
    %1309 = math.tanh %1308 : vector<1x512xf32>
    %1310 = vector.broadcast %2 : f32 to vector<1x512xf32>
    %1311 = arith.mulf %1310, %1244 : vector<1x512xf32>
    %1312 = arith.addf %28, %1311 : vector<1x512xf32>
    %1313 = vector.broadcast %6 : f32 to vector<1x512xf32>
    %1314 = arith.mulf %1313, %1257 : vector<1x512xf32>
    %1315 = arith.addf %1312, %1314 : vector<1x512xf32>
    %1316 = vector.broadcast %10 : f32 to vector<1x512xf32>
    %1317 = arith.mulf %1316, %1270 : vector<1x512xf32>
    %1318 = arith.addf %1315, %1317 : vector<1x512xf32>
    %1319 = vector.broadcast %14 : f32 to vector<1x512xf32>
    %1320 = arith.mulf %1319, %1283 : vector<1x512xf32>
    %1321 = arith.addf %1318, %1320 : vector<1x512xf32>
    %1322 = math.tanh %1321 : vector<1x512xf32>
    %1323 = vector.broadcast %3 : f32 to vector<1x512xf32>
    %1324 = arith.mulf %1323, %1244 : vector<1x512xf32>
    %1325 = arith.addf %31, %1324 : vector<1x512xf32>
    %1326 = vector.broadcast %7 : f32 to vector<1x512xf32>
    %1327 = arith.mulf %1326, %1257 : vector<1x512xf32>
    %1328 = arith.addf %1325, %1327 : vector<1x512xf32>
    %1329 = vector.broadcast %11 : f32 to vector<1x512xf32>
    %1330 = arith.mulf %1329, %1270 : vector<1x512xf32>
    %1331 = arith.addf %1328, %1330 : vector<1x512xf32>
    %1332 = vector.broadcast %15 : f32 to vector<1x512xf32>
    %1333 = arith.mulf %1332, %1283 : vector<1x512xf32>
    %1334 = arith.addf %1331, %1333 : vector<1x512xf32>
    %1335 = math.tanh %1334 : vector<1x512xf32>
    %1336 = vector.broadcast %0 : f32 to vector<1x512xf32>
    %1337 = arith.mulf %1336, %1296 : vector<1x512xf32>
    %1338 = arith.addf %22, %1337 : vector<1x512xf32>
    %1339 = vector.broadcast %4 : f32 to vector<1x512xf32>
    %1340 = arith.mulf %1339, %1309 : vector<1x512xf32>
    %1341 = arith.addf %1338, %1340 : vector<1x512xf32>
    %1342 = vector.broadcast %8 : f32 to vector<1x512xf32>
    %1343 = arith.mulf %1342, %1322 : vector<1x512xf32>
    %1344 = arith.addf %1341, %1343 : vector<1x512xf32>
    %1345 = vector.broadcast %12 : f32 to vector<1x512xf32>
    %1346 = arith.mulf %1345, %1335 : vector<1x512xf32>
    %1347 = arith.addf %1344, %1346 : vector<1x512xf32>
    %1348 = math.tanh %1347 : vector<1x512xf32>
    %1349 = vector.broadcast %1 : f32 to vector<1x512xf32>
    %1350 = arith.mulf %1349, %1296 : vector<1x512xf32>
    %1351 = arith.addf %25, %1350 : vector<1x512xf32>
    %1352 = vector.broadcast %5 : f32 to vector<1x512xf32>
    %1353 = arith.mulf %1352, %1309 : vector<1x512xf32>
    %1354 = arith.addf %1351, %1353 : vector<1x512xf32>
    %1355 = vector.broadcast %9 : f32 to vector<1x512xf32>
    %1356 = arith.mulf %1355, %1322 : vector<1x512xf32>
    %1357 = arith.addf %1354, %1356 : vector<1x512xf32>
    %1358 = vector.broadcast %13 : f32 to vector<1x512xf32>
    %1359 = arith.mulf %1358, %1335 : vector<1x512xf32>
    %1360 = arith.addf %1357, %1359 : vector<1x512xf32>
    %1361 = math.tanh %1360 : vector<1x512xf32>
    %1362 = vector.broadcast %2 : f32 to vector<1x512xf32>
    %1363 = arith.mulf %1362, %1296 : vector<1x512xf32>
    %1364 = arith.addf %28, %1363 : vector<1x512xf32>
    %1365 = vector.broadcast %6 : f32 to vector<1x512xf32>
    %1366 = arith.mulf %1365, %1309 : vector<1x512xf32>
    %1367 = arith.addf %1364, %1366 : vector<1x512xf32>
    %1368 = vector.broadcast %10 : f32 to vector<1x512xf32>
    %1369 = arith.mulf %1368, %1322 : vector<1x512xf32>
    %1370 = arith.addf %1367, %1369 : vector<1x512xf32>
    %1371 = vector.broadcast %14 : f32 to vector<1x512xf32>
    %1372 = arith.mulf %1371, %1335 : vector<1x512xf32>
    %1373 = arith.addf %1370, %1372 : vector<1x512xf32>
    %1374 = math.tanh %1373 : vector<1x512xf32>
    %1375 = vector.broadcast %3 : f32 to vector<1x512xf32>
    %1376 = arith.mulf %1375, %1296 : vector<1x512xf32>
    %1377 = arith.addf %31, %1376 : vector<1x512xf32>
    %1378 = vector.broadcast %7 : f32 to vector<1x512xf32>
    %1379 = arith.mulf %1378, %1309 : vector<1x512xf32>
    %1380 = arith.addf %1377, %1379 : vector<1x512xf32>
    %1381 = vector.broadcast %11 : f32 to vector<1x512xf32>
    %1382 = arith.mulf %1381, %1322 : vector<1x512xf32>
    %1383 = arith.addf %1380, %1382 : vector<1x512xf32>
    %1384 = vector.broadcast %15 : f32 to vector<1x512xf32>
    %1385 = arith.mulf %1384, %1335 : vector<1x512xf32>
    %1386 = arith.addf %1383, %1385 : vector<1x512xf32>
    %1387 = math.tanh %1386 : vector<1x512xf32>
    %1388 = vector.broadcast %0 : f32 to vector<1x512xf32>
    %1389 = arith.mulf %1388, %1348 : vector<1x512xf32>
    %1390 = arith.addf %22, %1389 : vector<1x512xf32>
    %1391 = vector.broadcast %4 : f32 to vector<1x512xf32>
    %1392 = arith.mulf %1391, %1361 : vector<1x512xf32>
    %1393 = arith.addf %1390, %1392 : vector<1x512xf32>
    %1394 = vector.broadcast %8 : f32 to vector<1x512xf32>
    %1395 = arith.mulf %1394, %1374 : vector<1x512xf32>
    %1396 = arith.addf %1393, %1395 : vector<1x512xf32>
    %1397 = vector.broadcast %12 : f32 to vector<1x512xf32>
    %1398 = arith.mulf %1397, %1387 : vector<1x512xf32>
    %1399 = arith.addf %1396, %1398 : vector<1x512xf32>
    %1400 = math.tanh %1399 : vector<1x512xf32>
    %1401 = vector.broadcast %1 : f32 to vector<1x512xf32>
    %1402 = arith.mulf %1401, %1348 : vector<1x512xf32>
    %1403 = arith.addf %25, %1402 : vector<1x512xf32>
    %1404 = vector.broadcast %5 : f32 to vector<1x512xf32>
    %1405 = arith.mulf %1404, %1361 : vector<1x512xf32>
    %1406 = arith.addf %1403, %1405 : vector<1x512xf32>
    %1407 = vector.broadcast %9 : f32 to vector<1x512xf32>
    %1408 = arith.mulf %1407, %1374 : vector<1x512xf32>
    %1409 = arith.addf %1406, %1408 : vector<1x512xf32>
    %1410 = vector.broadcast %13 : f32 to vector<1x512xf32>
    %1411 = arith.mulf %1410, %1387 : vector<1x512xf32>
    %1412 = arith.addf %1409, %1411 : vector<1x512xf32>
    %1413 = math.tanh %1412 : vector<1x512xf32>
    %1414 = vector.broadcast %2 : f32 to vector<1x512xf32>
    %1415 = arith.mulf %1414, %1348 : vector<1x512xf32>
    %1416 = arith.addf %28, %1415 : vector<1x512xf32>
    %1417 = vector.broadcast %6 : f32 to vector<1x512xf32>
    %1418 = arith.mulf %1417, %1361 : vector<1x512xf32>
    %1419 = arith.addf %1416, %1418 : vector<1x512xf32>
    %1420 = vector.broadcast %10 : f32 to vector<1x512xf32>
    %1421 = arith.mulf %1420, %1374 : vector<1x512xf32>
    %1422 = arith.addf %1419, %1421 : vector<1x512xf32>
    %1423 = vector.broadcast %14 : f32 to vector<1x512xf32>
    %1424 = arith.mulf %1423, %1387 : vector<1x512xf32>
    %1425 = arith.addf %1422, %1424 : vector<1x512xf32>
    %1426 = math.tanh %1425 : vector<1x512xf32>
    %1427 = vector.broadcast %3 : f32 to vector<1x512xf32>
    %1428 = arith.mulf %1427, %1348 : vector<1x512xf32>
    %1429 = arith.addf %31, %1428 : vector<1x512xf32>
    %1430 = vector.broadcast %7 : f32 to vector<1x512xf32>
    %1431 = arith.mulf %1430, %1361 : vector<1x512xf32>
    %1432 = arith.addf %1429, %1431 : vector<1x512xf32>
    %1433 = vector.broadcast %11 : f32 to vector<1x512xf32>
    %1434 = arith.mulf %1433, %1374 : vector<1x512xf32>
    %1435 = arith.addf %1432, %1434 : vector<1x512xf32>
    %1436 = vector.broadcast %15 : f32 to vector<1x512xf32>
    %1437 = arith.mulf %1436, %1387 : vector<1x512xf32>
    %1438 = arith.addf %1435, %1437 : vector<1x512xf32>
    %1439 = math.tanh %1438 : vector<1x512xf32>
    %1440 = vector.broadcast %0 : f32 to vector<1x512xf32>
    %1441 = arith.mulf %1440, %1400 : vector<1x512xf32>
    %1442 = arith.addf %22, %1441 : vector<1x512xf32>
    %1443 = vector.broadcast %4 : f32 to vector<1x512xf32>
    %1444 = arith.mulf %1443, %1413 : vector<1x512xf32>
    %1445 = arith.addf %1442, %1444 : vector<1x512xf32>
    %1446 = vector.broadcast %8 : f32 to vector<1x512xf32>
    %1447 = arith.mulf %1446, %1426 : vector<1x512xf32>
    %1448 = arith.addf %1445, %1447 : vector<1x512xf32>
    %1449 = vector.broadcast %12 : f32 to vector<1x512xf32>
    %1450 = arith.mulf %1449, %1439 : vector<1x512xf32>
    %1451 = arith.addf %1448, %1450 : vector<1x512xf32>
    %1452 = math.tanh %1451 : vector<1x512xf32>
    %1453 = vector.broadcast %1 : f32 to vector<1x512xf32>
    %1454 = arith.mulf %1453, %1400 : vector<1x512xf32>
    %1455 = arith.addf %25, %1454 : vector<1x512xf32>
    %1456 = vector.broadcast %5 : f32 to vector<1x512xf32>
    %1457 = arith.mulf %1456, %1413 : vector<1x512xf32>
    %1458 = arith.addf %1455, %1457 : vector<1x512xf32>
    %1459 = vector.broadcast %9 : f32 to vector<1x512xf32>
    %1460 = arith.mulf %1459, %1426 : vector<1x512xf32>
    %1461 = arith.addf %1458, %1460 : vector<1x512xf32>
    %1462 = vector.broadcast %13 : f32 to vector<1x512xf32>
    %1463 = arith.mulf %1462, %1439 : vector<1x512xf32>
    %1464 = arith.addf %1461, %1463 : vector<1x512xf32>
    %1465 = math.tanh %1464 : vector<1x512xf32>
    %1466 = vector.broadcast %2 : f32 to vector<1x512xf32>
    %1467 = arith.mulf %1466, %1400 : vector<1x512xf32>
    %1468 = arith.addf %28, %1467 : vector<1x512xf32>
    %1469 = vector.broadcast %6 : f32 to vector<1x512xf32>
    %1470 = arith.mulf %1469, %1413 : vector<1x512xf32>
    %1471 = arith.addf %1468, %1470 : vector<1x512xf32>
    %1472 = vector.broadcast %10 : f32 to vector<1x512xf32>
    %1473 = arith.mulf %1472, %1426 : vector<1x512xf32>
    %1474 = arith.addf %1471, %1473 : vector<1x512xf32>
    %1475 = vector.broadcast %14 : f32 to vector<1x512xf32>
    %1476 = arith.mulf %1475, %1439 : vector<1x512xf32>
    %1477 = arith.addf %1474, %1476 : vector<1x512xf32>
    %1478 = math.tanh %1477 : vector<1x512xf32>
    %1479 = vector.broadcast %3 : f32 to vector<1x512xf32>
    %1480 = arith.mulf %1479, %1400 : vector<1x512xf32>
    %1481 = arith.addf %31, %1480 : vector<1x512xf32>
    %1482 = vector.broadcast %7 : f32 to vector<1x512xf32>
    %1483 = arith.mulf %1482, %1413 : vector<1x512xf32>
    %1484 = arith.addf %1481, %1483 : vector<1x512xf32>
    %1485 = vector.broadcast %11 : f32 to vector<1x512xf32>
    %1486 = arith.mulf %1485, %1426 : vector<1x512xf32>
    %1487 = arith.addf %1484, %1486 : vector<1x512xf32>
    %1488 = vector.broadcast %15 : f32 to vector<1x512xf32>
    %1489 = arith.mulf %1488, %1439 : vector<1x512xf32>
    %1490 = arith.addf %1487, %1489 : vector<1x512xf32>
    %1491 = math.tanh %1490 : vector<1x512xf32>
    %1492 = vector.broadcast %0 : f32 to vector<1x512xf32>
    %1493 = arith.mulf %1492, %1452 : vector<1x512xf32>
    %1494 = arith.addf %22, %1493 : vector<1x512xf32>
    %1495 = vector.broadcast %4 : f32 to vector<1x512xf32>
    %1496 = arith.mulf %1495, %1465 : vector<1x512xf32>
    %1497 = arith.addf %1494, %1496 : vector<1x512xf32>
    %1498 = vector.broadcast %8 : f32 to vector<1x512xf32>
    %1499 = arith.mulf %1498, %1478 : vector<1x512xf32>
    %1500 = arith.addf %1497, %1499 : vector<1x512xf32>
    %1501 = vector.broadcast %12 : f32 to vector<1x512xf32>
    %1502 = arith.mulf %1501, %1491 : vector<1x512xf32>
    %1503 = arith.addf %1500, %1502 : vector<1x512xf32>
    %1504 = math.tanh %1503 : vector<1x512xf32>
    %1505 = vector.broadcast %1 : f32 to vector<1x512xf32>
    %1506 = arith.mulf %1505, %1452 : vector<1x512xf32>
    %1507 = arith.addf %25, %1506 : vector<1x512xf32>
    %1508 = vector.broadcast %5 : f32 to vector<1x512xf32>
    %1509 = arith.mulf %1508, %1465 : vector<1x512xf32>
    %1510 = arith.addf %1507, %1509 : vector<1x512xf32>
    %1511 = vector.broadcast %9 : f32 to vector<1x512xf32>
    %1512 = arith.mulf %1511, %1478 : vector<1x512xf32>
    %1513 = arith.addf %1510, %1512 : vector<1x512xf32>
    %1514 = vector.broadcast %13 : f32 to vector<1x512xf32>
    %1515 = arith.mulf %1514, %1491 : vector<1x512xf32>
    %1516 = arith.addf %1513, %1515 : vector<1x512xf32>
    %1517 = math.tanh %1516 : vector<1x512xf32>
    %1518 = vector.broadcast %2 : f32 to vector<1x512xf32>
    %1519 = arith.mulf %1518, %1452 : vector<1x512xf32>
    %1520 = arith.addf %28, %1519 : vector<1x512xf32>
    %1521 = vector.broadcast %6 : f32 to vector<1x512xf32>
    %1522 = arith.mulf %1521, %1465 : vector<1x512xf32>
    %1523 = arith.addf %1520, %1522 : vector<1x512xf32>
    %1524 = vector.broadcast %10 : f32 to vector<1x512xf32>
    %1525 = arith.mulf %1524, %1478 : vector<1x512xf32>
    %1526 = arith.addf %1523, %1525 : vector<1x512xf32>
    %1527 = vector.broadcast %14 : f32 to vector<1x512xf32>
    %1528 = arith.mulf %1527, %1491 : vector<1x512xf32>
    %1529 = arith.addf %1526, %1528 : vector<1x512xf32>
    %1530 = math.tanh %1529 : vector<1x512xf32>
    %1531 = vector.broadcast %3 : f32 to vector<1x512xf32>
    %1532 = arith.mulf %1531, %1452 : vector<1x512xf32>
    %1533 = arith.addf %31, %1532 : vector<1x512xf32>
    %1534 = vector.broadcast %7 : f32 to vector<1x512xf32>
    %1535 = arith.mulf %1534, %1465 : vector<1x512xf32>
    %1536 = arith.addf %1533, %1535 : vector<1x512xf32>
    %1537 = vector.broadcast %11 : f32 to vector<1x512xf32>
    %1538 = arith.mulf %1537, %1478 : vector<1x512xf32>
    %1539 = arith.addf %1536, %1538 : vector<1x512xf32>
    %1540 = vector.broadcast %15 : f32 to vector<1x512xf32>
    %1541 = arith.mulf %1540, %1491 : vector<1x512xf32>
    %1542 = arith.addf %1539, %1541 : vector<1x512xf32>
    %1543 = math.tanh %1542 : vector<1x512xf32>
    %1544 = arith.subf %1504, %1452 : vector<1x512xf32>
    %1545 = arith.mulf %1544, %1544 : vector<1x512xf32>
    %1546 = vector.shape_cast %1545 : vector<1x512xf32> to vector<1x1x512xf32>
    %cst = arith.constant dense<0.000000e+00> : vector<1xf32>
    %1547 = vector.multi_reduction <add>, %1546, %cst [1, 2] : vector<1x1x512xf32> to vector<1xf32>
    %1548 = vector.shape_cast %1547 : vector<1xf32> to vector<1x1x1xf32>
    %1549 = vector.extract %1548[0, 0, 0] : f32 from vector<1x1x1xf32>
    %cst_44 = arith.constant 0.000000e+00 : f32
    %1550 = arith.addf %cst_44, %1549 : f32
    %1551 = arith.mulf %1504, %1504 : vector<1x512xf32>
    %1552 = vector.shape_cast %1551 : vector<1x512xf32> to vector<1x1x512xf32>
    %cst_45 = arith.constant dense<0.000000e+00> : vector<1xf32>
    %1553 = vector.multi_reduction <add>, %1552, %cst_45 [1, 2] : vector<1x1x512xf32> to vector<1xf32>
    %1554 = vector.shape_cast %1553 : vector<1xf32> to vector<1x1x1xf32>
    %1555 = vector.extract %1554[0, 0, 0] : f32 from vector<1x1x1xf32>
    %cst_46 = arith.constant 0.000000e+00 : f32
    %1556 = arith.addf %cst_46, %1555 : f32
    %1557 = arith.subf %1517, %1465 : vector<1x512xf32>
    %1558 = arith.mulf %1557, %1557 : vector<1x512xf32>
    %1559 = vector.shape_cast %1558 : vector<1x512xf32> to vector<1x1x512xf32>
    %cst_47 = arith.constant dense<0.000000e+00> : vector<1xf32>
    %1560 = vector.multi_reduction <add>, %1559, %cst_47 [1, 2] : vector<1x1x512xf32> to vector<1xf32>
    %1561 = vector.shape_cast %1560 : vector<1xf32> to vector<1x1x1xf32>
    %1562 = vector.extract %1561[0, 0, 0] : f32 from vector<1x1x1xf32>
    %1563 = arith.addf %1550, %1562 : f32
    %1564 = arith.mulf %1517, %1517 : vector<1x512xf32>
    %1565 = vector.shape_cast %1564 : vector<1x512xf32> to vector<1x1x512xf32>
    %cst_48 = arith.constant dense<0.000000e+00> : vector<1xf32>
    %1566 = vector.multi_reduction <add>, %1565, %cst_48 [1, 2] : vector<1x1x512xf32> to vector<1xf32>
    %1567 = vector.shape_cast %1566 : vector<1xf32> to vector<1x1x1xf32>
    %1568 = vector.extract %1567[0, 0, 0] : f32 from vector<1x1x1xf32>
    %1569 = arith.addf %1556, %1568 : f32
    %1570 = arith.subf %1530, %1478 : vector<1x512xf32>
    %1571 = arith.mulf %1570, %1570 : vector<1x512xf32>
    %1572 = vector.shape_cast %1571 : vector<1x512xf32> to vector<1x1x512xf32>
    %cst_49 = arith.constant dense<0.000000e+00> : vector<1xf32>
    %1573 = vector.multi_reduction <add>, %1572, %cst_49 [1, 2] : vector<1x1x512xf32> to vector<1xf32>
    %1574 = vector.shape_cast %1573 : vector<1xf32> to vector<1x1x1xf32>
    %1575 = vector.extract %1574[0, 0, 0] : f32 from vector<1x1x1xf32>
    %1576 = arith.addf %1563, %1575 : f32
    %1577 = arith.mulf %1530, %1530 : vector<1x512xf32>
    %1578 = vector.shape_cast %1577 : vector<1x512xf32> to vector<1x1x512xf32>
    %cst_50 = arith.constant dense<0.000000e+00> : vector<1xf32>
    %1579 = vector.multi_reduction <add>, %1578, %cst_50 [1, 2] : vector<1x1x512xf32> to vector<1xf32>
    %1580 = vector.shape_cast %1579 : vector<1xf32> to vector<1x1x1xf32>
    %1581 = vector.extract %1580[0, 0, 0] : f32 from vector<1x1x1xf32>
    %1582 = arith.addf %1569, %1581 : f32
    %1583 = arith.subf %1543, %1491 : vector<1x512xf32>
    %1584 = arith.mulf %1583, %1583 : vector<1x512xf32>
    %1585 = vector.shape_cast %1584 : vector<1x512xf32> to vector<1x1x512xf32>
    %cst_51 = arith.constant dense<0.000000e+00> : vector<1xf32>
    %1586 = vector.multi_reduction <add>, %1585, %cst_51 [1, 2] : vector<1x1x512xf32> to vector<1xf32>
    %1587 = vector.shape_cast %1586 : vector<1xf32> to vector<1x1x1xf32>
    %1588 = vector.extract %1587[0, 0, 0] : f32 from vector<1x1x1xf32>
    %1589 = arith.addf %1576, %1588 : f32
    %1590 = arith.mulf %1543, %1543 : vector<1x512xf32>
    %1591 = vector.shape_cast %1590 : vector<1x512xf32> to vector<1x1x512xf32>
    %cst_52 = arith.constant dense<0.000000e+00> : vector<1xf32>
    %1592 = vector.multi_reduction <add>, %1591, %cst_52 [1, 2] : vector<1x1x512xf32> to vector<1xf32>
    %1593 = vector.shape_cast %1592 : vector<1xf32> to vector<1x1x1xf32>
    %1594 = vector.extract %1593[0, 0, 0] : f32 from vector<1x1x1xf32>
    %1595 = arith.addf %1582, %1594 : f32
    %1596 = vector.broadcast %0 : f32 to vector<1x512xf32>
    %1597 = arith.mulf %1596, %1504 : vector<1x512xf32>
    %1598 = arith.addf %22, %1597 : vector<1x512xf32>
    %1599 = vector.broadcast %4 : f32 to vector<1x512xf32>
    %1600 = arith.mulf %1599, %1517 : vector<1x512xf32>
    %1601 = arith.addf %1598, %1600 : vector<1x512xf32>
    %1602 = vector.broadcast %8 : f32 to vector<1x512xf32>
    %1603 = arith.mulf %1602, %1530 : vector<1x512xf32>
    %1604 = arith.addf %1601, %1603 : vector<1x512xf32>
    %1605 = vector.broadcast %12 : f32 to vector<1x512xf32>
    %1606 = arith.mulf %1605, %1543 : vector<1x512xf32>
    %1607 = arith.addf %1604, %1606 : vector<1x512xf32>
    %1608 = math.tanh %1607 : vector<1x512xf32>
    %1609 = vector.broadcast %1 : f32 to vector<1x512xf32>
    %1610 = arith.mulf %1609, %1504 : vector<1x512xf32>
    %1611 = arith.addf %25, %1610 : vector<1x512xf32>
    %1612 = vector.broadcast %5 : f32 to vector<1x512xf32>
    %1613 = arith.mulf %1612, %1517 : vector<1x512xf32>
    %1614 = arith.addf %1611, %1613 : vector<1x512xf32>
    %1615 = vector.broadcast %9 : f32 to vector<1x512xf32>
    %1616 = arith.mulf %1615, %1530 : vector<1x512xf32>
    %1617 = arith.addf %1614, %1616 : vector<1x512xf32>
    %1618 = vector.broadcast %13 : f32 to vector<1x512xf32>
    %1619 = arith.mulf %1618, %1543 : vector<1x512xf32>
    %1620 = arith.addf %1617, %1619 : vector<1x512xf32>
    %1621 = math.tanh %1620 : vector<1x512xf32>
    %1622 = vector.broadcast %2 : f32 to vector<1x512xf32>
    %1623 = arith.mulf %1622, %1504 : vector<1x512xf32>
    %1624 = arith.addf %28, %1623 : vector<1x512xf32>
    %1625 = vector.broadcast %6 : f32 to vector<1x512xf32>
    %1626 = arith.mulf %1625, %1517 : vector<1x512xf32>
    %1627 = arith.addf %1624, %1626 : vector<1x512xf32>
    %1628 = vector.broadcast %10 : f32 to vector<1x512xf32>
    %1629 = arith.mulf %1628, %1530 : vector<1x512xf32>
    %1630 = arith.addf %1627, %1629 : vector<1x512xf32>
    %1631 = vector.broadcast %14 : f32 to vector<1x512xf32>
    %1632 = arith.mulf %1631, %1543 : vector<1x512xf32>
    %1633 = arith.addf %1630, %1632 : vector<1x512xf32>
    %1634 = math.tanh %1633 : vector<1x512xf32>
    %1635 = vector.broadcast %3 : f32 to vector<1x512xf32>
    %1636 = arith.mulf %1635, %1504 : vector<1x512xf32>
    %1637 = arith.addf %31, %1636 : vector<1x512xf32>
    %1638 = vector.broadcast %7 : f32 to vector<1x512xf32>
    %1639 = arith.mulf %1638, %1517 : vector<1x512xf32>
    %1640 = arith.addf %1637, %1639 : vector<1x512xf32>
    %1641 = vector.broadcast %11 : f32 to vector<1x512xf32>
    %1642 = arith.mulf %1641, %1530 : vector<1x512xf32>
    %1643 = arith.addf %1640, %1642 : vector<1x512xf32>
    %1644 = vector.broadcast %15 : f32 to vector<1x512xf32>
    %1645 = arith.mulf %1644, %1543 : vector<1x512xf32>
    %1646 = arith.addf %1643, %1645 : vector<1x512xf32>
    %1647 = math.tanh %1646 : vector<1x512xf32>
    %c0_53 = arith.constant 0 : index
    %c0_54 = arith.constant 0 : index
    %1648 = vector.load %arg4[%c0_53, %c0_54] : memref<4x512xf32, #tpu.memory_space<vmem>>, vector<1x512xf32>
    tpu.vector_store %arg4[%c0_53, %c0_54], %1608 {strides = array<i32>} : memref<4x512xf32, #tpu.memory_space<vmem>>, vector<1x512xf32>,
    %c1_55 = arith.constant 1 : index
    %c0_56 = arith.constant 0 : index
    %1649 = vector.load %arg4[%c1_55, %c0_56] : memref<4x512xf32, #tpu.memory_space<vmem>>, vector<1x512xf32>
    tpu.vector_store %arg4[%c1_55, %c0_56], %1621 {strides = array<i32>} : memref<4x512xf32, #tpu.memory_space<vmem>>, vector<1x512xf32>,
    %c2_57 = arith.constant 2 : index
    %c0_58 = arith.constant 0 : index
    %1650 = vector.load %arg4[%c2_57, %c0_58] : memref<4x512xf32, #tpu.memory_space<vmem>>, vector<1x512xf32>
    tpu.vector_store %arg4[%c2_57, %c0_58], %1634 {strides = array<i32>} : memref<4x512xf32, #tpu.memory_space<vmem>>, vector<1x512xf32>,
    %c3_59 = arith.constant 3 : index
    %c0_60 = arith.constant 0 : index
    %1651 = vector.load %arg4[%c3_59, %c0_60] : memref<4x512xf32, #tpu.memory_space<vmem>>, vector<1x512xf32>
    tpu.vector_store %arg4[%c3_59, %c0_60], %1647 {strides = array<i32>} : memref<4x512xf32, #tpu.memory_space<vmem>>, vector<1x512xf32>,
    %1652 = tpu.iota {dimensions = array<i32: 1>} : vector<1x2x128xi32>
    %c0_i32 = arith.constant 0 : i32
    %1653 = vector.broadcast %c0_i32 : i32 to vector<1x2x128xi32>
    %1654 = arith.cmpi eq, %1652, %1653 : vector<1x2x128xi32>
    %1655 = vector.broadcast %1589 : f32 to vector<1x2x128xf32>
    %1656 = vector.broadcast %1595 : f32 to vector<1x2x128xf32>
    %1657 = arith.select %1654, %1655, %1656 : vector<1x2x128xi1>, vector<1x2x128xf32>
    %c0_61 = arith.constant 0 : index
    %c0_62 = arith.constant 0 : index
    %c0_63 = arith.constant 0 : index
    %1658 = vector.load %arg5[%c0_61, %c0_62, %c0_63] : memref<1x2x128xf32, #tpu.memory_space<vmem>>, vector<1x2x128xf32>
    tpu.vector_store %arg5[%c0_61, %c0_62, %c0_63], %1657 {strides = array<i32>} : memref<1x2x128xf32, #tpu.memory_space<vmem>>, vector<1x2x128xf32>,
    return
  }
  func.func @transform_0(%arg0: i32) -> (i32, i32) {
    %c0_i32 = arith.constant 0 : i32
    %c0_i32_0 = arith.constant 0 : i32
    return %c0_i32, %arg0 : i32, i32
  }
  func.func @transform_1(%arg0: i32) -> (i32, i32) {
    %c0_i32 = arith.constant 0 : i32
    %c0_i32_0 = arith.constant 0 : i32
    %c0_i32_1 = arith.constant 0 : i32
    return %c0_i32, %c0_i32_0 : i32, i32
  }
  func.func @transform_2(%arg0: i32) -> (i32, i32) {
    %c0_i32 = arith.constant 0 : i32
    %c0_i32_0 = arith.constant 0 : i32
    %c0_i32_1 = arith.constant 0 : i32
    return %c0_i32, %c0_i32_0 : i32, i32
  }
  func.func @transform_3(%arg0: i32) -> (i32, i32) {
    %c0_i32 = arith.constant 0 : i32
    %c0_i32_0 = arith.constant 0 : i32
    return %c0_i32, %arg0 : i32, i32
  }
  func.func @transform_4(%arg0: i32) -> (i32, i32, i32) {
    %c0_i32 = arith.constant 0 : i32
    %c0_i32_0 = arith.constant 0 : i32
    %c0_i32_1 = arith.constant 0 : i32
    return %arg0, %c0_i32, %c0_i32_0 : i32, i32, i32
  }
}

</mosaic_0001>

<llo_original>
// kernel: tpu_custom_call.1
$region0: #{tpu_custom_call.1}
  #allocation0 [shape = 'u32[]', space=smem, size = 0x4, offset = 0x4, fixed_abs, tag = 'smem constant byte address 0x4 - core index']
  #allocation1 [shape = 'u32[144,128]{1,0:T(1,128)}', space=vmem, size = 0x12000, scoped, tag = 'internal scratch']
  %s0 = inlined_call_operand.hbm [shape: f32[4,512], index: 0, kind: input, shape index: {}]
  %s1 = inlined_call_operand.hbm [shape: f32[4,4], index: 1, kind: input, shape index: {}]
  %s2 = inlined_call_operand.vmem [shape: f32[1,4], index: 2, kind: input, shape index: {}]
  %s3 = inlined_call_operand.hbm [shape: f32[4,512], index: 3, kind: output, shape index: {0}]
  %s4 = inlined_call_operand.hbm [shape: f32[1,2,128], index: 4, kind: output, shape index: {1}]
  %5 = xla_tuple %s3, %s4
  %s6 = sld [smem:[#allocation0]]
  $region42: #{tpu_custom_call.1} parent=0
    _
  %s8 = ssub.s32 1, %s6
  %s9 = scalar_select 0, %s8, %s6
  $region1: #{tpu_custom_call.1} parent=0
    #allocation2 [shape = 'u8[8192]{0}', space=vmem, size = 0x2000, scoped, tag = 'input window, operand 0, single buffered']
    #allocation3 [shape = 's32[1]{0}', space=sflag, size = 0x4, scoped, tag = 'scoped memory for tpu_custom_call.1']
    #allocation4 [shape = 's32[1]{0}', space=sflag, size = 0x4, scoped, tag = 'scoped memory for tpu_custom_call.1']
    #allocation5 [shape = 's32[1]{0}', space=sflag, size = 0x4, scoped, tag = 'scoped memory for tpu_custom_call.1']
    #allocation6 [shape = 's32[1]{0}', space=sflag, size = 0x4, scoped, tag = 'scoped memory for tpu_custom_call.1']
    #allocation7 [shape = 'u8[2048]{0}', space=smem, size = 0x800, scoped, tag = 'input window, operand 1, single buffered']
    #allocation8 [shape = 'u8[512]{0}', space=smem, size = 0x200, scoped, tag = 'input window, operand 2, single buffered']
    #allocation9 [shape = 'u8[8192]{0}', space=vmem, size = 0x2000, scoped, tag = 'output window, operand 0, single buffered']
    #allocation10 [shape = 'u8[1024]{0}', space=vmem, size = 0x400, scoped, tag = 'output window, operand 1, single buffered']
    #allocation11 [shape = 's32[1]{0}', space=sflag, size = 0x4, scoped, tag = 'scoped memory for tpu_custom_call.1']
    %10 = vsyncpa [#allocation3], 0
    %11 = vsyncpa [#allocation5], 0
    %12 = vsyncpa [#allocation6], 0
    %13 = vsyncpa [#allocation4], 0
    %14 = vsyncpa [#allocation11], 0
    // Predicated region
    $region2: #{tpu_custom_call.1} parent=1 // pred_check
      _
    $region3: #{tpu_custom_call.1} parent=1 // pred_check_branch
      %16 = sbr.rel (0) target = $region5
    $region4: #{tpu_custom_call.1} parent=1 // pred_region
      %s18 = ssub.s32 256, 256
      %19 = vsyncadd [#allocation3], %s18
      %s21 = sshll.u32 [#allocation2], 4
      %s22 = int_to_ptr.vmem [resolvable:$true] %s21
      %24 = dma.hbm_to_vmem [thread:$0]  %s0, 256, %s22, [#allocation3]
    $region5: #{tpu_custom_call.1} parent=1 // pred_fallthru
      _
    // Predicated region
    $region6: #{tpu_custom_call.1} parent=1 // pred_check
      _
    $region7: #{tpu_custom_call.1} parent=1 // pred_check_branch
      %26 = sbr.rel (0) target = $region9
    $region8: #{tpu_custom_call.1} parent=1 // pred_region
      %s28 = ssub.s32 64, 64
      %29 = vsyncadd [#allocation5], %s28
      %32 = dma.hbm_to_smem %s1, 64, [#allocation7], [#allocation5]
    $region9: #{tpu_custom_call.1} parent=1 // pred_fallthru
      _
    // Predicated region
    $region10: #{tpu_custom_call.1} parent=1 // pred_check
      _
    $region11: #{tpu_custom_call.1} parent=1 // pred_check_branch
      %34 = sbr.rel (0) target = $region13
    $region12: #{tpu_custom_call.1} parent=1 // pred_region
      %s36 = ssub.s32 16, 16
      %37 = vsyncadd [#allocation6], %s36
      %s39 = sshll.u32 %s2, 4
      %s40 = int_to_ptr.vmem [resolvable:$true] %s39
      %42 = dma.vmem_to_smem %s40, 16, [#allocation8], [#allocation6]
    $region13: #{tpu_custom_call.1} parent=1 // pred_fallthru
      _
    // Predicated region
    $region14: #{tpu_custom_call.1} parent=1 // pred_check
      _
    $region15: #{tpu_custom_call.1} parent=1 // pred_check_branch
      %44 = sbr.rel (0) target = $region17
    $region16: #{tpu_custom_call.1} parent=1 // pred_region
      %45 = dma.done [#allocation3], 256
    $region17: #{tpu_custom_call.1} parent=1 // pred_fallthru
      _
    // Predicated region
    $region18: #{tpu_custom_call.1} parent=1 // pred_check
      _
    $region19: #{tpu_custom_call.1} parent=1 // pred_check_branch
      %47 = sbr.rel (0) target = $region21
    $region20: #{tpu_custom_call.1} parent=1 // pred_region
      %48 = dma.done [#allocation5], 64
    $region21: #{tpu_custom_call.1} parent=1 // pred_fallthru
      _
    // Predicated region
    $region22: #{tpu_custom_call.1} parent=1 // pred_check
      _
    $region23: #{tpu_custom_call.1} parent=1 // pred_check_branch
      %50 = sbr.rel (0) target = $region25
    $region24: #{tpu_custom_call.1} parent=1 // pred_region
      %51 = dma.done [#allocation6], 16
    $region25: #{tpu_custom_call.1} parent=1 // pred_fallthru
      _
    %52 = sfence
    %s53 = sld [smem:[#allocation7]]
    %s54 = sld [smem:[#allocation7 + $0x1]]
    %s55 = sld [smem:[#allocation7 + $0x2]]
    %s56 = sld [smem:[#allocation7 + $0x3]]
    %s57 = sld [smem:[#allocation7 + $0x80]]
    %s58 = sld [smem:[#allocation7 + $0x81]]
    %s59 = sld [smem:[#allocation7 + $0x82]]
    %s60 = sld [smem:[#allocation7 + $0x83]]
    %s61 = sld [smem:[#allocation7 + $0x100]]
    %s62 = sld [smem:[#allocation7 + $0x101]]
    %s63 = sld [smem:[#allocation7 + $0x102]]
    %s64 = sld [smem:[#allocation7 + $0x103]]
    %s65 = sld [smem:[#allocation7 + $0x180]]
    %s66 = sld [smem:[#allocation7 + $0x181]]
    %s67 = sld [smem:[#allocation7 + $0x182]]
    %s68 = sld [smem:[#allocation7 + $0x183]]
    %s69 = sld [smem:[#allocation8]]
    %s70 = sld [smem:[#allocation8 + $0x1]]
    %s71 = sld [smem:[#allocation8 + $0x2]]
    %s72 = sld [smem:[#allocation8 + $0x3]]
    %v73 = vld [vmem:[#allocation2] ss:$4 sm:$0xf]
    %v74 = vstv %s69
    %v75 = vadd.f32 %v73, %v74
    %s76 = scalar_lea.vmem [#allocation2], 1
    %v77 = vld [vmem:[%s76] ss:$4 sm:$0xf]
    %v78 = vstv %s70
    %v79 = vadd.f32 %v77, %v78
    %s80 = scalar_lea.vmem [#allocation2], 2
    %v81 = vld [vmem:[%s80] ss:$4 sm:$0xf]
    %v82 = vstv %s71
    %v83 = vadd.f32 %v81, %v82
    %s84 = scalar_lea.vmem [#allocation2], 3
    %v85 = vld [vmem:[%s84] ss:$4 sm:$0xf]
    %v86 = vstv %s72
    %v87 = vadd.f32 %v85, %v86
    %v88 = vtanh.pop %v75
    %v89 = vtanh.pop %v79
    %v90 = vtanh.pop %v83
    %v91 = vtanh.pop %v87
    %v92 = vstv %s53
    %v93 = vmul.f32 %v92, %v88
    %v94 = vadd.f32 %v75, %v93
    %v95 = vstv %s57
    %v96 = vmul.f32 %v95, %v89
    %v97 = vadd.f32 %v94, %v96
    %v98 = vstv %s61
    %v99 = vmul.f32 %v98, %v90
    %v100 = vadd.f32 %v97, %v99
    %v101 = vstv %s65
    %v102 = vmul.f32 %v101, %v91
    %v103 = vadd.f32 %v100, %v102
    %v104 = vtanh.pop %v103
    %v105 = vstv %s54
    %v106 = vmul.f32 %v105, %v88
    %v107 = vadd.f32 %v79, %v106
    %v108 = vstv %s58
    %v109 = vmul.f32 %v108, %v89
    %v110 = vadd.f32 %v107, %v109
    %v111 = vstv %s62
    %v112 = vmul.f32 %v111, %v90
    %v113 = vadd.f32 %v110, %v112
    %v114 = vstv %s66
    %v115 = vmul.f32 %v114, %v91
    %v116 = vadd.f32 %v113, %v115
    %v117 = vtanh.pop %v116
    %v118 = vstv %s55
    %v119 = vmul.f32 %v118, %v88
    %v120 = vadd.f32 %v83, %v119
    %v121 = vstv %s59
    %v122 = vmul.f32 %v121, %v89
    %v123 = vadd.f32 %v120, %v122
    %v124 = vstv %s63
    %v125 = vmul.f32 %v124, %v90
    %v126 = vadd.f32 %v123, %v125
    %v127 = vstv %s67
    %v128 = vmul.f32 %v127, %v91
    %v129 = vadd.f32 %v126, %v128
    %v130 = vtanh.pop %v129
    %v131 = vstv %s56
    %v132 = vmul.f32 %v131, %v88
    %v133 = vadd.f32 %v87, %v132
    %v134 = vstv %s60
    %v135 = vmul.f32 %v134, %v89
    %v136 = vadd.f32 %v133, %v135
    %v137 = vstv %s64
    %v138 = vmul.f32 %v137, %v90
    %v139 = vadd.f32 %v136, %v138
    %v140 = vstv %s68
    %v141 = vmul.f32 %v140, %v91
    %v142 = vadd.f32 %v139, %v141
    %v143 = vtanh.pop %v142
    %v144 = vmul.f32 %v92, %v104
    %v145 = vadd.f32 %v75, %v144
    %v146 = vmul.f32 %v95, %v117
    %v147 = vadd.f32 %v145, %v146
    %v148 = vmul.f32 %v98, %v130
    %v149 = vadd.f32 %v147, %v148
    %v150 = vmul.f32 %v101, %v143
    %v151 = vadd.f32 %v149, %v150
    %v152 = vtanh.pop %v151
    %v153 = vmul.f32 %v105, %v104
    %v154 = vadd.f32 %v79, %v153
    %v155 = vmul.f32 %v108, %v117
    %v156 = vadd.f32 %v154, %v155
    %v157 = vmul.f32 %v111, %v130
    %v158 = vadd.f32 %v156, %v157
    %v159 = vmul.f32 %v114, %v143
    %v160 = vadd.f32 %v158, %v159
    %v161 = vtanh.pop %v160
    %v162 = vmul.f32 %v118, %v104
    %v163 = vadd.f32 %v83, %v162
    %v164 = vmul.f32 %v121, %v117
    %v165 = vadd.f32 %v163, %v164
    %v166 = vmul.f32 %v124, %v130
    %v167 = vadd.f32 %v165, %v166
    %v168 = vmul.f32 %v127, %v143
    %v169 = vadd.f32 %v167, %v168
    %v170 = vtanh.pop %v169
    %v171 = vmul.f32 %v131, %v104
    %v172 = vadd.f32 %v87, %v171
    %v173 = vmul.f32 %v134, %v117
    %v174 = vadd.f32 %v172, %v173
    %v175 = vmul.f32 %v137, %v130
    %v176 = vadd.f32 %v174, %v175
    %v177 = vmul.f32 %v140, %v143
    %v178 = vadd.f32 %v176, %v177
    %v179 = vtanh.pop %v178
    %v180 = vmul.f32 %v92, %v152
    %v181 = vadd.f32 %v75, %v180
    %v182 = vmul.f32 %v95, %v161
    %v183 = vadd.f32 %v181, %v182
    %v184 = vmul.f32 %v98, %v170
    %v185 = vadd.f32 %v183, %v184
    %v186 = vmul.f32 %v101, %v179
    %v187 = vadd.f32 %v185, %v186
    %v188 = vtanh.pop %v187
    %v189 = vmul.f32 %v105, %v152
    %v190 = vadd.f32 %v79, %v189
    %v191 = vmul.f32 %v108, %v161
    %v192 = vadd.f32 %v190, %v191
    %v193 = vmul.f32 %v111, %v170
    %v194 = vadd.f32 %v192, %v193
    %v195 = vmul.f32 %v114, %v179
    %v196 = vadd.f32 %v194, %v195
    %v197 = vtanh.pop %v196
    %v198 = vmul.f32 %v118, %v152
    %v199 = vadd.f32 %v83, %v198
    %v200 = vmul.f32 %v121, %v161
    %v201 = vadd.f32 %v199, %v200
    %v202 = vmul.f32 %v124, %v170
    %v203 = vadd.f32 %v201, %v202
    %v204 = vmul.f32 %v127, %v179
    %v205 = vadd.f32 %v203, %v204
    %v206 = vtanh.pop %v205
    %v207 = vmul.f32 %v131, %v152
    %v208 = vadd.f32 %v87, %v207
    %v209 = vmul.f32 %v134, %v161
    %v210 = vadd.f32 %v208, %v209
    %v211 = vmul.f32 %v137, %v170
    %v212 = vadd.f32 %v210, %v211
    %v213 = vmul.f32 %v140, %v179
    %v214 = vadd.f32 %v212, %v213
    %v215 = vtanh.pop %v214
    %v216 = vmul.f32 %v92, %v188
    %v217 = vadd.f32 %v75, %v216
    %v218 = vmul.f32 %v95, %v197
    %v219 = vadd.f32 %v217, %v218
    %v220 = vmul.f32 %v98, %v206
    %v221 = vadd.f32 %v219, %v220
    %v222 = vmul.f32 %v101, %v215
    %v223 = vadd.f32 %v221, %v222
    %v224 = vtanh.pop %v223
    %v225 = vmul.f32 %v105, %v188
    %v226 = vadd.f32 %v79, %v225
    %v227 = vmul.f32 %v108, %v197
    %v228 = vadd.f32 %v226, %v227
    %v229 = vmul.f32 %v111, %v206
    %v230 = vadd.f32 %v228, %v229
    %v231 = vmul.f32 %v114, %v215
    %v232 = vadd.f32 %v230, %v231
    %v233 = vtanh.pop %v232
    %v234 = vmul.f32 %v118, %v188
    %v235 = vadd.f32 %v83, %v234
    %v236 = vmul.f32 %v121, %v197
    %v237 = vadd.f32 %v235, %v236
    %v238 = vmul.f32 %v124, %v206
    %v239 = vadd.f32 %v237, %v238
    %v240 = vmul.f32 %v127, %v215
    %v241 = vadd.f32 %v239, %v240
    %v242 = vtanh.pop %v241
    %v243 = vmul.f32 %v131, %v188
    %v244 = vadd.f32 %v87, %v243
    %v245 = vmul.f32 %v134, %v197
    %v246 = vadd.f32 %v244, %v245
    %v247 = vmul.f32 %v137, %v206
    %v248 = vadd.f32 %v246, %v247
    %v249 = vmul.f32 %v140, %v215
    %v250 = vadd.f32 %v248, %v249
    %v251 = vtanh.pop %v250
    %v252 = vmul.f32 %v92, %v224
    %v253 = vadd.f32 %v75, %v252
    %v254 = vmul.f32 %v95, %v233
    %v255 = vadd.f32 %v253, %v254
    %v256 = vmul.f32 %v98, %v242
    %v257 = vadd.f32 %v255, %v256
    %v258 = vmul.f32 %v101, %v251
    %v259 = vadd.f32 %v257, %v258
    %v260 = vtanh.pop %v259
    %v261 = vmul.f32 %v105, %v224
    %v262 = vadd.f32 %v79, %v261
    %v263 = vmul.f32 %v108, %v233
    %v264 = vadd.f32 %v262, %v263
    %v265 = vmul.f32 %v111, %v242
    %v266 = vadd.f32 %v264, %v265
    %v267 = vmul.f32 %v114, %v251
    %v268 = vadd.f32 %v266, %v267
    %v269 = vtanh.pop %v268
    %v270 = vmul.f32 %v118, %v224
    %v271 = vadd.f32 %v83, %v270
    %v272 = vmul.f32 %v121, %v233
    %v273 = vadd.f32 %v271, %v272
    %v274 = vmul.f32 %v124, %v242
    %v275 = vadd.f32 %v273, %v274
    %v276 = vmul.f32 %v127, %v251
    %v277 = vadd.f32 %v275, %v276
    %v278 = vtanh.pop %v277
    %v279 = vmul.f32 %v131, %v224
    %v280 = vadd.f32 %v87, %v279
    %v281 = vmul.f32 %v134, %v233
    %v282 = vadd.f32 %v280, %v281
    %v283 = vmul.f32 %v137, %v242
    %v284 = vadd.f32 %v282, %v283
    %v285 = vmul.f32 %v140, %v251
    %v286 = vadd.f32 %v284, %v285
    %v287 = vtanh.pop %v286
    %v288 = vmul.f32 %v92, %v260
    %v289 = vadd.f32 %v75, %v288
    %v290 = vmul.f32 %v95, %v269
    %v291 = vadd.f32 %v289, %v290
    %v292 = vmul.f32 %v98, %v278
    %v293 = vadd.f32 %v291, %v292
    %v294 = vmul.f32 %v101, %v287
    %v295 = vadd.f32 %v293, %v294
    %v296 = vtanh.pop %v295
    %v297 = vmul.f32 %v105, %v260
    %v298 = vadd.f32 %v79, %v297
    %v299 = vmul.f32 %v108, %v269
    %v300 = vadd.f32 %v298, %v299
    %v301 = vmul.f32 %v111, %v278
    %v302 = vadd.f32 %v300, %v301
    %v303 = vmul.f32 %v114, %v287
    %v304 = vadd.f32 %v302, %v303
    %v305 = vtanh.pop %v304
    %v306 = vmul.f32 %v118, %v260
    %v307 = vadd.f32 %v83, %v306
    %v308 = vmul.f32 %v121, %v269
    %v309 = vadd.f32 %v307, %v308
    %v310 = vmul.f32 %v124, %v278
    %v311 = vadd.f32 %v309, %v310
    %v312 = vmul.f32 %v127, %v287
    %v313 = vadd.f32 %v311, %v312
    %v314 = vtanh.pop %v313
    %v315 = vmul.f32 %v131, %v260
    %v316 = vadd.f32 %v87, %v315
    %v317 = vmul.f32 %v134, %v269
    %v318 = vadd.f32 %v316, %v317
    %v319 = vmul.f32 %v137, %v278
    %v320 = vadd.f32 %v318, %v319
    %v321 = vmul.f32 %v140, %v287
    %v322 = vadd.f32 %v320, %v321
    %v323 = vtanh.pop %v322
    %v324 = vmul.f32 %v92, %v296
    %v325 = vadd.f32 %v75, %v324
    %v326 = vmul.f32 %v95, %v305
    %v327 = vadd.f32 %v325, %v326
    %v328 = vmul.f32 %v98, %v314
    %v329 = vadd.f32 %v327, %v328
    %v330 = vmul.f32 %v101, %v323
    %v331 = vadd.f32 %v329, %v330
    %v332 = vtanh.pop %v331
    %v333 = vmul.f32 %v105, %v296
    %v334 = vadd.f32 %v79, %v333
    %v335 = vmul.f32 %v108, %v305
    %v336 = vadd.f32 %v334, %v335
    %v337 = vmul.f32 %v111, %v314
    %v338 = vadd.f32 %v336, %v337
    %v339 = vmul.f32 %v114, %v323
    %v340 = vadd.f32 %v338, %v339
    %v341 = vtanh.pop %v340
    %v342 = vmul.f32 %v118, %v296
    %v343 = vadd.f32 %v83, %v342
    %v344 = vmul.f32 %v121, %v305
    %v345 = vadd.f32 %v343, %v344
    %v346 = vmul.f32 %v124, %v314
    %v347 = vadd.f32 %v345, %v346
    %v348 = vmul.f32 %v127, %v323
    %v349 = vadd.f32 %v347, %v348
    %v350 = vtanh.pop %v349
    %v351 = vmul.f32 %v131, %v296
    %v352 = vadd.f32 %v87, %v351
    %v353 = vmul.f32 %v134, %v305
    %v354 = vadd.f32 %v352, %v353
    %v355 = vmul.f32 %v137, %v314
    %v356 = vadd.f32 %v354, %v355
    %v357 = vmul.f32 %v140, %v323
    %v358 = vadd.f32 %v356, %v357
    %v359 = vtanh.pop %v358
    %v360 = vmul.f32 %v92, %v332
    %v361 = vadd.f32 %v75, %v360
    %v362 = vmul.f32 %v95, %v341
    %v363 = vadd.f32 %v361, %v362
    %v364 = vmul.f32 %v98, %v350
    %v365 = vadd.f32 %v363, %v364
    %v366 = vmul.f32 %v101, %v359
    %v367 = vadd.f32 %v365, %v366
    %v368 = vtanh.pop %v367
    %v369 = vmul.f32 %v105, %v332
    %v370 = vadd.f32 %v79, %v369
    %v371 = vmul.f32 %v108, %v341
    %v372 = vadd.f32 %v370, %v371
    %v373 = vmul.f32 %v111, %v350
    %v374 = vadd.f32 %v372, %v373
    %v375 = vmul.f32 %v114, %v359
    %v376 = vadd.f32 %v374, %v375
    %v377 = vtanh.pop %v376
    %v378 = vmul.f32 %v118, %v332
    %v379 = vadd.f32 %v83, %v378
    %v380 = vmul.f32 %v121, %v341
    %v381 = vadd.f32 %v379, %v380
    %v382 = vmul.f32 %v124, %v350
    %v383 = vadd.f32 %v381, %v382
    %v384 = vmul.f32 %v127, %v359
    %v385 = vadd.f32 %v383, %v384
    %v386 = vtanh.pop %v385
    %v387 = vmul.f32 %v131, %v332
    %v388 = vadd.f32 %v87, %v387
    %v389 = vmul.f32 %v134, %v341
    %v390 = vadd.f32 %v388, %v389
    %v391 = vmul.f32 %v137, %v350
    %v392 = vadd.f32 %v390, %v391
    %v393 = vmul.f32 %v140, %v359
    %v394 = vadd.f32 %v392, %v393
    %v395 = vtanh.pop %v394
    %v396 = vmul.f32 %v92, %v368
    %v397 = vadd.f32 %v75, %v396
    %v398 = vmul.f32 %v95, %v377
    %v399 = vadd.f32 %v397, %v398
    %v400 = vmul.f32 %v98, %v386
    %v401 = vadd.f32 %v399, %v400
    %v402 = vmul.f32 %v101, %v395
    %v403 = vadd.f32 %v401, %v402
    %v404 = vtanh.pop %v403
    %v405 = vmul.f32 %v105, %v368
    %v406 = vadd.f32 %v79, %v405
    %v407 = vmul.f32 %v108, %v377
    %v408 = vadd.f32 %v406, %v407
    %v409 = vmul.f32 %v111, %v386
    %v410 = vadd.f32 %v408, %v409
    %v411 = vmul.f32 %v114, %v395
    %v412 = vadd.f32 %v410, %v411
    %v413 = vtanh.pop %v412
    %v414 = vmul.f32 %v118, %v368
    %v415 = vadd.f32 %v83, %v414
    %v416 = vmul.f32 %v121, %v377
    %v417 = vadd.f32 %v415, %v416
    %v418 = vmul.f32 %v124, %v386
    %v419 = vadd.f32 %v417, %v418
    %v420 = vmul.f32 %v127, %v395
    %v421 = vadd.f32 %v419, %v420
    %v422 = vtanh.pop %v421
    %v423 = vmul.f32 %v131, %v368
    %v424 = vadd.f32 %v87, %v423
    %v425 = vmul.f32 %v134, %v377
    %v426 = vadd.f32 %v424, %v425
    %v427 = vmul.f32 %v137, %v386
    %v428 = vadd.f32 %v426, %v427
    %v429 = vmul.f32 %v140, %v395
    %v430 = vadd.f32 %v428, %v429
    %v431 = vtanh.pop %v430
    %v432 = vmul.f32 %v92, %v404
    %v433 = vadd.f32 %v75, %v432
    %v434 = vmul.f32 %v95, %v413
    %v435 = vadd.f32 %v433, %v434
    %v436 = vmul.f32 %v98, %v422
    %v437 = vadd.f32 %v435, %v436
    %v438 = vmul.f32 %v101, %v431
    %v439 = vadd.f32 %v437, %v438
    %v440 = vtanh.pop %v439
    %v441 = vmul.f32 %v105, %v404
    %v442 = vadd.f32 %v79, %v441
    %v443 = vmul.f32 %v108, %v413
    %v444 = vadd.f32 %v442, %v443
    %v445 = vmul.f32 %v111, %v422
    %v446 = vadd.f32 %v444, %v445
    %v447 = vmul.f32 %v114, %v431
    %v448 = vadd.f32 %v446, %v447
    %v449 = vtanh.pop %v448
    %v450 = vmul.f32 %v118, %v404
    %v451 = vadd.f32 %v83, %v450
    %v452 = vmul.f32 %v121, %v413
    %v453 = vadd.f32 %v451, %v452
    %v454 = vmul.f32 %v124, %v422
    %v455 = vadd.f32 %v453, %v454
    %v456 = vmul.f32 %v127, %v431
    %v457 = vadd.f32 %v455, %v456
    %v458 = vtanh.pop %v457
    %v459 = vmul.f32 %v131, %v404
    %v460 = vadd.f32 %v87, %v459
    %v461 = vmul.f32 %v134, %v413
    %v462 = vadd.f32 %v460, %v461
    %v463 = vmul.f32 %v137, %v422
    %v464 = vadd.f32 %v462, %v463
    %v465 = vmul.f32 %v140, %v431
    %v466 = vadd.f32 %v464, %v465
    %v467 = vtanh.pop %v466
    %v468 = vmul.f32 %v92, %v440
    %v469 = vadd.f32 %v75, %v468
    %v470 = vmul.f32 %v95, %v449
    %v471 = vadd.f32 %v469, %v470
    %v472 = vmul.f32 %v98, %v458
    %v473 = vadd.f32 %v471, %v472
    %v474 = vmul.f32 %v101, %v467
    %v475 = vadd.f32 %v473, %v474
    %v476 = vtanh.pop %v475
    %v477 = vmul.f32 %v105, %v440
    %v478 = vadd.f32 %v79, %v477
    %v479 = vmul.f32 %v108, %v449
    %v480 = vadd.f32 %v478, %v479
    %v481 = vmul.f32 %v111, %v458
    %v482 = vadd.f32 %v480, %v481
    %v483 = vmul.f32 %v114, %v467
    %v484 = vadd.f32 %v482, %v483
    %v485 = vtanh.pop %v484
    %v486 = vmul.f32 %v118, %v440
    %v487 = vadd.f32 %v83, %v486
    %v488 = vmul.f32 %v121, %v449
    %v489 = vadd.f32 %v487, %v488
    %v490 = vmul.f32 %v124, %v458
    %v491 = vadd.f32 %v489, %v490
    %v492 = vmul.f32 %v127, %v467
    %v493 = vadd.f32 %v491, %v492
    %v494 = vtanh.pop %v493
    %v495 = vmul.f32 %v131, %v440
    %v496 = vadd.f32 %v87, %v495
    %v497 = vmul.f32 %v134, %v449
    %v498 = vadd.f32 %v496, %v497
    %v499 = vmul.f32 %v137, %v458
    %v500 = vadd.f32 %v498, %v499
    %v501 = vmul.f32 %v140, %v467
    %v502 = vadd.f32 %v500, %v501
    %v503 = vtanh.pop %v502
    %v504 = vmul.f32 %v92, %v476
    %v505 = vadd.f32 %v75, %v504
    %v506 = vmul.f32 %v95, %v485
    %v507 = vadd.f32 %v505, %v506
    %v508 = vmul.f32 %v98, %v494
    %v509 = vadd.f32 %v507, %v508
    %v510 = vmul.f32 %v101, %v503
    %v511 = vadd.f32 %v509, %v510
    %v512 = vtanh.pop %v511
    %v513 = vmul.f32 %v105, %v476
    %v514 = vadd.f32 %v79, %v513
    %v515 = vmul.f32 %v108, %v485
    %v516 = vadd.f32 %v514, %v515
    %v517 = vmul.f32 %v111, %v494
    %v518 = vadd.f32 %v516, %v517
    %v519 = vmul.f32 %v114, %v503
    %v520 = vadd.f32 %v518, %v519
    %v521 = vtanh.pop %v520
    %v522 = vmul.f32 %v118, %v476
    %v523 = vadd.f32 %v83, %v522
    %v524 = vmul.f32 %v121, %v485
    %v525 = vadd.f32 %v523, %v524
    %v526 = vmul.f32 %v124, %v494
    %v527 = vadd.f32 %v525, %v526
    %v528 = vmul.f32 %v127, %v503
    %v529 = vadd.f32 %v527, %v528
    %v530 = vtanh.pop %v529
    %v531 = vmul.f32 %v131, %v476
    %v532 = vadd.f32 %v87, %v531
    %v533 = vmul.f32 %v134, %v485
    %v534 = vadd.f32 %v532, %v533
    %v535 = vmul.f32 %v137, %v494
    %v536 = vadd.f32 %v534, %v535
    %v537 = vmul.f32 %v140, %v503
    %v538 = vadd.f32 %v536, %v537
    %v539 = vtanh.pop %v538
    %v540 = vmul.f32 %v92, %v512
    %v541 = vadd.f32 %v75, %v540
    %v542 = vmul.f32 %v95, %v521
    %v543 = vadd.f32 %v541, %v542
    %v544 = vmul.f32 %v98, %v530
    %v545 = vadd.f32 %v543, %v544
    %v546 = vmul.f32 %v101, %v539
    %v547 = vadd.f32 %v545, %v546
    %v548 = vtanh.pop %v547
    %v549 = vmul.f32 %v105, %v512
    %v550 = vadd.f32 %v79, %v549
    %v551 = vmul.f32 %v108, %v521
    %v552 = vadd.f32 %v550, %v551
    %v553 = vmul.f32 %v111, %v530
    %v554 = vadd.f32 %v552, %v553
    %v555 = vmul.f32 %v114, %v539
    %v556 = vadd.f32 %v554, %v555
    %v557 = vtanh.pop %v556
    %v558 = vmul.f32 %v118, %v512
    %v559 = vadd.f32 %v83, %v558
    %v560 = vmul.f32 %v121, %v521
    %v561 = vadd.f32 %v559, %v560
    %v562 = vmul.f32 %v124, %v530
    %v563 = vadd.f32 %v561, %v562
    %v564 = vmul.f32 %v127, %v539
    %v565 = vadd.f32 %v563, %v564
    %v566 = vtanh.pop %v565
    %v567 = vmul.f32 %v131, %v512
    %v568 = vadd.f32 %v87, %v567
    %v569 = vmul.f32 %v134, %v521
    %v570 = vadd.f32 %v568, %v569
    %v571 = vmul.f32 %v137, %v530
    %v572 = vadd.f32 %v570, %v571
    %v573 = vmul.f32 %v140, %v539
    %v574 = vadd.f32 %v572, %v573
    %v575 = vtanh.pop %v574
    %v576 = vmul.f32 %v92, %v548
    %v577 = vadd.f32 %v75, %v576
    %v578 = vmul.f32 %v95, %v557
    %v579 = vadd.f32 %v577, %v578
    %v580 = vmul.f32 %v98, %v566
    %v581 = vadd.f32 %v579, %v580
    %v582 = vmul.f32 %v101, %v575
    %v583 = vadd.f32 %v581, %v582
    %v584 = vtanh.pop %v583
    %v585 = vmul.f32 %v105, %v548
    %v586 = vadd.f32 %v79, %v585
    %v587 = vmul.f32 %v108, %v557
    %v588 = vadd.f32 %v586, %v587
    %v589 = vmul.f32 %v111, %v566
    %v590 = vadd.f32 %v588, %v589
    %v591 = vmul.f32 %v114, %v575
    %v592 = vadd.f32 %v590, %v591
    %v593 = vtanh.pop %v592
    %v594 = vmul.f32 %v118, %v548
    %v595 = vadd.f32 %v83, %v594
    %v596 = vmul.f32 %v121, %v557
    %v597 = vadd.f32 %v595, %v596
    %v598 = vmul.f32 %v124, %v566
    %v599 = vadd.f32 %v597, %v598
    %v600 = vmul.f32 %v127, %v575
    %v601 = vadd.f32 %v599, %v600
    %v602 = vtanh.pop %v601
    %v603 = vmul.f32 %v131, %v548
    %v604 = vadd.f32 %v87, %v603
    %v605 = vmul.f32 %v134, %v557
    %v606 = vadd.f32 %v604, %v605
    %v607 = vmul.f32 %v137, %v566
    %v608 = vadd.f32 %v606, %v607
    %v609 = vmul.f32 %v140, %v575
    %v610 = vadd.f32 %v608, %v609
    %v611 = vtanh.pop %v610
    %v612 = vmul.f32 %v92, %v584
    %v613 = vadd.f32 %v75, %v612
    %v614 = vmul.f32 %v95, %v593
    %v615 = vadd.f32 %v613, %v614
    %v616 = vmul.f32 %v98, %v602
    %v617 = vadd.f32 %v615, %v616
    %v618 = vmul.f32 %v101, %v611
    %v619 = vadd.f32 %v617, %v618
    %v620 = vtanh.pop %v619
    %v621 = vmul.f32 %v105, %v584
    %v622 = vadd.f32 %v79, %v621
    %v623 = vmul.f32 %v108, %v593
    %v624 = vadd.f32 %v622, %v623
    %v625 = vmul.f32 %v111, %v602
    %v626 = vadd.f32 %v624, %v625
    %v627 = vmul.f32 %v114, %v611
    %v628 = vadd.f32 %v626, %v627
    %v629 = vtanh.pop %v628
    %v630 = vmul.f32 %v118, %v584
    %v631 = vadd.f32 %v83, %v630
    %v632 = vmul.f32 %v121, %v593
    %v633 = vadd.f32 %v631, %v632
    %v634 = vmul.f32 %v124, %v602
    %v635 = vadd.f32 %v633, %v634
    %v636 = vmul.f32 %v127, %v611
    %v637 = vadd.f32 %v635, %v636
    %v638 = vtanh.pop %v637
    %v639 = vmul.f32 %v131, %v584
    %v640 = vadd.f32 %v87, %v639
    %v641 = vmul.f32 %v134, %v593
    %v642 = vadd.f32 %v640, %v641
    %v643 = vmul.f32 %v137, %v602
    %v644 = vadd.f32 %v642, %v643
    %v645 = vmul.f32 %v140, %v611
    %v646 = vadd.f32 %v644, %v645
    %v647 = vtanh.pop %v646
    %v648 = vmul.f32 %v92, %v620
    %v649 = vadd.f32 %v75, %v648
    %v650 = vmul.f32 %v95, %v629
    %v651 = vadd.f32 %v649, %v650
    %v652 = vmul.f32 %v98, %v638
    %v653 = vadd.f32 %v651, %v652
    %v654 = vmul.f32 %v101, %v647
    %v655 = vadd.f32 %v653, %v654
    %v656 = vtanh.pop %v655
    %v657 = vmul.f32 %v105, %v620
    %v658 = vadd.f32 %v79, %v657
    %v659 = vmul.f32 %v108, %v629
    %v660 = vadd.f32 %v658, %v659
    %v661 = vmul.f32 %v111, %v638
    %v662 = vadd.f32 %v660, %v661
    %v663 = vmul.f32 %v114, %v647
    %v664 = vadd.f32 %v662, %v663
    %v665 = vtanh.pop %v664
    %v666 = vmul.f32 %v118, %v620
    %v667 = vadd.f32 %v83, %v666
    %v668 = vmul.f32 %v121, %v629
    %v669 = vadd.f32 %v667, %v668
    %v670 = vmul.f32 %v124, %v638
    %v671 = vadd.f32 %v669, %v670
    %v672 = vmul.f32 %v127, %v647
    %v673 = vadd.f32 %v671, %v672
    %v674 = vtanh.pop %v673
    %v675 = vmul.f32 %v131, %v620
    %v676 = vadd.f32 %v87, %v675
    %v677 = vmul.f32 %v134, %v629
    %v678 = vadd.f32 %v676, %v677
    %v679 = vmul.f32 %v137, %v638
    %v680 = vadd.f32 %v678, %v679
    %v681 = vmul.f32 %v140, %v647
    %v682 = vadd.f32 %v680, %v681
    %v683 = vtanh.pop %v682
    %v684 = vmul.f32 %v92, %v656
    %v685 = vadd.f32 %v75, %v684
    %v686 = vmul.f32 %v95, %v665
    %v687 = vadd.f32 %v685, %v686
    %v688 = vmul.f32 %v98, %v674
    %v689 = vadd.f32 %v687, %v688
    %v690 = vmul.f32 %v101, %v683
    %v691 = vadd.f32 %v689, %v690
    %v692 = vtanh.pop %v691
    %v693 = vmul.f32 %v105, %v656
    %v694 = vadd.f32 %v79, %v693
    %v695 = vmul.f32 %v108, %v665
    %v696 = vadd.f32 %v694, %v695
    %v697 = vmul.f32 %v111, %v674
    %v698 = vadd.f32 %v696, %v697
    %v699 = vmul.f32 %v114, %v683
    %v700 = vadd.f32 %v698, %v699
    %v701 = vtanh.pop %v700
    %v702 = vmul.f32 %v118, %v656
    %v703 = vadd.f32 %v83, %v702
    %v704 = vmul.f32 %v121, %v665
    %v705 = vadd.f32 %v703, %v704
    %v706 = vmul.f32 %v124, %v674
    %v707 = vadd.f32 %v705, %v706
    %v708 = vmul.f32 %v127, %v683
    %v709 = vadd.f32 %v707, %v708
    %v710 = vtanh.pop %v709
    %v711 = vmul.f32 %v131, %v656
    %v712 = vadd.f32 %v87, %v711
    %v713 = vmul.f32 %v134, %v665
    %v714 = vadd.f32 %v712, %v713
    %v715 = vmul.f32 %v137, %v674
    %v716 = vadd.f32 %v714, %v715
    %v717 = vmul.f32 %v140, %v683
    %v718 = vadd.f32 %v716, %v717
    %v719 = vtanh.pop %v718
    %v720 = vmul.f32 %v92, %v692
    %v721 = vadd.f32 %v75, %v720
    %v722 = vmul.f32 %v95, %v701
    %v723 = vadd.f32 %v721, %v722
    %v724 = vmul.f32 %v98, %v710
    %v725 = vadd.f32 %v723, %v724
    %v726 = vmul.f32 %v101, %v719
    %v727 = vadd.f32 %v725, %v726
    %v728 = vtanh.pop %v727
    %v729 = vmul.f32 %v105, %v692
    %v730 = vadd.f32 %v79, %v729
    %v731 = vmul.f32 %v108, %v701
    %v732 = vadd.f32 %v730, %v731
    %v733 = vmul.f32 %v111, %v710
    %v734 = vadd.f32 %v732, %v733
    %v735 = vmul.f32 %v114, %v719
    %v736 = vadd.f32 %v734, %v735
    %v737 = vtanh.pop %v736
    %v738 = vmul.f32 %v118, %v692
    %v739 = vadd.f32 %v83, %v738
    %v740 = vmul.f32 %v121, %v701
    %v741 = vadd.f32 %v739, %v740
    %v742 = vmul.f32 %v124, %v710
    %v743 = vadd.f32 %v741, %v742
    %v744 = vmul.f32 %v127, %v719
    %v745 = vadd.f32 %v743, %v744
    %v746 = vtanh.pop %v745
    %v747 = vmul.f32 %v131, %v692
    %v748 = vadd.f32 %v87, %v747
    %v749 = vmul.f32 %v134, %v701
    %v750 = vadd.f32 %v748, %v749
    %v751 = vmul.f32 %v137, %v710
    %v752 = vadd.f32 %v750, %v751
    %v753 = vmul.f32 %v140, %v719
    %v754 = vadd.f32 %v752, %v753
    %v755 = vtanh.pop %v754
    %v756 = vmul.f32 %v92, %v728
    %v757 = vadd.f32 %v75, %v756
    %v758 = vmul.f32 %v95, %v737
    %v759 = vadd.f32 %v757, %v758
    %v760 = vmul.f32 %v98, %v746
    %v761 = vadd.f32 %v759, %v760
    %v762 = vmul.f32 %v101, %v755
    %v763 = vadd.f32 %v761, %v762
    %v764 = vtanh.pop %v763
    %v765 = vmul.f32 %v105, %v728
    %v766 = vadd.f32 %v79, %v765
    %v767 = vmul.f32 %v108, %v737
    %v768 = vadd.f32 %v766, %v767
    %v769 = vmul.f32 %v111, %v746
    %v770 = vadd.f32 %v768, %v769
    %v771 = vmul.f32 %v114, %v755
    %v772 = vadd.f32 %v770, %v771
    %v773 = vtanh.pop %v772
    %v774 = vmul.f32 %v118, %v728
    %v775 = vadd.f32 %v83, %v774
    %v776 = vmul.f32 %v121, %v737
    %v777 = vadd.f32 %v775, %v776
    %v778 = vmul.f32 %v124, %v746
    %v779 = vadd.f32 %v777, %v778
    %v780 = vmul.f32 %v127, %v755
    %v781 = vadd.f32 %v779, %v780
    %v782 = vtanh.pop %v781
    %v783 = vmul.f32 %v131, %v728
    %v784 = vadd.f32 %v87, %v783
    %v785 = vmul.f32 %v134, %v737
    %v786 = vadd.f32 %v784, %v785
    %v787 = vmul.f32 %v137, %v746
    %v788 = vadd.f32 %v786, %v787
    %v789 = vmul.f32 %v140, %v755
    %v790 = vadd.f32 %v788, %v789
    %v791 = vtanh.pop %v790
    %v792 = vmul.f32 %v92, %v764
    %v793 = vadd.f32 %v75, %v792
    %v794 = vmul.f32 %v95, %v773
    %v795 = vadd.f32 %v793, %v794
    %v796 = vmul.f32 %v98, %v782
    %v797 = vadd.f32 %v795, %v796
    %v798 = vmul.f32 %v101, %v791
    %v799 = vadd.f32 %v797, %v798
    %v800 = vtanh.pop %v799
    %v801 = vmul.f32 %v105, %v764
    %v802 = vadd.f32 %v79, %v801
    %v803 = vmul.f32 %v108, %v773
    %v804 = vadd.f32 %v802, %v803
    %v805 = vmul.f32 %v111, %v782
    %v806 = vadd.f32 %v804, %v805
    %v807 = vmul.f32 %v114, %v791
    %v808 = vadd.f32 %v806, %v807
    %v809 = vtanh.pop %v808
    %v810 = vmul.f32 %v118, %v764
    %v811 = vadd.f32 %v83, %v810
    %v812 = vmul.f32 %v121, %v773
    %v813 = vadd.f32 %v811, %v812
    %v814 = vmul.f32 %v124, %v782
    %v815 = vadd.f32 %v813, %v814
    %v816 = vmul.f32 %v127, %v791
    %v817 = vadd.f32 %v815, %v816
    %v818 = vtanh.pop %v817
    %v819 = vmul.f32 %v131, %v764
    %v820 = vadd.f32 %v87, %v819
    %v821 = vmul.f32 %v134, %v773
    %v822 = vadd.f32 %v820, %v821
    %v823 = vmul.f32 %v137, %v782
    %v824 = vadd.f32 %v822, %v823
    %v825 = vmul.f32 %v140, %v791
    %v826 = vadd.f32 %v824, %v825
    %v827 = vtanh.pop %v826
    %v828 = vmul.f32 %v92, %v800
    %v829 = vadd.f32 %v75, %v828
    %v830 = vmul.f32 %v95, %v809
    %v831 = vadd.f32 %v829, %v830
    %v832 = vmul.f32 %v98, %v818
    %v833 = vadd.f32 %v831, %v832
    %v834 = vmul.f32 %v101, %v827
    %v835 = vadd.f32 %v833, %v834
    %v836 = vtanh.pop %v835
    %v837 = vmul.f32 %v105, %v800
    %v838 = vadd.f32 %v79, %v837
    %v839 = vmul.f32 %v108, %v809
    %v840 = vadd.f32 %v838, %v839
    %v841 = vmul.f32 %v111, %v818
    %v842 = vadd.f32 %v840, %v841
    %v843 = vmul.f32 %v114, %v827
    %v844 = vadd.f32 %v842, %v843
    %v845 = vtanh.pop %v844
    %v846 = vmul.f32 %v118, %v800
    %v847 = vadd.f32 %v83, %v846
    %v848 = vmul.f32 %v121, %v809
    %v849 = vadd.f32 %v847, %v848
    %v850 = vmul.f32 %v124, %v818
    %v851 = vadd.f32 %v849, %v850
    %v852 = vmul.f32 %v127, %v827
    %v853 = vadd.f32 %v851, %v852
    %v854 = vtanh.pop %v853
    %v855 = vmul.f32 %v131, %v800
    %v856 = vadd.f32 %v87, %v855
    %v857 = vmul.f32 %v134, %v809
    %v858 = vadd.f32 %v856, %v857
    %v859 = vmul.f32 %v137, %v818
    %v860 = vadd.f32 %v858, %v859
    %v861 = vmul.f32 %v140, %v827
    %v862 = vadd.f32 %v860, %v861
    %v863 = vtanh.pop %v862
    %v864 = vmul.f32 %v92, %v836
    %v865 = vadd.f32 %v75, %v864
    %v866 = vmul.f32 %v95, %v845
    %v867 = vadd.f32 %v865, %v866
    %v868 = vmul.f32 %v98, %v854
    %v869 = vadd.f32 %v867, %v868
    %v870 = vmul.f32 %v101, %v863
    %v871 = vadd.f32 %v869, %v870
    %v872 = vtanh.pop %v871
    %v873 = vmul.f32 %v105, %v836
    %v874 = vadd.f32 %v79, %v873
    %v875 = vmul.f32 %v108, %v845
    %v876 = vadd.f32 %v874, %v875
    %v877 = vmul.f32 %v111, %v854
    %v878 = vadd.f32 %v876, %v877
    %v879 = vmul.f32 %v114, %v863
    %v880 = vadd.f32 %v878, %v879
    %v881 = vtanh.pop %v880
    %v882 = vmul.f32 %v118, %v836
    %v883 = vadd.f32 %v83, %v882
    %v884 = vmul.f32 %v121, %v845
    %v885 = vadd.f32 %v883, %v884
    %v886 = vmul.f32 %v124, %v854
    %v887 = vadd.f32 %v885, %v886
    %v888 = vmul.f32 %v127, %v863
    %v889 = vadd.f32 %v887, %v888
    %v890 = vtanh.pop %v889
    %v891 = vmul.f32 %v131, %v836
    %v892 = vadd.f32 %v87, %v891
    %v893 = vmul.f32 %v134, %v845
    %v894 = vadd.f32 %v892, %v893
    %v895 = vmul.f32 %v137, %v854
    %v896 = vadd.f32 %v894, %v895
    %v897 = vmul.f32 %v140, %v863
    %v898 = vadd.f32 %v896, %v897
    %v899 = vtanh.pop %v898
    %v900 = vmul.f32 %v92, %v872
    %v901 = vadd.f32 %v75, %v900
    %v902 = vmul.f32 %v95, %v881
    %v903 = vadd.f32 %v901, %v902
    %v904 = vmul.f32 %v98, %v890
    %v905 = vadd.f32 %v903, %v904
    %v906 = vmul.f32 %v101, %v899
    %v907 = vadd.f32 %v905, %v906
    %v908 = vtanh.pop %v907
    %v909 = vmul.f32 %v105, %v872
    %v910 = vadd.f32 %v79, %v909
    %v911 = vmul.f32 %v108, %v881
    %v912 = vadd.f32 %v910, %v911
    %v913 = vmul.f32 %v111, %v890
    %v914 = vadd.f32 %v912, %v913
    %v915 = vmul.f32 %v114, %v899
    %v916 = vadd.f32 %v914, %v915
    %v917 = vtanh.pop %v916
    %v918 = vmul.f32 %v118, %v872
    %v919 = vadd.f32 %v83, %v918
    %v920 = vmul.f32 %v121, %v881
    %v921 = vadd.f32 %v919, %v920
    %v922 = vmul.f32 %v124, %v890
    %v923 = vadd.f32 %v921, %v922
    %v924 = vmul.f32 %v127, %v899
    %v925 = vadd.f32 %v923, %v924
    %v926 = vtanh.pop %v925
    %v927 = vmul.f32 %v131, %v872
    %v928 = vadd.f32 %v87, %v927
    %v929 = vmul.f32 %v134, %v881
    %v930 = vadd.f32 %v928, %v929
    %v931 = vmul.f32 %v137, %v890
    %v932 = vadd.f32 %v930, %v931
    %v933 = vmul.f32 %v140, %v899
    %v934 = vadd.f32 %v932, %v933
    %v935 = vtanh.pop %v934
    %v936 = vmul.f32 %v92, %v908
    %v937 = vadd.f32 %v75, %v936
    %v938 = vmul.f32 %v95, %v917
    %v939 = vadd.f32 %v937, %v938
    %v940 = vmul.f32 %v98, %v926
    %v941 = vadd.f32 %v939, %v940
    %v942 = vmul.f32 %v101, %v935
    %v943 = vadd.f32 %v941, %v942
    %v944 = vtanh.pop %v943
    %v945 = vmul.f32 %v105, %v908
    %v946 = vadd.f32 %v79, %v945
    %v947 = vmul.f32 %v108, %v917
    %v948 = vadd.f32 %v946, %v947
    %v949 = vmul.f32 %v111, %v926
    %v950 = vadd.f32 %v948, %v949
    %v951 = vmul.f32 %v114, %v935
    %v952 = vadd.f32 %v950, %v951
    %v953 = vtanh.pop %v952
    %v954 = vmul.f32 %v118, %v908
    %v955 = vadd.f32 %v83, %v954
    %v956 = vmul.f32 %v121, %v917
    %v957 = vadd.f32 %v955, %v956
    %v958 = vmul.f32 %v124, %v926
    %v959 = vadd.f32 %v957, %v958
    %v960 = vmul.f32 %v127, %v935
    %v961 = vadd.f32 %v959, %v960
    %v962 = vtanh.pop %v961
    %v963 = vmul.f32 %v131, %v908
    %v964 = vadd.f32 %v87, %v963
    %v965 = vmul.f32 %v134, %v917
    %v966 = vadd.f32 %v964, %v965
    %v967 = vmul.f32 %v137, %v926
    %v968 = vadd.f32 %v966, %v967
    %v969 = vmul.f32 %v140, %v935
    %v970 = vadd.f32 %v968, %v969
    %v971 = vtanh.pop %v970
    %v972 = vmul.f32 %v92, %v944
    %v973 = vadd.f32 %v75, %v972
    %v974 = vmul.f32 %v95, %v953
    %v975 = vadd.f32 %v973, %v974
    %v976 = vmul.f32 %v98, %v962
    %v977 = vadd.f32 %v975, %v976
    %v978 = vmul.f32 %v101, %v971
    %v979 = vadd.f32 %v977, %v978
    %v980 = vtanh.pop %v979
    %v981 = vmul.f32 %v105, %v944
    %v982 = vadd.f32 %v79, %v981
    %v983 = vmul.f32 %v108, %v953
    %v984 = vadd.f32 %v982, %v983
    %v985 = vmul.f32 %v111, %v962
    %v986 = vadd.f32 %v984, %v985
    %v987 = vmul.f32 %v114, %v971
    %v988 = vadd.f32 %v986, %v987
    %v989 = vtanh.pop %v988
    %v990 = vmul.f32 %v118, %v944
    %v991 = vadd.f32 %v83, %v990
    %v992 = vmul.f32 %v121, %v953
    %v993 = vadd.f32 %v991, %v992
    %v994 = vmul.f32 %v124, %v962
    %v995 = vadd.f32 %v993, %v994
    %v996 = vmul.f32 %v127, %v971
    %v997 = vadd.f32 %v995, %v996
    %v998 = vtanh.pop %v997
    %v999 = vmul.f32 %v131, %v944
    %v1000 = vadd.f32 %v87, %v999
    %v1001 = vmul.f32 %v134, %v953
    %v1002 = vadd.f32 %v1000, %v1001
    %v1003 = vmul.f32 %v137, %v962
    %v1004 = vadd.f32 %v1002, %v1003
    %v1005 = vmul.f32 %v140, %v971
    %v1006 = vadd.f32 %v1004, %v1005
    %v1007 = vtanh.pop %v1006
    %v1008 = vmul.f32 %v92, %v980
    %v1009 = vadd.f32 %v75, %v1008
    %v1010 = vmul.f32 %v95, %v989
    %v1011 = vadd.f32 %v1009, %v1010
    %v1012 = vmul.f32 %v98, %v998
    %v1013 = vadd.f32 %v1011, %v1012
    %v1014 = vmul.f32 %v101, %v1007
    %v1015 = vadd.f32 %v1013, %v1014
    %v1016 = vtanh.pop %v1015
    %v1017 = vmul.f32 %v105, %v980
    %v1018 = vadd.f32 %v79, %v1017
    %v1019 = vmul.f32 %v108, %v989
    %v1020 = vadd.f32 %v1018, %v1019
    %v1021 = vmul.f32 %v111, %v998
    %v1022 = vadd.f32 %v1020, %v1021
    %v1023 = vmul.f32 %v114, %v1007
    %v1024 = vadd.f32 %v1022, %v1023
    %v1025 = vtanh.pop %v1024
    %v1026 = vmul.f32 %v118, %v980
    %v1027 = vadd.f32 %v83, %v1026
    %v1028 = vmul.f32 %v121, %v989
    %v1029 = vadd.f32 %v1027, %v1028
    %v1030 = vmul.f32 %v124, %v998
    %v1031 = vadd.f32 %v1029, %v1030
    %v1032 = vmul.f32 %v127, %v1007
    %v1033 = vadd.f32 %v1031, %v1032
    %v1034 = vtanh.pop %v1033
    %v1035 = vmul.f32 %v131, %v980
    %v1036 = vadd.f32 %v87, %v1035
    %v1037 = vmul.f32 %v134, %v989
    %v1038 = vadd.f32 %v1036, %v1037
    %v1039 = vmul.f32 %v137, %v998
    %v1040 = vadd.f32 %v1038, %v1039
    %v1041 = vmul.f32 %v140, %v1007
    %v1042 = vadd.f32 %v1040, %v1041
    %v1043 = vtanh.pop %v1042
    %v1044 = vmul.f32 %v92, %v1016
    %v1045 = vadd.f32 %v75, %v1044
    %v1046 = vmul.f32 %v95, %v1025
    %v1047 = vadd.f32 %v1045, %v1046
    %v1048 = vmul.f32 %v98, %v1034
    %v1049 = vadd.f32 %v1047, %v1048
    %v1050 = vmul.f32 %v101, %v1043
    %v1051 = vadd.f32 %v1049, %v1050
    %v1052 = vtanh.pop %v1051
    %v1053 = vmul.f32 %v105, %v1016
    %v1054 = vadd.f32 %v79, %v1053
    %v1055 = vmul.f32 %v108, %v1025
    %v1056 = vadd.f32 %v1054, %v1055
    %v1057 = vmul.f32 %v111, %v1034
    %v1058 = vadd.f32 %v1056, %v1057
    %v1059 = vmul.f32 %v114, %v1043
    %v1060 = vadd.f32 %v1058, %v1059
    %v1061 = vtanh.pop %v1060
    %v1062 = vmul.f32 %v118, %v1016
    %v1063 = vadd.f32 %v83, %v1062
    %v1064 = vmul.f32 %v121, %v1025
    %v1065 = vadd.f32 %v1063, %v1064
    %v1066 = vmul.f32 %v124, %v1034
    %v1067 = vadd.f32 %v1065, %v1066
    %v1068 = vmul.f32 %v127, %v1043
    %v1069 = vadd.f32 %v1067, %v1068
    %v1070 = vtanh.pop %v1069
    %v1071 = vmul.f32 %v131, %v1016
    %v1072 = vadd.f32 %v87, %v1071
    %v1073 = vmul.f32 %v134, %v1025
    %v1074 = vadd.f32 %v1072, %v1073
    %v1075 = vmul.f32 %v137, %v1034
    %v1076 = vadd.f32 %v1074, %v1075
    %v1077 = vmul.f32 %v140, %v1043
    %v1078 = vadd.f32 %v1076, %v1077
    %v1079 = vtanh.pop %v1078
    %v1080 = vmul.f32 %v92, %v1052
    %v1081 = vadd.f32 %v75, %v1080
    %v1082 = vmul.f32 %v95, %v1061
    %v1083 = vadd.f32 %v1081, %v1082
    %v1084 = vmul.f32 %v98, %v1070
    %v1085 = vadd.f32 %v1083, %v1084
    %v1086 = vmul.f32 %v101, %v1079
    %v1087 = vadd.f32 %v1085, %v1086
    %v1088 = vtanh.pop %v1087
    %v1089 = vmul.f32 %v105, %v1052
    %v1090 = vadd.f32 %v79, %v1089
    %v1091 = vmul.f32 %v108, %v1061
    %v1092 = vadd.f32 %v1090, %v1091
    %v1093 = vmul.f32 %v111, %v1070
    %v1094 = vadd.f32 %v1092, %v1093
    %v1095 = vmul.f32 %v114, %v1079
    %v1096 = vadd.f32 %v1094, %v1095
    %v1097 = vtanh.pop %v1096
    %v1098 = vmul.f32 %v118, %v1052
    %v1099 = vadd.f32 %v83, %v1098
    %v1100 = vmul.f32 %v121, %v1061
    %v1101 = vadd.f32 %v1099, %v1100
    %v1102 = vmul.f32 %v124, %v1070
    %v1103 = vadd.f32 %v1101, %v1102
    %v1104 = vmul.f32 %v127, %v1079
    %v1105 = vadd.f32 %v1103, %v1104
    %v1106 = vtanh.pop %v1105
    %v1107 = vmul.f32 %v131, %v1052
    %v1108 = vadd.f32 %v87, %v1107
    %v1109 = vmul.f32 %v134, %v1061
    %v1110 = vadd.f32 %v1108, %v1109
    %v1111 = vmul.f32 %v137, %v1070
    %v1112 = vadd.f32 %v1110, %v1111
    %v1113 = vmul.f32 %v140, %v1079
    %v1114 = vadd.f32 %v1112, %v1113
    %v1115 = vtanh.pop %v1114
    %v1116 = vmul.f32 %v92, %v1088
    %v1117 = vadd.f32 %v75, %v1116
    %v1118 = vmul.f32 %v95, %v1097
    %v1119 = vadd.f32 %v1117, %v1118
    %v1120 = vmul.f32 %v98, %v1106
    %v1121 = vadd.f32 %v1119, %v1120
    %v1122 = vmul.f32 %v101, %v1115
    %v1123 = vadd.f32 %v1121, %v1122
    %v1124 = vtanh.pop %v1123
    %v1125 = vmul.f32 %v105, %v1088
    %v1126 = vadd.f32 %v79, %v1125
    %v1127 = vmul.f32 %v108, %v1097
    %v1128 = vadd.f32 %v1126, %v1127
    %v1129 = vmul.f32 %v111, %v1106
    %v1130 = vadd.f32 %v1128, %v1129
    %v1131 = vmul.f32 %v114, %v1115
    %v1132 = vadd.f32 %v1130, %v1131
    %v1133 = vtanh.pop %v1132
    %v1134 = vmul.f32 %v118, %v1088
    %v1135 = vadd.f32 %v83, %v1134
    %v1136 = vmul.f32 %v121, %v1097
    %v1137 = vadd.f32 %v1135, %v1136
    %v1138 = vmul.f32 %v124, %v1106
    %v1139 = vadd.f32 %v1137, %v1138
    %v1140 = vmul.f32 %v127, %v1115
    %v1141 = vadd.f32 %v1139, %v1140
    %v1142 = vtanh.pop %v1141
    %v1143 = vmul.f32 %v131, %v1088
    %v1144 = vadd.f32 %v87, %v1143
    %v1145 = vmul.f32 %v134, %v1097
    %v1146 = vadd.f32 %v1144, %v1145
    %v1147 = vmul.f32 %v137, %v1106
    %v1148 = vadd.f32 %v1146, %v1147
    %v1149 = vmul.f32 %v140, %v1115
    %v1150 = vadd.f32 %v1148, %v1149
    %v1151 = vtanh.pop %v1150
    %v1152 = vsub.f32 %v1124, %v1088
    %v1153 = vmul.f32 %v1152, %v1152
    %v1155 = vlaneseq
    %v1156 = vshrl.u32 %v1155, 7
    %v1157 = vsub.s32 0, %v1156
    %v1158 = vrot.slane %v1153, %v1157
    %v1159 = vlaneseq
    %v1160 = vshrl.u32 %v1159, 7
    %v1161 = vsub.s32 1, %v1160
    %v1162 = vrot.slane %v1153, %v1161
    %v1163 = vlaneseq
    %v1164 = vshrl.u32 %v1163, 7
    %v1165 = vsub.s32 2, %v1164
    %v1166 = vrot.slane %v1153, %v1165
    %v1167 = vlaneseq
    %v1168 = vshrl.u32 %v1167, 7
    %v1169 = vsub.s32 3, %v1168
    %v1170 = vrot.slane %v1153, %v1169
    %vm1175 = vcmask 1040384
    %v1176 = vsel %vm1175, %v1158, 0.0
    %v1177 = vsel %vm1175, %v1162, 0.0
    %v1178 = vadd.f32 %v1176, %v1177
    %v1179 = vsel %vm1175, %v1166, 0.0
    %v1180 = vadd.f32 %v1178, %v1179
    %v1181 = vsel %vm1175, %v1170, 0.0
    %v1182 = vadd.f32 %v1180, %v1181
    %1183 = vadd.xlane.f32.xlu0 %v1182
    %v1184 = vpop.xlane.xlu0 %1183
    %v1185 = vrot.slane %v1184, 4
    %v1186 = vadd.f32 %v1184, %v1185
    %v1187 = vrot.slane %v1186, 2
    %v1188 = vadd.f32 %v1186, %v1187
    %v1189 = vrot.slane %v1188, 1
    %v1190 = vadd.f32 %v1188, %v1189
    %s1191 = vtos %v1190
    %s1192 = sadd.f32 %s1191, 0.0
    %v1193 = vmul.f32 %v1124, %v1124
    %v1195 = vlaneseq
    %v1196 = vshrl.u32 %v1195, 7
    %v1197 = vsub.s32 0, %v1196
    %v1198 = vrot.slane %v1193, %v1197
    %v1199 = vlaneseq
    %v1200 = vshrl.u32 %v1199, 7
    %v1201 = vsub.s32 1, %v1200
    %v1202 = vrot.slane %v1193, %v1201
    %v1203 = vlaneseq
    %v1204 = vshrl.u32 %v1203, 7
    %v1205 = vsub.s32 2, %v1204
    %v1206 = vrot.slane %v1193, %v1205
    %v1207 = vlaneseq
    %v1208 = vshrl.u32 %v1207, 7
    %v1209 = vsub.s32 3, %v1208
    %v1210 = vrot.slane %v1193, %v1209
    %v1215 = vsel %vm1175, %v1198, 0.0
    %v1216 = vsel %vm1175, %v1202, 0.0
    %v1217 = vadd.f32 %v1215, %v1216
    %v1218 = vsel %vm1175, %v1206, 0.0
    %v1219 = vadd.f32 %v1217, %v1218
    %v1220 = vsel %vm1175, %v1210, 0.0
    %v1221 = vadd.f32 %v1219, %v1220
    %1222 = vadd.xlane.f32.xlu0 %v1221
    %v1223 = vpop.xlane.xlu0 %1222
    %v1224 = vrot.slane %v1223, 4
    %v1225 = vadd.f32 %v1223, %v1224
    %v1226 = vrot.slane %v1225, 2
    %v1227 = vadd.f32 %v1225, %v1226
    %v1228 = vrot.slane %v1227, 1
    %v1229 = vadd.f32 %v1227, %v1228
    %s1230 = vtos %v1229
    %s1231 = sadd.f32 %s1230, 0.0
    %v1232 = vsub.f32 %v1133, %v1097
    %v1233 = vmul.f32 %v1232, %v1232
    %v1235 = vlaneseq
    %v1236 = vshrl.u32 %v1235, 7
    %v1237 = vsub.s32 0, %v1236
    %v1238 = vrot.slane %v1233, %v1237
    %v1239 = vlaneseq
    %v1240 = vshrl.u32 %v1239, 7
    %v1241 = vsub.s32 1, %v1240
    %v1242 = vrot.slane %v1233, %v1241
    %v1243 = vlaneseq
    %v1244 = vshrl.u32 %v1243, 7
    %v1245 = vsub.s32 2, %v1244
    %v1246 = vrot.slane %v1233, %v1245
    %v1247 = vlaneseq
    %v1248 = vshrl.u32 %v1247, 7
    %v1249 = vsub.s32 3, %v1248
    %v1250 = vrot.slane %v1233, %v1249
    %v1255 = vsel %vm1175, %v1238, 0.0
    %v1256 = vsel %vm1175, %v1242, 0.0
    %v1257 = vadd.f32 %v1255, %v1256
    %v1258 = vsel %vm1175, %v1246, 0.0
    %v1259 = vadd.f32 %v1257, %v1258
    %v1260 = vsel %vm1175, %v1250, 0.0
    %v1261 = vadd.f32 %v1259, %v1260
    %1262 = vadd.xlane.f32.xlu0 %v1261
    %v1263 = vpop.xlane.xlu0 %1262
    %v1264 = vrot.slane %v1263, 4
    %v1265 = vadd.f32 %v1263, %v1264
    %v1266 = vrot.slane %v1265, 2
    %v1267 = vadd.f32 %v1265, %v1266
    %v1268 = vrot.slane %v1267, 1
    %v1269 = vadd.f32 %v1267, %v1268
    %s1270 = vtos %v1269
    %s1271 = sadd.f32 %s1192, %s1270
    %v1272 = vmul.f32 %v1133, %v1133
    %v1274 = vlaneseq
    %v1275 = vshrl.u32 %v1274, 7
    %v1276 = vsub.s32 0, %v1275
    %v1277 = vrot.slane %v1272, %v1276
    %v1278 = vlaneseq
    %v1279 = vshrl.u32 %v1278, 7
    %v1280 = vsub.s32 1, %v1279
    %v1281 = vrot.slane %v1272, %v1280
    %v1282 = vlaneseq
    %v1283 = vshrl.u32 %v1282, 7
    %v1284 = vsub.s32 2, %v1283
    %v1285 = vrot.slane %v1272, %v1284
    %v1286 = vlaneseq
    %v1287 = vshrl.u32 %v1286, 7
    %v1288 = vsub.s32 3, %v1287
    %v1289 = vrot.slane %v1272, %v1288
    %v1294 = vsel %vm1175, %v1277, 0.0
    %v1295 = vsel %vm1175, %v1281, 0.0
    %v1296 = vadd.f32 %v1294, %v1295
    %v1297 = vsel %vm1175, %v1285, 0.0
    %v1298 = vadd.f32 %v1296, %v1297
    %v1299 = vsel %vm1175, %v1289, 0.0
    %v1300 = vadd.f32 %v1298, %v1299
    %1301 = vadd.xlane.f32.xlu0 %v1300
    %v1302 = vpop.xlane.xlu0 %1301
    %v1303 = vrot.slane %v1302, 4
    %v1304 = vadd.f32 %v1302, %v1303
    %v1305 = vrot.slane %v1304, 2
    %v1306 = vadd.f32 %v1304, %v1305
    %v1307 = vrot.slane %v1306, 1
    %v1308 = vadd.f32 %v1306, %v1307
    %s1309 = vtos %v1308
    %s1310 = sadd.f32 %s1231, %s1309
    %v1311 = vsub.f32 %v1142, %v1106
    %v1312 = vmul.f32 %v1311, %v1311
    %v1314 = vlaneseq
    %v1315 = vshrl.u32 %v1314, 7
    %v1316 = vsub.s32 0, %v1315
    %v1317 = vrot.slane %v1312, %v1316
    %v1318 = vlaneseq
    %v1319 = vshrl.u32 %v1318, 7
    %v1320 = vsub.s32 1, %v1319
    %v1321 = vrot.slane %v1312, %v1320
    %v1322 = vlaneseq
    %v1323 = vshrl.u32 %v1322, 7
    %v1324 = vsub.s32 2, %v1323
    %v1325 = vrot.slane %v1312, %v1324
    %v1326 = vlaneseq
    %v1327 = vshrl.u32 %v1326, 7
    %v1328 = vsub.s32 3, %v1327
    %v1329 = vrot.slane %v1312, %v1328
    %v1334 = vsel %vm1175, %v1317, 0.0
    %v1335 = vsel %vm1175, %v1321, 0.0
    %v1336 = vadd.f32 %v1334, %v1335
    %v1337 = vsel %vm1175, %v1325, 0.0
    %v1338 = vadd.f32 %v1336, %v1337
    %v1339 = vsel %vm1175, %v1329, 0.0
    %v1340 = vadd.f32 %v1338, %v1339
    %1341 = vadd.xlane.f32.xlu0 %v1340
    %v1342 = vpop.xlane.xlu0 %1341
    %v1343 = vrot.slane %v1342, 4
    %v1344 = vadd.f32 %v1342, %v1343
    %v1345 = vrot.slane %v1344, 2
    %v1346 = vadd.f32 %v1344, %v1345
    %v1347 = vrot.slane %v1346, 1
    %v1348 = vadd.f32 %v1346, %v1347
    %s1349 = vtos %v1348
    %s1350 = sadd.f32 %s1271, %s1349
    %v1351 = vmul.f32 %v1142, %v1142
    %v1353 = vlaneseq
    %v1354 = vshrl.u32 %v1353, 7
    %v1355 = vsub.s32 0, %v1354
    %v1356 = vrot.slane %v1351, %v1355
    %v1357 = vlaneseq
    %v1358 = vshrl.u32 %v1357, 7
    %v1359 = vsub.s32 1, %v1358
    %v1360 = vrot.slane %v1351, %v1359
    %v1361 = vlaneseq
    %v1362 = vshrl.u32 %v1361, 7
    %v1363 = vsub.s32 2, %v1362
    %v1364 = vrot.slane %v1351, %v1363
    %v1365 = vlaneseq
    %v1366 = vshrl.u32 %v1365, 7
    %v1367 = vsub.s32 3, %v1366
    %v1368 = vrot.slane %v1351, %v1367
    %v1373 = vsel %vm1175, %v1356, 0.0
    %v1374 = vsel %vm1175, %v1360, 0.0
    %v1375 = vadd.f32 %v1373, %v1374
    %v1376 = vsel %vm1175, %v1364, 0.0
    %v1377 = vadd.f32 %v1375, %v1376
    %v1378 = vsel %vm1175, %v1368, 0.0
    %v1379 = vadd.f32 %v1377, %v1378
    %1380 = vadd.xlane.f32.xlu0 %v1379
    %v1381 = vpop.xlane.xlu0 %1380
    %v1382 = vrot.slane %v1381, 4
    %v1383 = vadd.f32 %v1381, %v1382
    %v1384 = vrot.slane %v1383, 2
    %v1385 = vadd.f32 %v1383, %v1384
    %v1386 = vrot.slane %v1385, 1
    %v1387 = vadd.f32 %v1385, %v1386
    %s1388 = vtos %v1387
    %s1389 = sadd.f32 %s1310, %s1388
    %v1390 = vsub.f32 %v1151, %v1115
    %v1391 = vmul.f32 %v1390, %v1390
    %v1393 = vlaneseq
    %v1394 = vshrl.u32 %v1393, 7
    %v1395 = vsub.s32 0, %v1394
    %v1396 = vrot.slane %v1391, %v1395
    %v1397 = vlaneseq
    %v1398 = vshrl.u32 %v1397, 7
    %v1399 = vsub.s32 1, %v1398
    %v1400 = vrot.slane %v1391, %v1399
    %v1401 = vlaneseq
    %v1402 = vshrl.u32 %v1401, 7
    %v1403 = vsub.s32 2, %v1402
    %v1404 = vrot.slane %v1391, %v1403
    %v1405 = vlaneseq
    %v1406 = vshrl.u32 %v1405, 7
    %v1407 = vsub.s32 3, %v1406
    %v1408 = vrot.slane %v1391, %v1407
    %v1413 = vsel %vm1175, %v1396, 0.0
    %v1414 = vsel %vm1175, %v1400, 0.0
    %v1415 = vadd.f32 %v1413, %v1414
    %v1416 = vsel %vm1175, %v1404, 0.0
    %v1417 = vadd.f32 %v1415, %v1416
    %v1418 = vsel %vm1175, %v1408, 0.0
    %v1419 = vadd.f32 %v1417, %v1418
    %1420 = vadd.xlane.f32.xlu0 %v1419
    %v1421 = vpop.xlane.xlu0 %1420
    %v1422 = vrot.slane %v1421, 4
    %v1423 = vadd.f32 %v1421, %v1422
    %v1424 = vrot.slane %v1423, 2
    %v1425 = vadd.f32 %v1423, %v1424
    %v1426 = vrot.slane %v1425, 1
    %v1427 = vadd.f32 %v1425, %v1426
    %s1428 = vtos %v1427
    %s1429 = sadd.f32 %s1350, %s1428
    %v1430 = vmul.f32 %v1151, %v1151
    %v1432 = vlaneseq
    %v1433 = vshrl.u32 %v1432, 7
    %v1434 = vsub.s32 0, %v1433
    %v1435 = vrot.slane %v1430, %v1434
    %v1436 = vlaneseq
    %v1437 = vshrl.u32 %v1436, 7
    %v1438 = vsub.s32 1, %v1437
    %v1439 = vrot.slane %v1430, %v1438
    %v1440 = vlaneseq
    %v1441 = vshrl.u32 %v1440, 7
    %v1442 = vsub.s32 2, %v1441
    %v1443 = vrot.slane %v1430, %v1442
    %v1444 = vlaneseq
    %v1445 = vshrl.u32 %v1444, 7
    %v1446 = vsub.s32 3, %v1445
    %v1447 = vrot.slane %v1430, %v1446
    %v1452 = vsel %vm1175, %v1435, 0.0
    %v1453 = vsel %vm1175, %v1439, 0.0
    %v1454 = vadd.f32 %v1452, %v1453
    %v1455 = vsel %vm1175, %v1443, 0.0
    %v1456 = vadd.f32 %v1454, %v1455
    %v1457 = vsel %vm1175, %v1447, 0.0
    %v1458 = vadd.f32 %v1456, %v1457
    %1459 = vadd.xlane.f32.xlu0 %v1458
    %v1460 = vpop.xlane.xlu0 %1459
    %v1461 = vrot.slane %v1460, 4
    %v1462 = vadd.f32 %v1460, %v1461
    %v1463 = vrot.slane %v1462, 2
    %v1464 = vadd.f32 %v1462, %v1463
    %v1465 = vrot.slane %v1464, 1
    %v1466 = vadd.f32 %v1464, %v1465
    %s1467 = vtos %v1466
    %s1468 = sadd.f32 %s1389, %s1467
    %v1469 = vmul.f32 %v92, %v1124
    %v1470 = vadd.f32 %v75, %v1469
    %v1471 = vmul.f32 %v95, %v1133
    %v1472 = vadd.f32 %v1470, %v1471
    %v1473 = vmul.f32 %v98, %v1142
    %v1474 = vadd.f32 %v1472, %v1473
    %v1475 = vmul.f32 %v101, %v1151
    %v1476 = vadd.f32 %v1474, %v1475
    %v1477 = vtanh.pop %v1476
    %v1478 = vmul.f32 %v105, %v1124
    %v1479 = vadd.f32 %v79, %v1478
    %v1480 = vmul.f32 %v108, %v1133
    %v1481 = vadd.f32 %v1479, %v1480
    %v1482 = vmul.f32 %v111, %v1142
    %v1483 = vadd.f32 %v1481, %v1482
    %v1484 = vmul.f32 %v114, %v1151
    %v1485 = vadd.f32 %v1483, %v1484
    %v1486 = vtanh.pop %v1485
    %v1487 = vmul.f32 %v118, %v1124
    %v1488 = vadd.f32 %v83, %v1487
    %v1489 = vmul.f32 %v121, %v1133
    %v1490 = vadd.f32 %v1488, %v1489
    %v1491 = vmul.f32 %v124, %v1142
    %v1492 = vadd.f32 %v1490, %v1491
    %v1493 = vmul.f32 %v127, %v1151
    %v1494 = vadd.f32 %v1492, %v1493
    %v1495 = vtanh.pop %v1494
    %v1496 = vmul.f32 %v131, %v1124
    %v1497 = vadd.f32 %v87, %v1496
    %v1498 = vmul.f32 %v134, %v1133
    %v1499 = vadd.f32 %v1497, %v1498
    %v1500 = vmul.f32 %v137, %v1142
    %v1501 = vadd.f32 %v1499, %v1500
    %v1502 = vmul.f32 %v140, %v1151
    %v1503 = vadd.f32 %v1501, %v1502
    %v1504 = vtanh.pop %v1503
    %v1505 = vlaneseq
    %vm1506 = vcmp.ge.s32.totalorder %v1505, 0
    %vm1507 = vcmp.lt.s32.totalorder %v1505, 512
    %vm1508 = vmand %vm1506, %vm1507
    %1509 = vst.msk [vmem:[#allocation9] ss:$4 sm:$0xf] %vm1508, %v1477
    %s1510 = scalar_lea.vmem [#allocation9], 1
    %1511 = vst.msk [vmem:[%s1510] ss:$4 sm:$0xf] %vm1508, %v1486
    %s1512 = scalar_lea.vmem [#allocation9], 2
    %1513 = vst.msk [vmem:[%s1512] ss:$4 sm:$0xf] %vm1508, %v1495
    %s1514 = scalar_lea.vmem [#allocation9], 3
    %1515 = vst.msk [vmem:[%s1514] ss:$4 sm:$0xf] %vm1508, %v1504
    %v1516 = vlaneseq
    %v1517 = vshrl.u32 %v1516, 7
    %vm1518 = vcmp.eq.s32.totalorder %v1517, 0
    %v1519 = vstv %s1429
    %v1520 = vstv %s1468
    %v1521 = vsel %vm1518, %v1519, %v1520
    %1522 = vst [vmem:[#allocation10] sm:$0x3] %v1521
    // Predicated region
    $region26: #{tpu_custom_call.1} parent=1 // pred_check
      _
    $region27: #{tpu_custom_call.1} parent=1 // pred_check_branch
      %1524 = sbr.rel (0) target = $region29
    $region28: #{tpu_custom_call.1} parent=1 // pred_region
      %s1526 = ssub.s32 256, 256
      %1527 = vsyncadd [#allocation4], %s1526
      %s1529 = sshll.u32 [#allocation9], 4
      %s1530 = int_to_ptr.vmem [resolvable:$true] %s1529
      %1532 = dma.vmem_to_hbm [thread:$0]  %s1530, 256, %s3, [#allocation4]
    $region29: #{tpu_custom_call.1} parent=1 // pred_fallthru
      _
    // Predicated region
    $region30: #{tpu_custom_call.1} parent=1 // pred_check
      _
    $region31: #{tpu_custom_call.1} parent=1 // pred_check_branch
      %1534 = sbr.rel (0) target = $region33
    $region32: #{tpu_custom_call.1} parent=1 // pred_region
      %s1536 = ssub.s32 32, 32
      %1537 = vsyncadd [#allocation11], %s1536
      %s1539 = sshll.u32 [#allocation10], 4
      %s1540 = int_to_ptr.vmem [resolvable:$true] %s1539
      %1542 = dma.vmem_to_hbm [thread:$0]  %s1540, 32, %s4, [#allocation11]
    $region33: #{tpu_custom_call.1} parent=1 // pred_fallthru
      _
    // Predicated region
    $region34: #{tpu_custom_call.1} parent=1 // pred_check
      _
    $region35: #{tpu_custom_call.1} parent=1 // pred_check_branch
      %1544 = sbr.rel (0) target = $region37
    $region36: #{tpu_custom_call.1} parent=1 // pred_region
      %1545 = dma.done [#allocation4], 256
    $region37: #{tpu_custom_call.1} parent=1 // pred_fallthru
      _
    // Predicated region
    $region38: #{tpu_custom_call.1} parent=1 // pred_check
      _
    $region39: #{tpu_custom_call.1} parent=1 // pred_check_branch
      %1547 = sbr.rel (0) target = $region41
    $region40: #{tpu_custom_call.1} parent=1 // pred_region
      %1548 = dma.done [#allocation11], 32
    $region41: #{tpu_custom_call.1} parent=1 // pred_fallthru
      _
    %1549 = vsyncpa [#allocation3], 1
    %1550 = vsyncpa [#allocation4], 1
    %1551 = vsyncpa [#allocation11], 1
    %1552 = vsyncpa [#allocation5], 1
    %1553 = vsyncpa [#allocation6], 1

</llo_original>
